<compile_context>
chip_gen: v7x
topology: tpu7x:2x2x1
jax: 0.10.0
libtpu: 0.0.40
codegen_flags: <defaults>
</compile_context>

<pallas_src>
import math

import jax
import jax.numpy as jnp
from jax.experimental import pallas as pl
from jax.experimental.pallas import tpu as pltpu

# ---------------- config ----------------
VOCAB = 1000
B = 2
S = 8
H = 128
N_HEADS = 2
D_HEAD = H // N_HEADS
FFN = 4 * H
N_LAYERS = 2
N_CLASSES = 2
LN_EPS = 1e-12
LANE = 128                      # lane-dense classifier output width
MASK_NEG = -1e9                 # additive mask bias for padded key positions

# Rows of the packed per-layer vector bundle `vecs` (L, 9, H):
#   0: bq (pre-scaled by 1/sqrt(D_HEAD))   1: bk   2: bv   3: bo   4: b2 (FFN out)
#   5: ln1_gamma   6: ln1_beta   7: ln2_gamma   8: ln2_beta


# ---------------- kernel helpers ----------------
def _layernorm(x, gamma, beta):
    # x: (M, H) f32, gamma/beta: (1, H) f32.
    # One-pass variance: sum(x) and sum(x*x) are independent XLU reductions.
    inv_h = 1.0 / H
    s1 = jnp.sum(x, axis=-1, keepdims=True)
    s2 = jnp.sum(x * x, axis=-1, keepdims=True)
    mu = s1 * inv_h
    var = s2 * inv_h - mu * mu
    return (x - mu) * jax.lax.rsqrt(var + LN_EPS) * gamma + beta


def _split_heads(t):
    # (B*S, H) -> (NH*B, S, DH): heads merged into the einsum batch dim
    # (head-major order; must match _merge_heads and the mask tiling).
    return jnp.concatenate(
        [t[:, h * D_HEAD:(h + 1) * D_HEAD].reshape(B, S, D_HEAD)
         for h in range(N_HEADS)],
        axis=0)


def _merge_heads(t):
    # (NH*B, S, DH) -> (B*S, H): each head fills its own 64-lane half
    # (free lane placement, enables a single full-K output-projection dot).
    t = t.reshape(N_HEADS, B * S, D_HEAD)
    return jnp.concatenate([t[h] for h in range(N_HEADS)], axis=-1)


def _vmem_specs(n):
    return [pl.BlockSpec(memory_space=pltpu.MemorySpace.VMEM) for _ in range(n)]


# ---------------- fused Pallas kernel ----------------
def fused_kernel(emb_ref, mask_ref, embln_ref,
                 wqkv_ref, wo_ref, w1_ref, b1_ref, w2_ref, vecs_ref,
                 fcw_ref, fcb_ref, out_ref):
    # Embedding LayerNorm on the pre-flattened (B*S, H) slab.
    x = _layernorm(emb_ref[...], embln_ref[0:1, :], embln_ref[1:2, :])

    # Additive key-mask bias, broadcast ONCE to the merged (NH*B) batch (hoisted).
    mask_b = mask_ref[...][:, None, :]                                  # (B, 1, S)
    mb = jnp.concatenate([mask_b] * N_HEADS, axis=0)                    # (NH*B, 1, S)

    for li in range(N_LAYERS):                                          # static unroll
        def vrow(r):
            # (1, H) f32 per-layer vector, loaded from VMEM at point of use.
            return vecs_ref[li, r:r + 1, :]

        # --- multi-head self-attention ---
        xb = x.astype(jnp.bfloat16)
        # Single fused QKV projection: (B*S,H)@(H,3H); N=384 fills the 256-wide
        # MXU on v6e/v7x.  1/sqrt(D_HEAD) is pre-folded into the Q columns/bias.
        qkv = jnp.dot(xb, wqkv_ref[li],
                      preferred_element_type=jnp.float32)               # (B*S, 3H) f32
        q = qkv[:, 0 * H:1 * H] + vrow(0)                               # lane-aligned slices
        k = qkv[:, 1 * H:2 * H] + vrow(1)
        v = qkv[:, 2 * H:3 * H] + vrow(2)

        # Batched attention over merged (head, batch) dim — no per-head loop,
        # no per-head bf16 casts; these tiny einsums stay in f32.
        qh, kh, vh = _split_heads(q), _split_heads(k), _split_heads(v)  # (NH*B, S, DH)
        scores = jnp.einsum('bqd,bkd->bqk', qh, kh,
                            preferred_element_type=jnp.float32) + mb    # (NH*B, S, S)
        scores = scores - jnp.max(scores, axis=-1, keepdims=True)
        p = jnp.exp(scores)
        p = p * pl.reciprocal(jnp.sum(p, axis=-1, keepdims=True), approx=True)
        ctx = jnp.einsum('bqk,bkd->bqd', p, vh,
                         preferred_element_type=jnp.float32)            # (NH*B, S, DH)

        # Heads land in adjacent 64-lane halves -> one full-K (128,128) out proj.
        ctx = _merge_heads(ctx)                                         # (B*S, H)
        attn = jnp.dot(ctx.astype(jnp.bfloat16), wo_ref[li],
                       preferred_element_type=jnp.float32) + vrow(3)

        h1 = _layernorm(attn + x, vrow(5), vrow(6))                     # sa_layer_norm

        # --- feed-forward ---
        ff = jnp.dot(h1.astype(jnp.bfloat16), w1_ref[li],
                     preferred_element_type=jnp.float32) + b1_ref[li]
        # TODO(synk): HF DistilBERT uses exact (erf) GELU; tanh-approx GELU used for TPU-safe lowering.
        ff = jax.nn.gelu(ff, approximate=True)
        ff = jnp.dot(ff.astype(jnp.bfloat16), w2_ref[li],
                     preferred_element_type=jnp.float32) + vrow(4)
        x = _layernorm(ff + h1, vrow(7), vrow(8))                       # output_layer_norm

    # Classifier on the whole (B*S, H) slab -> one lane-dense, full-(8,128)-tile
    # unmasked store; the wrapper picks rows 0, S, ... ([CLS]) and n_classes lanes.
    # dropout(p=0.2) on the CLS token is identity in eval mode.
    out_ref[...] = (jnp.dot(x.astype(jnp.bfloat16), fcw_ref[...],
                            preferred_element_type=jnp.float32) + fcb_ref[...])


# ---------------- wrapper ----------------
def quest_model_forward(ids, params):
    # attention_mask = ids > 0  ->  additive bias row (0 for real tokens, -1e9 for pads)
    mask_bias = jnp.where(ids > 0, 0.0, MASK_NEG).astype(jnp.float32)   # (B, S)

    # Embedding gather + position add is glue work in plain JAX; LN happens in-kernel.
    emb = (jnp.take(params["word_emb"], ids, axis=0)
           + params["pos_emb"][None, :S, :]).reshape(B * S, H)          # (B*S, H)

    args = (emb, mask_bias, params["emb_ln"],
            params["wqkv"], params["wo"], params["w1"], params["b1"],
            params["w2"], params["vecs"],
            params["fc_w_pad"], params["fc_b_pad"])

    out_pad = pl.pallas_call(
        fused_kernel,
        out_shape=jax.ShapeDtypeStruct((B * S, LANE), jnp.float32),
        in_specs=_vmem_specs(len(args)),
        out_specs=pl.BlockSpec(memory_space=pltpu.MemorySpace.VMEM),
        # ~1 MB of resident weights at this toy size; explicit limit keeps us well
        # inside the scoped-VMEM default on all generations (incl. v7x's 64 MiB).
        compiler_params=pltpu.CompilerParams(vmem_limit_bytes=32 * 1024 * 1024),
    )(*args)

    # hidden[:, 0, :] -> rows 0, S, ... of the flattened slab; first n_classes lanes.
    return out_pad[::S, :N_CLASSES]                                     # (B, n_classes)


# ---------------- deterministic parameter init ----------------
def init_params(key):
    ks = iter(jax.random.split(key, 64))
    std = 0.02

    def normal(shape):
        return (std * jax.random.normal(next(ks), shape)).astype(jnp.float32)

    scale = 1.0 / math.sqrt(D_HEAD)
    ones_h = jnp.ones((H,), jnp.float32)
    zeros_h = jnp.zeros((H,), jnp.float32)

    wqkv_l, wo_l, w1_l, w2_l, b1_l, vecs_l = [], [], [], [], [], []
    for _ in range(N_LAYERS):
        wq = normal((H, H)) * scale          # fold 1/sqrt(D_HEAD) into Q projection
        wk = normal((H, H))
        wv = normal((H, H))
        wqkv_l.append(jnp.concatenate([wq, wk, wv], axis=1))            # (H, 3H)
        wo_l.append(normal((H, H)))
        w1_l.append(normal((H, FFN)))
        w2_l.append(normal((FFN, H)))
        b1_l.append(jnp.zeros((1, FFN), jnp.float32))
        # rows: [bq*scale, bk, bv, bo, b2, ln1_g, ln1_b, ln2_g, ln2_b]
        vecs_l.append(jnp.stack([zeros_h * scale, zeros_h, zeros_h, zeros_h, zeros_h,
                                 ones_h, zeros_h, ones_h, zeros_h], axis=0))  # (9, H)

    fc_w = normal((H, N_CLASSES))
    fc_b = jnp.zeros((N_CLASSES,), jnp.float32)

    params = {
        "word_emb": normal((VOCAB, H)),
        "pos_emb": normal((S, H)),
        "emb_ln": jnp.stack([ones_h, zeros_h], axis=0),                 # (2, H): gamma, beta
        # MXU-side weights stored bf16, stacked over layers.
        "wqkv": jnp.stack(wqkv_l, axis=0).astype(jnp.bfloat16),         # (L, H, 3H)
        "wo":   jnp.stack(wo_l, axis=0).astype(jnp.bfloat16),           # (L, H, H)
        "w1":   jnp.stack(w1_l, axis=0).astype(jnp.bfloat16),           # (L, H, FFN)
        "w2":   jnp.stack(w2_l, axis=0).astype(jnp.bfloat16),           # (L, FFN, H)
        # f32 small vectors, packed.
        "b1":   jnp.stack(b1_l, axis=0),                                # (L, 1, FFN)
        "vecs": jnp.stack(vecs_l, axis=0),                              # (L, 9, H)
        # Classifier padded to a lane-dense 128-wide output slab (sliced outside).
        "fc_w_pad": jnp.zeros((H, LANE), jnp.float32)
                       .at[:, :N_CLASSES].set(fc_w).astype(jnp.bfloat16),
        "fc_b_pad": jnp.zeros((1, LANE), jnp.float32).at[0, :N_CLASSES].set(fc_b),
    }
    return params


if __name__ == "__main__":
    key = jax.random.PRNGKey(0)
    pkey, ikey = jax.random.split(key)
    params = init_params(pkey)

    # Deterministic token ids; trailing pad (0) tokens exercise the attention mask.
    ids = jax.random.randint(ikey, (B, S), 1, VOCAB, dtype=jnp.int32)
    ids = ids.at[1, -3:].set(0)

    logits = jax.jit(quest_model_forward)(ids, params)
    jax.block_until_ready(logits)
    assert logits.shape == (B, N_CLASSES) and logits.dtype == jnp.float32
    print("KERNEL_OK")
</pallas_src>

<mosaic_0001>
module attributes {stable_mosaic.version = 11 : i64} {
  func.func @fused_kernel(%arg0: memref<16x128xf32, #tpu.memory_space<vmem>>, %arg1: memref<2x8xf32, #tpu.memory_space<vmem>>, %arg2: memref<2x128xf32, #tpu.memory_space<vmem>>, %arg3: memref<2x128x384xbf16, #tpu.memory_space<vmem>>, %arg4: memref<2x128x128xbf16, #tpu.memory_space<vmem>>, %arg5: memref<2x128x512xbf16, #tpu.memory_space<vmem>>, %arg6: memref<2x1x512xf32, #tpu.memory_space<vmem>>, %arg7: memref<2x512x128xbf16, #tpu.memory_space<vmem>>, %arg8: memref<2x9x128xf32, #tpu.memory_space<vmem>>, %arg9: memref<128x128xbf16, #tpu.memory_space<vmem>>, %arg10: memref<1x128xf32, #tpu.memory_space<vmem>>, %arg11: memref<16x128xf32, #tpu.memory_space<vmem>>) attributes {dimension_semantics = [], scalar_prefetch = 0 : i64, scratch_operands = 0 : i64, tpu.core_type = #tpu.core_type<tc>} {
    %c0 = arith.constant 0 : index
    %c0_0 = arith.constant 0 : index
    %0 = vector.load %arg0[%c0, %c0_0] : memref<16x128xf32, #tpu.memory_space<vmem>>, vector<16x128xf32>
    %c0_1 = arith.constant 0 : index
    %c0_2 = arith.constant 0 : index
    %1 = vector.load %arg2[%c0_1, %c0_2] : memref<2x128xf32, #tpu.memory_space<vmem>>, vector<1x128xf32>
    %c1 = arith.constant 1 : index
    %c0_3 = arith.constant 0 : index
    %2 = vector.load %arg2[%c1, %c0_3] : memref<2x128xf32, #tpu.memory_space<vmem>>, vector<1x128xf32>
    %cst = arith.constant dense<0.000000e+00> : vector<16xf32>
    %3 = vector.multi_reduction <add>, %0, %cst [1] : vector<16x128xf32> to vector<16xf32>
    %4 = vector.shape_cast %3 : vector<16xf32> to vector<16x1xf32>
    %5 = arith.mulf %0, %0 : vector<16x128xf32>
    %cst_4 = arith.constant dense<0.000000e+00> : vector<16xf32>
    %6 = vector.multi_reduction <add>, %5, %cst_4 [1] : vector<16x128xf32> to vector<16xf32>
    %7 = vector.shape_cast %6 : vector<16xf32> to vector<16x1xf32>
    %cst_5 = arith.constant 7.812500e-03 : f32
    %8 = vector.broadcast %cst_5 : f32 to vector<16x1xf32>
    %9 = arith.mulf %4, %8 : vector<16x1xf32>
    %cst_6 = arith.constant 7.812500e-03 : f32
    %10 = vector.broadcast %cst_6 : f32 to vector<16x1xf32>
    %11 = arith.mulf %7, %10 : vector<16x1xf32>
    %12 = arith.mulf %9, %9 : vector<16x1xf32>
    %13 = arith.subf %11, %12 : vector<16x1xf32>
    %14 = vector.broadcast %9 : vector<16x1xf32> to vector<16x128xf32>
    %15 = arith.subf %0, %14 : vector<16x128xf32>
    %cst_7 = arith.constant 9.99999996E-13 : f32
    %16 = vector.broadcast %cst_7 : f32 to vector<16x1xf32>
    %17 = arith.addf %13, %16 : vector<16x1xf32>
    %18 = math.rsqrt %17 : vector<16x1xf32>
    %19 = vector.broadcast %18 : vector<16x1xf32> to vector<16x128xf32>
    %20 = arith.mulf %15, %19 : vector<16x128xf32>
    %21 = vector.broadcast %1 : vector<1x128xf32> to vector<16x128xf32>
    %22 = arith.mulf %20, %21 : vector<16x128xf32>
    %23 = vector.broadcast %2 : vector<1x128xf32> to vector<16x128xf32>
    %24 = arith.addf %22, %23 : vector<16x128xf32>
    %c0_8 = arith.constant 0 : index
    %c0_9 = arith.constant 0 : index
    %25 = vector.load %arg1[%c0_8, %c0_9] : memref<2x8xf32, #tpu.memory_space<vmem>>, vector<2x8xf32>
    %26 = vector.shape_cast %25 : vector<2x8xf32> to vector<2x1x8xf32>
    %27 = tpu.concatenate %26, %26 in 0 : vector<2x1x8xf32>, vector<2x1x8xf32> -> vector<4x1x8xf32>
    %28 = arith.truncf %24 : vector<16x128xf32> to vector<16x128xbf16>
    %c0_10 = arith.constant 0 : index
    %c0_11 = arith.constant 0 : index
    %c0_12 = arith.constant 0 : index
    %29 = vector.load %arg3[%c0_10, %c0_11, %c0_12] : memref<2x128x384xbf16, #tpu.memory_space<vmem>>, vector<1x128x384xbf16>
    %30 = vector.shape_cast %29 : vector<1x128x384xbf16> to vector<128x384xbf16>
    %cst_13 = arith.constant dense<0.000000e+00> : vector<16x384xf32>
    %31 = tpu.matmul %28, %30, %cst_13 {dimension_numbers = #tpu.dot_dimension_numbers<[1], [0], [0], [1], [0, 0, 1, 1], [], []>} : vector<16x128xbf16>, vector<128x384xbf16>, vector<16x384xf32> -> vector<16x384xf32>
    %32 = vector.extract_strided_slice %31 {offsets = [0, 0], sizes = [16, 128], strides = [1, 1]} : vector<16x384xf32> to vector<16x128xf32>
    %c0_14 = arith.constant 0 : index
    %c0_15 = arith.constant 0 : index
    %c0_16 = arith.constant 0 : index
    %33 = vector.load %arg8[%c0_14, %c0_15, %c0_16] : memref<2x9x128xf32, #tpu.memory_space<vmem>>, vector<1x1x128xf32>
    %34 = vector.shape_cast %33 : vector<1x1x128xf32> to vector<1x128xf32>
    %35 = vector.broadcast %34 : vector<1x128xf32> to vector<16x128xf32>
    %36 = arith.addf %32, %35 : vector<16x128xf32>
    %37 = vector.extract_strided_slice %31 {offsets = [0, 128], sizes = [16, 128], strides = [1, 1]} : vector<16x384xf32> to vector<16x128xf32>
    %c0_17 = arith.constant 0 : index
    %c1_18 = arith.constant 1 : index
    %c0_19 = arith.constant 0 : index
    %38 = vector.load %arg8[%c0_17, %c1_18, %c0_19] : memref<2x9x128xf32, #tpu.memory_space<vmem>>, vector<1x1x128xf32>
    %39 = vector.shape_cast %38 : vector<1x1x128xf32> to vector<1x128xf32>
    %40 = vector.broadcast %39 : vector<1x128xf32> to vector<16x128xf32>
    %41 = arith.addf %37, %40 : vector<16x128xf32>
    %42 = vector.extract_strided_slice %31 {offsets = [0, 256], sizes = [16, 128], strides = [1, 1]} : vector<16x384xf32> to vector<16x128xf32>
    %c0_20 = arith.constant 0 : index
    %c2 = arith.constant 2 : index
    %c0_21 = arith.constant 0 : index
    %43 = vector.load %arg8[%c0_20, %c2, %c0_21] : memref<2x9x128xf32, #tpu.memory_space<vmem>>, vector<1x1x128xf32>
    %44 = vector.shape_cast %43 : vector<1x1x128xf32> to vector<1x128xf32>
    %45 = vector.broadcast %44 : vector<1x128xf32> to vector<16x128xf32>
    %46 = arith.addf %42, %45 : vector<16x128xf32>
    %47 = vector.extract_strided_slice %36 {offsets = [0, 0], sizes = [16, 64], strides = [1, 1]} : vector<16x128xf32> to vector<16x64xf32>
    %48 = vector.shape_cast %47 : vector<16x64xf32> to vector<2x8x64xf32>
    %49 = vector.extract_strided_slice %36 {offsets = [0, 64], sizes = [16, 64], strides = [1, 1]} : vector<16x128xf32> to vector<16x64xf32>
    %50 = vector.shape_cast %49 : vector<16x64xf32> to vector<2x8x64xf32>
    %51 = tpu.concatenate %48, %50 in 0 : vector<2x8x64xf32>, vector<2x8x64xf32> -> vector<4x8x64xf32>
    %52 = vector.extract_strided_slice %41 {offsets = [0, 0], sizes = [16, 64], strides = [1, 1]} : vector<16x128xf32> to vector<16x64xf32>
    %53 = vector.shape_cast %52 : vector<16x64xf32> to vector<2x8x64xf32>
    %54 = vector.extract_strided_slice %41 {offsets = [0, 64], sizes = [16, 64], strides = [1, 1]} : vector<16x128xf32> to vector<16x64xf32>
    %55 = vector.shape_cast %54 : vector<16x64xf32> to vector<2x8x64xf32>
    %56 = tpu.concatenate %53, %55 in 0 : vector<2x8x64xf32>, vector<2x8x64xf32> -> vector<4x8x64xf32>
    %57 = vector.extract_strided_slice %46 {offsets = [0, 0], sizes = [16, 64], strides = [1, 1]} : vector<16x128xf32> to vector<16x64xf32>
    %58 = vector.shape_cast %57 : vector<16x64xf32> to vector<2x8x64xf32>
    %59 = vector.extract_strided_slice %46 {offsets = [0, 64], sizes = [16, 64], strides = [1, 1]} : vector<16x128xf32> to vector<16x64xf32>
    %60 = vector.shape_cast %59 : vector<16x64xf32> to vector<2x8x64xf32>
    %61 = tpu.concatenate %58, %60 in 0 : vector<2x8x64xf32>, vector<2x8x64xf32> -> vector<4x8x64xf32>
    "tpu.trace_start"() <{level = 10 : i32, message = "bqd,bkd->bqk"}> : () -> ()
    %cst_22 = arith.constant dense<0.000000e+00> : vector<4x8x8xf32>
    %62 = tpu.matmul %51, %56, %cst_22 {dimension_numbers = #tpu.dot_dimension_numbers<[2], [2], [1], [1], [0, 0, 0, 1, 1, 1], [0], [0]>} : vector<4x8x64xf32>, vector<4x8x64xf32>, vector<4x8x8xf32> -> vector<4x8x8xf32>
    "tpu.trace_stop"() : () -> ()
    %63 = vector.broadcast %27 : vector<4x1x8xf32> to vector<4x8x8xf32>
    %64 = arith.addf %62, %63 : vector<4x8x8xf32>
    %cst_23 = arith.constant dense<0xFF800000> : vector<4x8xf32>
    %65 = vector.multi_reduction <maximumf>, %64, %cst_23 [2] : vector<4x8x8xf32> to vector<4x8xf32>
    %66 = vector.shape_cast %65 : vector<4x8xf32> to vector<4x8x1xf32>
    %67 = vector.broadcast %66 : vector<4x8x1xf32> to vector<4x8x8xf32>
    %68 = arith.subf %64, %67 : vector<4x8x8xf32>
    %69 = math.exp %68 : vector<4x8x8xf32>
    %cst_24 = arith.constant dense<0.000000e+00> : vector<4x8xf32>
    %70 = vector.multi_reduction <add>, %69, %cst_24 [2] : vector<4x8x8xf32> to vector<4x8xf32>
    %71 = vector.shape_cast %70 : vector<4x8xf32> to vector<4x8x1xf32>
    %72 = tpu.reciprocal %71 {approx = true} : vector<4x8x1xf32> -> vector<4x8x1xf32>
    %73 = vector.broadcast %72 : vector<4x8x1xf32> to vector<4x8x8xf32>
    %74 = arith.mulf %69, %73 : vector<4x8x8xf32>
    "tpu.trace_start"() <{level = 10 : i32, message = "bqk,bkd->bqd"}> : () -> ()
    %cst_25 = arith.constant dense<0.000000e+00> : vector<4x8x64xf32>
    %75 = tpu.matmul %74, %61, %cst_25 {dimension_numbers = #tpu.dot_dimension_numbers<[2], [1], [1], [2], [0, 0, 0, 1, 1, 2], [0], [0]>} : vector<4x8x8xf32>, vector<4x8x64xf32>, vector<4x8x64xf32> -> vector<4x8x64xf32>
    "tpu.trace_stop"() : () -> ()
    %76 = vector.shape_cast %75 : vector<4x8x64xf32> to vector<2x16x64xf32>
    %77 = vector.extract_strided_slice %76 {offsets = [0, 0, 0], sizes = [1, 16, 64], strides = [1, 1, 1]} : vector<2x16x64xf32> to vector<1x16x64xf32>
    %78 = vector.shape_cast %77 : vector<1x16x64xf32> to vector<16x64xf32>
    %79 = vector.extract_strided_slice %76 {offsets = [1, 0, 0], sizes = [1, 16, 64], strides = [1, 1, 1]} : vector<2x16x64xf32> to vector<1x16x64xf32>
    %80 = vector.shape_cast %79 : vector<1x16x64xf32> to vector<16x64xf32>
    %81 = tpu.concatenate %78, %80 in 1 : vector<16x64xf32>, vector<16x64xf32> -> vector<16x128xf32>
    %82 = arith.truncf %81 : vector<16x128xf32> to vector<16x128xbf16>
    %c0_26 = arith.constant 0 : index
    %c0_27 = arith.constant 0 : index
    %c0_28 = arith.constant 0 : index
    %83 = vector.load %arg4[%c0_26, %c0_27, %c0_28] : memref<2x128x128xbf16, #tpu.memory_space<vmem>>, vector<1x128x128xbf16>
    %84 = vector.shape_cast %83 : vector<1x128x128xbf16> to vector<128x128xbf16>
    %cst_29 = arith.constant dense<0.000000e+00> : vector<16x128xf32>
    %85 = tpu.matmul %82, %84, %cst_29 {dimension_numbers = #tpu.dot_dimension_numbers<[1], [0], [0], [1], [0, 0, 1, 1], [], []>} : vector<16x128xbf16>, vector<128x128xbf16>, vector<16x128xf32> -> vector<16x128xf32>
    %c0_30 = arith.constant 0 : index
    %c3 = arith.constant 3 : index
    %c0_31 = arith.constant 0 : index
    %86 = vector.load %arg8[%c0_30, %c3, %c0_31] : memref<2x9x128xf32, #tpu.memory_space<vmem>>, vector<1x1x128xf32>
    %87 = vector.shape_cast %86 : vector<1x1x128xf32> to vector<1x128xf32>
    %88 = vector.broadcast %87 : vector<1x128xf32> to vector<16x128xf32>
    %89 = arith.addf %85, %88 : vector<16x128xf32>
    %90 = arith.addf %89, %24 : vector<16x128xf32>
    %c0_32 = arith.constant 0 : index
    %c5 = arith.constant 5 : index
    %c0_33 = arith.constant 0 : index
    %91 = vector.load %arg8[%c0_32, %c5, %c0_33] : memref<2x9x128xf32, #tpu.memory_space<vmem>>, vector<1x1x128xf32>
    %92 = vector.shape_cast %91 : vector<1x1x128xf32> to vector<1x128xf32>
    %c0_34 = arith.constant 0 : index
    %c6 = arith.constant 6 : index
    %c0_35 = arith.constant 0 : index
    %93 = vector.load %arg8[%c0_34, %c6, %c0_35] : memref<2x9x128xf32, #tpu.memory_space<vmem>>, vector<1x1x128xf32>
    %94 = vector.shape_cast %93 : vector<1x1x128xf32> to vector<1x128xf32>
    %cst_36 = arith.constant dense<0.000000e+00> : vector<16xf32>
    %95 = vector.multi_reduction <add>, %90, %cst_36 [1] : vector<16x128xf32> to vector<16xf32>
    %96 = vector.shape_cast %95 : vector<16xf32> to vector<16x1xf32>
    %97 = arith.mulf %90, %90 : vector<16x128xf32>
    %cst_37 = arith.constant dense<0.000000e+00> : vector<16xf32>
    %98 = vector.multi_reduction <add>, %97, %cst_37 [1] : vector<16x128xf32> to vector<16xf32>
    %99 = vector.shape_cast %98 : vector<16xf32> to vector<16x1xf32>
    %cst_38 = arith.constant 7.812500e-03 : f32
    %100 = vector.broadcast %cst_38 : f32 to vector<16x1xf32>
    %101 = arith.mulf %96, %100 : vector<16x1xf32>
    %cst_39 = arith.constant 7.812500e-03 : f32
    %102 = vector.broadcast %cst_39 : f32 to vector<16x1xf32>
    %103 = arith.mulf %99, %102 : vector<16x1xf32>
    %104 = arith.mulf %101, %101 : vector<16x1xf32>
    %105 = arith.subf %103, %104 : vector<16x1xf32>
    %106 = vector.broadcast %101 : vector<16x1xf32> to vector<16x128xf32>
    %107 = arith.subf %90, %106 : vector<16x128xf32>
    %cst_40 = arith.constant 9.99999996E-13 : f32
    %108 = vector.broadcast %cst_40 : f32 to vector<16x1xf32>
    %109 = arith.addf %105, %108 : vector<16x1xf32>
    %110 = math.rsqrt %109 : vector<16x1xf32>
    %111 = vector.broadcast %110 : vector<16x1xf32> to vector<16x128xf32>
    %112 = arith.mulf %107, %111 : vector<16x128xf32>
    %113 = vector.broadcast %92 : vector<1x128xf32> to vector<16x128xf32>
    %114 = arith.mulf %112, %113 : vector<16x128xf32>
    %115 = vector.broadcast %94 : vector<1x128xf32> to vector<16x128xf32>
    %116 = arith.addf %114, %115 : vector<16x128xf32>
    %117 = arith.truncf %116 : vector<16x128xf32> to vector<16x128xbf16>
    %c0_41 = arith.constant 0 : index
    %c0_42 = arith.constant 0 : index
    %c0_43 = arith.constant 0 : index
    %118 = vector.load %arg5[%c0_41, %c0_42, %c0_43] : memref<2x128x512xbf16, #tpu.memory_space<vmem>>, vector<1x128x512xbf16>
    %119 = vector.shape_cast %118 : vector<1x128x512xbf16> to vector<128x512xbf16>
    %cst_44 = arith.constant dense<0.000000e+00> : vector<16x512xf32>
    %120 = tpu.matmul %117, %119, %cst_44 {dimension_numbers = #tpu.dot_dimension_numbers<[1], [0], [0], [1], [0, 0, 1, 1], [], []>} : vector<16x128xbf16>, vector<128x512xbf16>, vector<16x512xf32> -> vector<16x512xf32>
    %c0_45 = arith.constant 0 : index
    %c0_46 = arith.constant 0 : index
    %c0_47 = arith.constant 0 : index
    %121 = vector.load %arg6[%c0_45, %c0_46, %c0_47] : memref<2x1x512xf32, #tpu.memory_space<vmem>>, vector<1x1x512xf32>
    %122 = vector.shape_cast %121 : vector<1x1x512xf32> to vector<1x512xf32>
    %123 = vector.broadcast %122 : vector<1x512xf32> to vector<16x512xf32>
    %124 = arith.addf %120, %123 : vector<16x512xf32>
    %125 = arith.mulf %124, %124 : vector<16x512xf32>
    %126 = arith.mulf %124, %125 : vector<16x512xf32>
    %cst_48 = arith.constant 4.471500e-02 : f32
    %127 = vector.broadcast %cst_48 : f32 to vector<16x512xf32>
    %128 = arith.mulf %127, %126 : vector<16x512xf32>
    %129 = arith.addf %124, %128 : vector<16x512xf32>
    %cst_49 = arith.constant 0.797884583 : f32
    %130 = vector.broadcast %cst_49 : f32 to vector<16x512xf32>
    %131 = arith.mulf %130, %129 : vector<16x512xf32>
    %132 = math.tanh %131 : vector<16x512xf32>
    %cst_50 = arith.constant 1.000000e+00 : f32
    %133 = vector.broadcast %cst_50 : f32 to vector<16x512xf32>
    %134 = arith.addf %133, %132 : vector<16x512xf32>
    %cst_51 = arith.constant 5.000000e-01 : f32
    %135 = vector.broadcast %cst_51 : f32 to vector<16x512xf32>
    %136 = arith.mulf %135, %134 : vector<16x512xf32>
    %137 = arith.mulf %124, %136 : vector<16x512xf32>
    %138 = arith.truncf %137 : vector<16x512xf32> to vector<16x512xbf16>
    %c0_52 = arith.constant 0 : index
    %c0_53 = arith.constant 0 : index
    %c0_54 = arith.constant 0 : index
    %139 = vector.load %arg7[%c0_52, %c0_53, %c0_54] : memref<2x512x128xbf16, #tpu.memory_space<vmem>>, vector<1x512x128xbf16>
    %140 = vector.shape_cast %139 : vector<1x512x128xbf16> to vector<512x128xbf16>
    %cst_55 = arith.constant dense<0.000000e+00> : vector<16x128xf32>
    %141 = tpu.matmul %138, %140, %cst_55 {dimension_numbers = #tpu.dot_dimension_numbers<[1], [0], [0], [1], [0, 0, 1, 1], [], []>} : vector<16x512xbf16>, vector<512x128xbf16>, vector<16x128xf32> -> vector<16x128xf32>
    %c0_56 = arith.constant 0 : index
    %c4 = arith.constant 4 : index
    %c0_57 = arith.constant 0 : index
    %142 = vector.load %arg8[%c0_56, %c4, %c0_57] : memref<2x9x128xf32, #tpu.memory_space<vmem>>, vector<1x1x128xf32>
    %143 = vector.shape_cast %142 : vector<1x1x128xf32> to vector<1x128xf32>
    %144 = vector.broadcast %143 : vector<1x128xf32> to vector<16x128xf32>
    %145 = arith.addf %141, %144 : vector<16x128xf32>
    %146 = arith.addf %145, %116 : vector<16x128xf32>
    %c0_58 = arith.constant 0 : index
    %c7 = arith.constant 7 : index
    %c0_59 = arith.constant 0 : index
    %147 = vector.load %arg8[%c0_58, %c7, %c0_59] : memref<2x9x128xf32, #tpu.memory_space<vmem>>, vector<1x1x128xf32>
    %148 = vector.shape_cast %147 : vector<1x1x128xf32> to vector<1x128xf32>
    %c0_60 = arith.constant 0 : index
    %c8 = arith.constant 8 : index
    %c0_61 = arith.constant 0 : index
    %149 = vector.load %arg8[%c0_60, %c8, %c0_61] : memref<2x9x128xf32, #tpu.memory_space<vmem>>, vector<1x1x128xf32>
    %150 = vector.shape_cast %149 : vector<1x1x128xf32> to vector<1x128xf32>
    %cst_62 = arith.constant dense<0.000000e+00> : vector<16xf32>
    %151 = vector.multi_reduction <add>, %146, %cst_62 [1] : vector<16x128xf32> to vector<16xf32>
    %152 = vector.shape_cast %151 : vector<16xf32> to vector<16x1xf32>
    %153 = arith.mulf %146, %146 : vector<16x128xf32>
    %cst_63 = arith.constant dense<0.000000e+00> : vector<16xf32>
    %154 = vector.multi_reduction <add>, %153, %cst_63 [1] : vector<16x128xf32> to vector<16xf32>
    %155 = vector.shape_cast %154 : vector<16xf32> to vector<16x1xf32>
    %cst_64 = arith.constant 7.812500e-03 : f32
    %156 = vector.broadcast %cst_64 : f32 to vector<16x1xf32>
    %157 = arith.mulf %152, %156 : vector<16x1xf32>
    %cst_65 = arith.constant 7.812500e-03 : f32
    %158 = vector.broadcast %cst_65 : f32 to vector<16x1xf32>
    %159 = arith.mulf %155, %158 : vector<16x1xf32>
    %160 = arith.mulf %157, %157 : vector<16x1xf32>
    %161 = arith.subf %159, %160 : vector<16x1xf32>
    %162 = vector.broadcast %157 : vector<16x1xf32> to vector<16x128xf32>
    %163 = arith.subf %146, %162 : vector<16x128xf32>
    %cst_66 = arith.constant 9.99999996E-13 : f32
    %164 = vector.broadcast %cst_66 : f32 to vector<16x1xf32>
    %165 = arith.addf %161, %164 : vector<16x1xf32>
    %166 = math.rsqrt %165 : vector<16x1xf32>
    %167 = vector.broadcast %166 : vector<16x1xf32> to vector<16x128xf32>
    %168 = arith.mulf %163, %167 : vector<16x128xf32>
    %169 = vector.broadcast %148 : vector<1x128xf32> to vector<16x128xf32>
    %170 = arith.mulf %168, %169 : vector<16x128xf32>
    %171 = vector.broadcast %150 : vector<1x128xf32> to vector<16x128xf32>
    %172 = arith.addf %170, %171 : vector<16x128xf32>
    %173 = arith.truncf %172 : vector<16x128xf32> to vector<16x128xbf16>
    %c1_67 = arith.constant 1 : index
    %c0_68 = arith.constant 0 : index
    %c0_69 = arith.constant 0 : index
    %174 = vector.load %arg3[%c1_67, %c0_68, %c0_69] : memref<2x128x384xbf16, #tpu.memory_space<vmem>>, vector<1x128x384xbf16>
    %175 = vector.shape_cast %174 : vector<1x128x384xbf16> to vector<128x384xbf16>
    %cst_70 = arith.constant dense<0.000000e+00> : vector<16x384xf32>
    %176 = tpu.matmul %173, %175, %cst_70 {dimension_numbers = #tpu.dot_dimension_numbers<[1], [0], [0], [1], [0, 0, 1, 1], [], []>} : vector<16x128xbf16>, vector<128x384xbf16>, vector<16x384xf32> -> vector<16x384xf32>
    %177 = vector.extract_strided_slice %176 {offsets = [0, 0], sizes = [16, 128], strides = [1, 1]} : vector<16x384xf32> to vector<16x128xf32>
    %c1_71 = arith.constant 1 : index
    %c0_72 = arith.constant 0 : index
    %c0_73 = arith.constant 0 : index
    %178 = vector.load %arg8[%c1_71, %c0_72, %c0_73] : memref<2x9x128xf32, #tpu.memory_space<vmem>>, vector<1x1x128xf32>
    %179 = vector.shape_cast %178 : vector<1x1x128xf32> to vector<1x128xf32>
    %180 = vector.broadcast %179 : vector<1x128xf32> to vector<16x128xf32>
    %181 = arith.addf %177, %180 : vector<16x128xf32>
    %182 = vector.extract_strided_slice %176 {offsets = [0, 128], sizes = [16, 128], strides = [1, 1]} : vector<16x384xf32> to vector<16x128xf32>
    %c1_74 = arith.constant 1 : index
    %c1_75 = arith.constant 1 : index
    %c0_76 = arith.constant 0 : index
    %183 = vector.load %arg8[%c1_74, %c1_75, %c0_76] : memref<2x9x128xf32, #tpu.memory_space<vmem>>, vector<1x1x128xf32>
    %184 = vector.shape_cast %183 : vector<1x1x128xf32> to vector<1x128xf32>
    %185 = vector.broadcast %184 : vector<1x128xf32> to vector<16x128xf32>
    %186 = arith.addf %182, %185 : vector<16x128xf32>
    %187 = vector.extract_strided_slice %176 {offsets = [0, 256], sizes = [16, 128], strides = [1, 1]} : vector<16x384xf32> to vector<16x128xf32>
    %c1_77 = arith.constant 1 : index
    %c2_78 = arith.constant 2 : index
    %c0_79 = arith.constant 0 : index
    %188 = vector.load %arg8[%c1_77, %c2_78, %c0_79] : memref<2x9x128xf32, #tpu.memory_space<vmem>>, vector<1x1x128xf32>
    %189 = vector.shape_cast %188 : vector<1x1x128xf32> to vector<1x128xf32>
    %190 = vector.broadcast %189 : vector<1x128xf32> to vector<16x128xf32>
    %191 = arith.addf %187, %190 : vector<16x128xf32>
    %192 = vector.extract_strided_slice %181 {offsets = [0, 0], sizes = [16, 64], strides = [1, 1]} : vector<16x128xf32> to vector<16x64xf32>
    %193 = vector.shape_cast %192 : vector<16x64xf32> to vector<2x8x64xf32>
    %194 = vector.extract_strided_slice %181 {offsets = [0, 64], sizes = [16, 64], strides = [1, 1]} : vector<16x128xf32> to vector<16x64xf32>
    %195 = vector.shape_cast %194 : vector<16x64xf32> to vector<2x8x64xf32>
    %196 = tpu.concatenate %193, %195 in 0 : vector<2x8x64xf32>, vector<2x8x64xf32> -> vector<4x8x64xf32>
    %197 = vector.extract_strided_slice %186 {offsets = [0, 0], sizes = [16, 64], strides = [1, 1]} : vector<16x128xf32> to vector<16x64xf32>
    %198 = vector.shape_cast %197 : vector<16x64xf32> to vector<2x8x64xf32>
    %199 = vector.extract_strided_slice %186 {offsets = [0, 64], sizes = [16, 64], strides = [1, 1]} : vector<16x128xf32> to vector<16x64xf32>
    %200 = vector.shape_cast %199 : vector<16x64xf32> to vector<2x8x64xf32>
    %201 = tpu.concatenate %198, %200 in 0 : vector<2x8x64xf32>, vector<2x8x64xf32> -> vector<4x8x64xf32>
    %202 = vector.extract_strided_slice %191 {offsets = [0, 0], sizes = [16, 64], strides = [1, 1]} : vector<16x128xf32> to vector<16x64xf32>
    %203 = vector.shape_cast %202 : vector<16x64xf32> to vector<2x8x64xf32>
    %204 = vector.extract_strided_slice %191 {offsets = [0, 64], sizes = [16, 64], strides = [1, 1]} : vector<16x128xf32> to vector<16x64xf32>
    %205 = vector.shape_cast %204 : vector<16x64xf32> to vector<2x8x64xf32>
    %206 = tpu.concatenate %203, %205 in 0 : vector<2x8x64xf32>, vector<2x8x64xf32> -> vector<4x8x64xf32>
    "tpu.trace_start"() <{level = 10 : i32, message = "bqd,bkd->bqk"}> : () -> ()
    %cst_80 = arith.constant dense<0.000000e+00> : vector<4x8x8xf32>
    %207 = tpu.matmul %196, %201, %cst_80 {dimension_numbers = #tpu.dot_dimension_numbers<[2], [2], [1], [1], [0, 0, 0, 1, 1, 1], [0], [0]>} : vector<4x8x64xf32>, vector<4x8x64xf32>, vector<4x8x8xf32> -> vector<4x8x8xf32>
    "tpu.trace_stop"() : () -> ()
    %208 = vector.broadcast %27 : vector<4x1x8xf32> to vector<4x8x8xf32>
    %209 = arith.addf %207, %208 : vector<4x8x8xf32>
    %cst_81 = arith.constant dense<0xFF800000> : vector<4x8xf32>
    %210 = vector.multi_reduction <maximumf>, %209, %cst_81 [2] : vector<4x8x8xf32> to vector<4x8xf32>
    %211 = vector.shape_cast %210 : vector<4x8xf32> to vector<4x8x1xf32>
    %212 = vector.broadcast %211 : vector<4x8x1xf32> to vector<4x8x8xf32>
    %213 = arith.subf %209, %212 : vector<4x8x8xf32>
    %214 = math.exp %213 : vector<4x8x8xf32>
    %cst_82 = arith.constant dense<0.000000e+00> : vector<4x8xf32>
    %215 = vector.multi_reduction <add>, %214, %cst_82 [2] : vector<4x8x8xf32> to vector<4x8xf32>
    %216 = vector.shape_cast %215 : vector<4x8xf32> to vector<4x8x1xf32>
    %217 = tpu.reciprocal %216 {approx = true} : vector<4x8x1xf32> -> vector<4x8x1xf32>
    %218 = vector.broadcast %217 : vector<4x8x1xf32> to vector<4x8x8xf32>
    %219 = arith.mulf %214, %218 : vector<4x8x8xf32>
    "tpu.trace_start"() <{level = 10 : i32, message = "bqk,bkd->bqd"}> : () -> ()
    %cst_83 = arith.constant dense<0.000000e+00> : vector<4x8x64xf32>
    %220 = tpu.matmul %219, %206, %cst_83 {dimension_numbers = #tpu.dot_dimension_numbers<[2], [1], [1], [2], [0, 0, 0, 1, 1, 2], [0], [0]>} : vector<4x8x8xf32>, vector<4x8x64xf32>, vector<4x8x64xf32> -> vector<4x8x64xf32>
    "tpu.trace_stop"() : () -> ()
    %221 = vector.shape_cast %220 : vector<4x8x64xf32> to vector<2x16x64xf32>
    %222 = vector.extract_strided_slice %221 {offsets = [0, 0, 0], sizes = [1, 16, 64], strides = [1, 1, 1]} : vector<2x16x64xf32> to vector<1x16x64xf32>
    %223 = vector.shape_cast %222 : vector<1x16x64xf32> to vector<16x64xf32>
    %224 = vector.extract_strided_slice %221 {offsets = [1, 0, 0], sizes = [1, 16, 64], strides = [1, 1, 1]} : vector<2x16x64xf32> to vector<1x16x64xf32>
    %225 = vector.shape_cast %224 : vector<1x16x64xf32> to vector<16x64xf32>
    %226 = tpu.concatenate %223, %225 in 1 : vector<16x64xf32>, vector<16x64xf32> -> vector<16x128xf32>
    %227 = arith.truncf %226 : vector<16x128xf32> to vector<16x128xbf16>
    %c1_84 = arith.constant 1 : index
    %c0_85 = arith.constant 0 : index
    %c0_86 = arith.constant 0 : index
    %228 = vector.load %arg4[%c1_84, %c0_85, %c0_86] : memref<2x128x128xbf16, #tpu.memory_space<vmem>>, vector<1x128x128xbf16>
    %229 = vector.shape_cast %228 : vector<1x128x128xbf16> to vector<128x128xbf16>
    %cst_87 = arith.constant dense<0.000000e+00> : vector<16x128xf32>
    %230 = tpu.matmul %227, %229, %cst_87 {dimension_numbers = #tpu.dot_dimension_numbers<[1], [0], [0], [1], [0, 0, 1, 1], [], []>} : vector<16x128xbf16>, vector<128x128xbf16>, vector<16x128xf32> -> vector<16x128xf32>
    %c1_88 = arith.constant 1 : index
    %c3_89 = arith.constant 3 : index
    %c0_90 = arith.constant 0 : index
    %231 = vector.load %arg8[%c1_88, %c3_89, %c0_90] : memref<2x9x128xf32, #tpu.memory_space<vmem>>, vector<1x1x128xf32>
    %232 = vector.shape_cast %231 : vector<1x1x128xf32> to vector<1x128xf32>
    %233 = vector.broadcast %232 : vector<1x128xf32> to vector<16x128xf32>
    %234 = arith.addf %230, %233 : vector<16x128xf32>
    %235 = arith.addf %234, %172 : vector<16x128xf32>
    %c1_91 = arith.constant 1 : index
    %c5_92 = arith.constant 5 : index
    %c0_93 = arith.constant 0 : index
    %236 = vector.load %arg8[%c1_91, %c5_92, %c0_93] : memref<2x9x128xf32, #tpu.memory_space<vmem>>, vector<1x1x128xf32>
    %237 = vector.shape_cast %236 : vector<1x1x128xf32> to vector<1x128xf32>
    %c1_94 = arith.constant 1 : index
    %c6_95 = arith.constant 6 : index
    %c0_96 = arith.constant 0 : index
    %238 = vector.load %arg8[%c1_94, %c6_95, %c0_96] : memref<2x9x128xf32, #tpu.memory_space<vmem>>, vector<1x1x128xf32>
    %239 = vector.shape_cast %238 : vector<1x1x128xf32> to vector<1x128xf32>
    %cst_97 = arith.constant dense<0.000000e+00> : vector<16xf32>
    %240 = vector.multi_reduction <add>, %235, %cst_97 [1] : vector<16x128xf32> to vector<16xf32>
    %241 = vector.shape_cast %240 : vector<16xf32> to vector<16x1xf32>
    %242 = arith.mulf %235, %235 : vector<16x128xf32>
    %cst_98 = arith.constant dense<0.000000e+00> : vector<16xf32>
    %243 = vector.multi_reduction <add>, %242, %cst_98 [1] : vector<16x128xf32> to vector<16xf32>
    %244 = vector.shape_cast %243 : vector<16xf32> to vector<16x1xf32>
    %cst_99 = arith.constant 7.812500e-03 : f32
    %245 = vector.broadcast %cst_99 : f32 to vector<16x1xf32>
    %246 = arith.mulf %241, %245 : vector<16x1xf32>
    %cst_100 = arith.constant 7.812500e-03 : f32
    %247 = vector.broadcast %cst_100 : f32 to vector<16x1xf32>
    %248 = arith.mulf %244, %247 : vector<16x1xf32>
    %249 = arith.mulf %246, %246 : vector<16x1xf32>
    %250 = arith.subf %248, %249 : vector<16x1xf32>
    %251 = vector.broadcast %246 : vector<16x1xf32> to vector<16x128xf32>
    %252 = arith.subf %235, %251 : vector<16x128xf32>
    %cst_101 = arith.constant 9.99999996E-13 : f32
    %253 = vector.broadcast %cst_101 : f32 to vector<16x1xf32>
    %254 = arith.addf %250, %253 : vector<16x1xf32>
    %255 = math.rsqrt %254 : vector<16x1xf32>
    %256 = vector.broadcast %255 : vector<16x1xf32> to vector<16x128xf32>
    %257 = arith.mulf %252, %256 : vector<16x128xf32>
    %258 = vector.broadcast %237 : vector<1x128xf32> to vector<16x128xf32>
    %259 = arith.mulf %257, %258 : vector<16x128xf32>
    %260 = vector.broadcast %239 : vector<1x128xf32> to vector<16x128xf32>
    %261 = arith.addf %259, %260 : vector<16x128xf32>
    %262 = arith.truncf %261 : vector<16x128xf32> to vector<16x128xbf16>
    %c1_102 = arith.constant 1 : index
    %c0_103 = arith.constant 0 : index
    %c0_104 = arith.constant 0 : index
    %263 = vector.load %arg5[%c1_102, %c0_103, %c0_104] : memref<2x128x512xbf16, #tpu.memory_space<vmem>>, vector<1x128x512xbf16>
    %264 = vector.shape_cast %263 : vector<1x128x512xbf16> to vector<128x512xbf16>
    %cst_105 = arith.constant dense<0.000000e+00> : vector<16x512xf32>
    %265 = tpu.matmul %262, %264, %cst_105 {dimension_numbers = #tpu.dot_dimension_numbers<[1], [0], [0], [1], [0, 0, 1, 1], [], []>} : vector<16x128xbf16>, vector<128x512xbf16>, vector<16x512xf32> -> vector<16x512xf32>
    %c1_106 = arith.constant 1 : index
    %c0_107 = arith.constant 0 : index
    %c0_108 = arith.constant 0 : index
    %266 = vector.load %arg6[%c1_106, %c0_107, %c0_108] : memref<2x1x512xf32, #tpu.memory_space<vmem>>, vector<1x1x512xf32>
    %267 = vector.shape_cast %266 : vector<1x1x512xf32> to vector<1x512xf32>
    %268 = vector.broadcast %267 : vector<1x512xf32> to vector<16x512xf32>
    %269 = arith.addf %265, %268 : vector<16x512xf32>
    %270 = arith.mulf %269, %269 : vector<16x512xf32>
    %271 = arith.mulf %269, %270 : vector<16x512xf32>
    %cst_109 = arith.constant 4.471500e-02 : f32
    %272 = vector.broadcast %cst_109 : f32 to vector<16x512xf32>
    %273 = arith.mulf %272, %271 : vector<16x512xf32>
    %274 = arith.addf %269, %273 : vector<16x512xf32>
    %cst_110 = arith.constant 0.797884583 : f32
    %275 = vector.broadcast %cst_110 : f32 to vector<16x512xf32>
    %276 = arith.mulf %275, %274 : vector<16x512xf32>
    %277 = math.tanh %276 : vector<16x512xf32>
    %cst_111 = arith.constant 1.000000e+00 : f32
    %278 = vector.broadcast %cst_111 : f32 to vector<16x512xf32>
    %279 = arith.addf %278, %277 : vector<16x512xf32>
    %cst_112 = arith.constant 5.000000e-01 : f32
    %280 = vector.broadcast %cst_112 : f32 to vector<16x512xf32>
    %281 = arith.mulf %280, %279 : vector<16x512xf32>
    %282 = arith.mulf %269, %281 : vector<16x512xf32>
    %283 = arith.truncf %282 : vector<16x512xf32> to vector<16x512xbf16>
    %c1_113 = arith.constant 1 : index
    %c0_114 = arith.constant 0 : index
    %c0_115 = arith.constant 0 : index
    %284 = vector.load %arg7[%c1_113, %c0_114, %c0_115] : memref<2x512x128xbf16, #tpu.memory_space<vmem>>, vector<1x512x128xbf16>
    %285 = vector.shape_cast %284 : vector<1x512x128xbf16> to vector<512x128xbf16>
    %cst_116 = arith.constant dense<0.000000e+00> : vector<16x128xf32>
    %286 = tpu.matmul %283, %285, %cst_116 {dimension_numbers = #tpu.dot_dimension_numbers<[1], [0], [0], [1], [0, 0, 1, 1], [], []>} : vector<16x512xbf16>, vector<512x128xbf16>, vector<16x128xf32> -> vector<16x128xf32>
    %c1_117 = arith.constant 1 : index
    %c4_118 = arith.constant 4 : index
    %c0_119 = arith.constant 0 : index
    %287 = vector.load %arg8[%c1_117, %c4_118, %c0_119] : memref<2x9x128xf32, #tpu.memory_space<vmem>>, vector<1x1x128xf32>
    %288 = vector.shape_cast %287 : vector<1x1x128xf32> to vector<1x128xf32>
    %289 = vector.broadcast %288 : vector<1x128xf32> to vector<16x128xf32>
    %290 = arith.addf %286, %289 : vector<16x128xf32>
    %291 = arith.addf %290, %261 : vector<16x128xf32>
    %c1_120 = arith.constant 1 : index
    %c7_121 = arith.constant 7 : index
    %c0_122 = arith.constant 0 : index
    %292 = vector.load %arg8[%c1_120, %c7_121, %c0_122] : memref<2x9x128xf32, #tpu.memory_space<vmem>>, vector<1x1x128xf32>
    %293 = vector.shape_cast %292 : vector<1x1x128xf32> to vector<1x128xf32>
    %c1_123 = arith.constant 1 : index
    %c8_124 = arith.constant 8 : index
    %c0_125 = arith.constant 0 : index
    %294 = vector.load %arg8[%c1_123, %c8_124, %c0_125] : memref<2x9x128xf32, #tpu.memory_space<vmem>>, vector<1x1x128xf32>
    %295 = vector.shape_cast %294 : vector<1x1x128xf32> to vector<1x128xf32>
    %cst_126 = arith.constant dense<0.000000e+00> : vector<16xf32>
    %296 = vector.multi_reduction <add>, %291, %cst_126 [1] : vector<16x128xf32> to vector<16xf32>
    %297 = vector.shape_cast %296 : vector<16xf32> to vector<16x1xf32>
    %298 = arith.mulf %291, %291 : vector<16x128xf32>
    %cst_127 = arith.constant dense<0.000000e+00> : vector<16xf32>
    %299 = vector.multi_reduction <add>, %298, %cst_127 [1] : vector<16x128xf32> to vector<16xf32>
    %300 = vector.shape_cast %299 : vector<16xf32> to vector<16x1xf32>
    %cst_128 = arith.constant 7.812500e-03 : f32
    %301 = vector.broadcast %cst_128 : f32 to vector<16x1xf32>
    %302 = arith.mulf %297, %301 : vector<16x1xf32>
    %cst_129 = arith.constant 7.812500e-03 : f32
    %303 = vector.broadcast %cst_129 : f32 to vector<16x1xf32>
    %304 = arith.mulf %300, %303 : vector<16x1xf32>
    %305 = arith.mulf %302, %302 : vector<16x1xf32>
    %306 = arith.subf %304, %305 : vector<16x1xf32>
    %307 = vector.broadcast %302 : vector<16x1xf32> to vector<16x128xf32>
    %308 = arith.subf %291, %307 : vector<16x128xf32>
    %cst_130 = arith.constant 9.99999996E-13 : f32
    %309 = vector.broadcast %cst_130 : f32 to vector<16x1xf32>
    %310 = arith.addf %306, %309 : vector<16x1xf32>
    %311 = math.rsqrt %310 : vector<16x1xf32>
    %312 = vector.broadcast %311 : vector<16x1xf32> to vector<16x128xf32>
    %313 = arith.mulf %308, %312 : vector<16x128xf32>
    %314 = vector.broadcast %293 : vector<1x128xf32> to vector<16x128xf32>
    %315 = arith.mulf %313, %314 : vector<16x128xf32>
    %316 = vector.broadcast %295 : vector<1x128xf32> to vector<16x128xf32>
    %317 = arith.addf %315, %316 : vector<16x128xf32>
    %318 = arith.truncf %317 : vector<16x128xf32> to vector<16x128xbf16>
    %c0_131 = arith.constant 0 : index
    %c0_132 = arith.constant 0 : index
    %319 = vector.load %arg9[%c0_131, %c0_132] : memref<128x128xbf16, #tpu.memory_space<vmem>>, vector<128x128xbf16>
    %cst_133 = arith.constant dense<0.000000e+00> : vector<16x128xf32>
    %320 = tpu.matmul %318, %319, %cst_133 {dimension_numbers = #tpu.dot_dimension_numbers<[1], [0], [0], [1], [0, 0, 1, 1], [], []>} : vector<16x128xbf16>, vector<128x128xbf16>, vector<16x128xf32> -> vector<16x128xf32>
    %c0_134 = arith.constant 0 : index
    %c0_135 = arith.constant 0 : index
    %321 = vector.load %arg10[%c0_134, %c0_135] : memref<1x128xf32, #tpu.memory_space<vmem>>, vector<1x128xf32>
    %322 = vector.broadcast %321 : vector<1x128xf32> to vector<16x128xf32>
    %323 = arith.addf %320, %322 : vector<16x128xf32>
    %c0_136 = arith.constant 0 : index
    %c0_137 = arith.constant 0 : index
    %324 = vector.load %arg11[%c0_136, %c0_137] : memref<16x128xf32, #tpu.memory_space<vmem>>, vector<16x128xf32>
    tpu.vector_store %arg11[%c0_136, %c0_137], %323 {strides = array<i32>} : memref<16x128xf32, #tpu.memory_space<vmem>>, vector<16x128xf32>,
    return
  }
}

</mosaic_0001>

<llo_original>
// kernel: quest_model_forward.1
$region0: #{quest_model_forward.1}
  #allocation0 [shape = 'u32[]', space=smem, size = 0x4, offset = 0x4, fixed_abs, tag = 'smem constant byte address 0x4 - core index']
  #allocation1 [shape = 'u32[144,128]{1,0:T(1,128)}', space=vmem, size = 0x12000, scoped, tag = 'internal scratch']
  %s0 = inlined_call_operand.vmem [shape: f32[16,128], index: 0, kind: input, shape index: {}]
  %s1 = inlined_call_operand.vmem [shape: f32[2,8], index: 1, kind: input, shape index: {}]
  %s2 = inlined_call_operand.vmem [shape: f32[2,128], index: 2, kind: input, shape index: {}]
  %s3 = inlined_call_operand.hbm [shape: bf16[2,128,384], index: 3, kind: input, shape index: {}]
  %s4 = inlined_call_operand.vmem [shape: bf16[2,128,128], index: 4, kind: input, shape index: {}]
  %s5 = inlined_call_operand.hbm [shape: bf16[2,128,512], index: 5, kind: input, shape index: {}]
  %s6 = inlined_call_operand.vmem [shape: f32[2,1,512], index: 6, kind: input, shape index: {}]
  %s7 = inlined_call_operand.hbm [shape: bf16[2,512,128], index: 7, kind: input, shape index: {}]
  %s8 = inlined_call_operand.vmem [shape: f32[2,9,128], index: 8, kind: input, shape index: {}]
  %s9 = inlined_call_operand.vmem [shape: bf16[128,128], index: 9, kind: input, shape index: {}]
  %s10 = inlined_call_operand.vmem [shape: f32[1,128], index: 10, kind: input, shape index: {}]
  %s11 = inlined_call_operand.vmem [shape: f32[16,128], index: 11, kind: output, shape index: {}]
  %s12 = sld [smem:[#allocation0]]
  $region66: #{quest_model_forward.1} parent=0
    _
  %s14 = ssub.s32 1, %s12
  %s15 = scalar_select 0, %s14, %s12
  $region1: #{quest_model_forward.1} parent=0
    #allocation2 [shape = 'u8[196608]{0}', space=vmem, size = 0x30000, scoped, tag = 'input window, operand 3, single buffered']
    #allocation3 [shape = 's32[1]{0}', space=sflag, size = 0x4, scoped, tag = 'scoped memory for quest_model_forward.1']
    #allocation4 [shape = 'u8[262144]{0}', space=vmem, size = 0x40000, scoped, tag = 'input window, operand 5, single buffered']
    #allocation5 [shape = 's32[1]{0}', space=sflag, size = 0x4, scoped, tag = 'scoped memory for quest_model_forward.1']
    #allocation6 [shape = 'u8[262144]{0}', space=vmem, size = 0x40000, scoped, tag = 'input window, operand 7, single buffered']
    %16 = vsyncpa [#allocation3], 0
    %17 = vsyncpa [#allocation5], 0
    // Predicated region
    $region2: #{quest_model_forward.1} parent=1 // pred_check
      _
    $region3: #{quest_model_forward.1} parent=1 // pred_check_branch
      %19 = sbr.rel (0) target = $region5
    $region4: #{quest_model_forward.1} parent=1 // pred_region
      _
    $region5: #{quest_model_forward.1} parent=1 // pred_fallthru
      _
    // Predicated region
    $region6: #{quest_model_forward.1} parent=1 // pred_check
      _
    $region7: #{quest_model_forward.1} parent=1 // pred_check_branch
      %21 = sbr.rel (0) target = $region9
    $region8: #{quest_model_forward.1} parent=1 // pred_region
      _
    $region9: #{quest_model_forward.1} parent=1 // pred_fallthru
      _
    // Predicated region
    $region10: #{quest_model_forward.1} parent=1 // pred_check
      _
    $region11: #{quest_model_forward.1} parent=1 // pred_check_branch
      %23 = sbr.rel (0) target = $region13
    $region12: #{quest_model_forward.1} parent=1 // pred_region
      _
    $region13: #{quest_model_forward.1} parent=1 // pred_fallthru
      _
    // Predicated region
    $region14: #{quest_model_forward.1} parent=1 // pred_check
      _
    $region15: #{quest_model_forward.1} parent=1 // pred_check_branch
      %25 = sbr.rel (0) target = $region17
    $region16: #{quest_model_forward.1} parent=1 // pred_region
      %s27 = ssub.s32 6144, 6144
      %28 = vsyncadd [#allocation3], %s27
      %s29 = sshll.u32 [#allocation2], 4
      %s30 = int_to_ptr.vmem [resolvable:$true] %s29
      %35 = dma.hbm_to_vmem [thread:$0]  %s3, 6144, %s30, [#allocation3], 192, 192, 12
    $region17: #{quest_model_forward.1} parent=1 // pred_fallthru
      _
    // Predicated region
    $region18: #{quest_model_forward.1} parent=1 // pred_check
      _
    $region19: #{quest_model_forward.1} parent=1 // pred_check_branch
      %37 = sbr.rel (0) target = $region21
    $region20: #{quest_model_forward.1} parent=1 // pred_region
      _
    $region21: #{quest_model_forward.1} parent=1 // pred_fallthru
      _
    // Predicated region
    $region22: #{quest_model_forward.1} parent=1 // pred_check
      _
    $region23: #{quest_model_forward.1} parent=1 // pred_check_branch
      %39 = sbr.rel (0) target = $region25
    $region24: #{quest_model_forward.1} parent=1 // pred_region
      %s41 = ssub.s32 8192, 8192
      %42 = vsyncadd [#allocation5], %s41
      %s43 = sshll.u32 [#allocation4], 4
      %s44 = int_to_ptr.vmem [resolvable:$true] %s43
      %49 = dma.hbm_to_vmem [thread:$0]  %s5, 8192, %s44, [#allocation5], 256, 256, 16
    $region25: #{quest_model_forward.1} parent=1 // pred_fallthru
      _
    // Predicated region
    $region26: #{quest_model_forward.1} parent=1 // pred_check
      _
    $region27: #{quest_model_forward.1} parent=1 // pred_check_branch
      %51 = sbr.rel (0) target = $region29
    $region28: #{quest_model_forward.1} parent=1 // pred_region
      _
    $region29: #{quest_model_forward.1} parent=1 // pred_fallthru
      _
    // Predicated region
    $region30: #{quest_model_forward.1} parent=1 // pred_check
      _
    $region31: #{quest_model_forward.1} parent=1 // pred_check_branch
      %53 = sbr.rel (0) target = $region33
    $region32: #{quest_model_forward.1} parent=1 // pred_region
      %s55 = ssub.s32 8192, 8192
      %56 = vsyncadd [#allocation5], %s55
      %s57 = sshll.u32 [#allocation6], 4
      %s58 = int_to_ptr.vmem [resolvable:$true] %s57
      %63 = dma.hbm_to_vmem [thread:$0]  %s7, 8192, %s58, [#allocation5], 64, 64, 4
    $region33: #{quest_model_forward.1} parent=1 // pred_fallthru
      _
    // Predicated region
    $region34: #{quest_model_forward.1} parent=1 // pred_check
      _
    $region35: #{quest_model_forward.1} parent=1 // pred_check_branch
      %65 = sbr.rel (0) target = $region37
    $region36: #{quest_model_forward.1} parent=1 // pred_region
      _
    $region37: #{quest_model_forward.1} parent=1 // pred_fallthru
      _
    // Predicated region
    $region38: #{quest_model_forward.1} parent=1 // pred_check
      _
    $region39: #{quest_model_forward.1} parent=1 // pred_check_branch
      %67 = sbr.rel (0) target = $region41
    $region40: #{quest_model_forward.1} parent=1 // pred_region
      _
    $region41: #{quest_model_forward.1} parent=1 // pred_fallthru
      _
    // Predicated region
    $region42: #{quest_model_forward.1} parent=1 // pred_check
      _
    $region43: #{quest_model_forward.1} parent=1 // pred_check_branch
      %69 = sbr.rel (0) target = $region45
    $region44: #{quest_model_forward.1} parent=1 // pred_region
      _
    $region45: #{quest_model_forward.1} parent=1 // pred_fallthru
      _
    // Predicated region
    $region46: #{quest_model_forward.1} parent=1 // pred_check
      _
    $region47: #{quest_model_forward.1} parent=1 // pred_check_branch
      %71 = sbr.rel (0) target = $region49
    $region48: #{quest_model_forward.1} parent=1 // pred_region
      %72 = dma.done [#allocation3], 6144
    $region49: #{quest_model_forward.1} parent=1 // pred_fallthru
      _
    // Predicated region
    $region50: #{quest_model_forward.1} parent=1 // pred_check
      _
    $region51: #{quest_model_forward.1} parent=1 // pred_check_branch
      %74 = sbr.rel (0) target = $region53
    $region52: #{quest_model_forward.1} parent=1 // pred_region
      %75 = dma.done [#allocation5], 8192
    $region53: #{quest_model_forward.1} parent=1 // pred_fallthru
      _
    // Predicated region
    $region54: #{quest_model_forward.1} parent=1 // pred_check
      _
    $region55: #{quest_model_forward.1} parent=1 // pred_check_branch
      %77 = sbr.rel (0) target = $region57
    $region56: #{quest_model_forward.1} parent=1 // pred_region
      %78 = dma.done [#allocation5], 8192
    $region57: #{quest_model_forward.1} parent=1 // pred_fallthru
      _
    %v80 = vld [vmem:[%s0] sm:$0xff]
    %v81 = vld [vmem:[%s0 + $0x8] sm:$0xff]
    %v82 = vld [vmem:[%s2] sm:$0x1]
    %v83 = vld [vmem:[%s2 + $0x1] sm:$0x1]
    %84 = vadd.xlane.f32.xlu0 %v80
    %v85 = vpop.xlane.xlu0 %84
    %86 = vadd.xlane.f32.xlu0 %v81
    %v87 = vpop.xlane.xlu0 %86
    %v88 = vmul.f32 %v80, %v80
    %v89 = vmul.f32 %v81, %v81
    %90 = vadd.xlane.f32.xlu0 %v88
    %v91 = vpop.xlane.xlu0 %90
    %92 = vadd.xlane.f32.xlu0 %v89
    %v93 = vpop.xlane.xlu0 %92
    %v94 = vmul.f32 %v85, 0.0078125
    %v95 = vmul.f32 %v87, 0.0078125
    %v96 = vmul.f32 %v91, 0.0078125
    %v97 = vmul.f32 %v93, 0.0078125
    %v98 = vmul.f32 %v94, %v94
    %v99 = vmul.f32 %v95, %v95
    %v100 = vsub.f32 %v96, %v98
    %v101 = vsub.f32 %v97, %v99
    %v102 = vsub.f32 %v80, %v94
    %v103 = vsub.f32 %v81, %v95
    %v104 = vadd.f32 %v100, 1e-12
    %v105 = vadd.f32 %v101, 1e-12
    %v106 = vrsqrt.pop %v104
    %v107 = vrsqrt.pop %v105
    %v108 = vmul.f32 %v102, %v106
    %v109 = vmul.f32 %v103, %v107
    %v110 = vlaneseq
    %v111 = vshrl.u32 %v110, 7
    %v112 = vsub.s32 0, %v111
    %v113 = vrot.slane %v82, %v112
    %v114 = vmul.f32 %v108, %v113
    %v115 = vmul.f32 %v109, %v113
    %v116 = vlaneseq
    %v117 = vshrl.u32 %v116, 7
    %v118 = vsub.s32 0, %v117
    %v119 = vrot.slane %v83, %v118
    %v120 = vadd.f32 %v114, %v119
    %v121 = vadd.f32 %v115, %v119
    %v122 = vld [vmem:[%s1] sm:$0x3]
    %v125 = vunpack.c.l.s4 1966171168
    %v126 = vunpack.c.0.s8 %v125
    %v127 = vlaneseq
    %v128 = vshrl.u32 %v127, 7
    %v129 = vsub.s32 %v126, %v128
    %v130 = vrot.slane %v122, %v129
    %v131 = vcombine.high %v130, %v130
    %v133 = vunpack.c.l.s4 1966171168
    %v134 = vunpack.c.0.s8 %v133
    %v135 = vlaneseq
    %v136 = vshrl.u32 %v135, 7
    %v137 = vsub.s32 %v134, %v136
    %v138 = vrot.slane %v130, %v137
    %v140 = vunpack.c.l.s4 1966171168
    %v141 = vunpack.c.0.s8 %v140
    %v142 = vlaneseq
    %v143 = vshrl.u32 %v142, 7
    %v144 = vsub.s32 %v141, %v143
    %v145 = vrot.slane %v131, %v144
    %v146 = vpack.c.bf16 %v121, %v120
    %v147 = vld [vmem:[#allocation2] sm:$0xff]
    %v148 = vld [vmem:[#allocation2 + $0x8] sm:$0xf]
    %v149 = vld [vmem:[#allocation2 + $0xc] sm:$0xff]
    %v150 = vld [vmem:[#allocation2 + $0x14] sm:$0xf]
    %v151 = vld [vmem:[#allocation2 + $0x18] sm:$0xff]
    %v152 = vld [vmem:[#allocation2 + $0x20] sm:$0xf]
    %v153 = vld [vmem:[#allocation2 + $0x24] sm:$0xff]
    %v154 = vld [vmem:[#allocation2 + $0x2c] sm:$0xf]
    %v155 = vld [vmem:[#allocation2 + $0x30] sm:$0xff]
    %v156 = vld [vmem:[#allocation2 + $0x38] sm:$0xf]
    %v157 = vld [vmem:[#allocation2 + $0x3c] sm:$0xff]
    %v158 = vld [vmem:[#allocation2 + $0x44] sm:$0xf]
    %v159 = vld [vmem:[#allocation2 + $0x48] sm:$0xff]
    %v160 = vld [vmem:[#allocation2 + $0x50] sm:$0xf]
    %v161 = vld [vmem:[#allocation2 + $0x54] sm:$0xff]
    %v162 = vld [vmem:[#allocation2 + $0x5c] sm:$0xf]
    %v163 = vld [vmem:[#allocation2 + $0x60] sm:$0xff]
    %v164 = vld [vmem:[#allocation2 + $0x68] sm:$0xf]
    %v165 = vld [vmem:[#allocation2 + $0x6c] sm:$0xff]
    %v166 = vld [vmem:[#allocation2 + $0x74] sm:$0xf]
    %v167 = vld [vmem:[#allocation2 + $0x78] sm:$0xff]
    %v168 = vld [vmem:[#allocation2 + $0x80] sm:$0xf]
    %v169 = vld [vmem:[#allocation2 + $0x84] sm:$0xff]
    %v170 = vld [vmem:[#allocation2 + $0x8c] sm:$0xf]
    %v171 = vld [vmem:[#allocation2 + $0x90] sm:$0xff]
    %v172 = vld [vmem:[#allocation2 + $0x98] sm:$0xf]
    %v173 = vld [vmem:[#allocation2 + $0x9c] sm:$0xff]
    %v174 = vld [vmem:[#allocation2 + $0xa4] sm:$0xf]
    %v175 = vld [vmem:[#allocation2 + $0xa8] sm:$0xff]
    %v176 = vld [vmem:[#allocation2 + $0xb0] sm:$0xf]
    %v177 = vld [vmem:[#allocation2 + $0xb4] sm:$0xff]
    %v178 = vld [vmem:[#allocation2 + $0xbc] sm:$0xf]
    %v211 = vunpack.c.l.b16 %v147
    %v212 = vunpack.c.h.b16 %v147
    %v213 = vunpack.c.l.b16 %v148
    %v214 = vunpack.c.l.b16 %v149
    %v215 = vunpack.c.h.b16 %v149
    %v216 = vunpack.c.l.b16 %v150
    %v217 = vunpack.c.l.b16 %v151
    %v218 = vunpack.c.h.b16 %v151
    %v219 = vunpack.c.l.b16 %v152
    %v220 = vunpack.c.l.b16 %v153
    %v221 = vunpack.c.h.b16 %v153
    %v222 = vunpack.c.l.b16 %v154
    %v223 = vunpack.c.l.b16 %v155
    %v224 = vunpack.c.h.b16 %v155
    %v225 = vunpack.c.l.b16 %v156
    %v226 = vunpack.c.l.b16 %v157
    %v227 = vunpack.c.h.b16 %v157
    %v228 = vunpack.c.l.b16 %v158
    %v229 = vunpack.c.l.b16 %v159
    %v230 = vunpack.c.h.b16 %v159
    %v231 = vunpack.c.l.b16 %v160
    %v232 = vunpack.c.l.b16 %v161
    %v233 = vunpack.c.h.b16 %v161
    %v234 = vunpack.c.l.b16 %v162
    %v235 = vunpack.c.l.b16 %v163
    %v236 = vunpack.c.h.b16 %v163
    %v237 = vunpack.c.l.b16 %v164
    %v238 = vunpack.c.l.b16 %v165
    %v239 = vunpack.c.h.b16 %v165
    %v240 = vunpack.c.l.b16 %v166
    %v241 = vunpack.c.l.b16 %v167
    %v242 = vunpack.c.h.b16 %v167
    %v243 = vunpack.c.l.b16 %v168
    %v244 = vunpack.c.l.b16 %v169
    %v245 = vunpack.c.h.b16 %v169
    %v246 = vunpack.c.l.b16 %v170
    %v247 = vunpack.c.l.b16 %v171
    %v248 = vunpack.c.h.b16 %v171
    %v249 = vunpack.c.l.b16 %v172
    %v250 = vunpack.c.l.b16 %v173
    %v251 = vunpack.c.h.b16 %v173
    %v252 = vunpack.c.l.b16 %v174
    %v253 = vunpack.c.l.b16 %v175
    %v254 = vunpack.c.h.b16 %v175
    %v255 = vunpack.c.l.b16 %v176
    %v256 = vunpack.c.l.b16 %v177
    %v257 = vunpack.c.h.b16 %v177
    %v258 = vunpack.c.l.b16 %v178
    %v259 = vpack.c.b16 %v214, %v211
    %v260 = vpack.c.b16 %v215, %v212
    %v261 = vpack.c.b16 %v216, %v213
    %v262 = vpack.c.b16 %v220, %v217
    %v263 = vpack.c.b16 %v221, %v218
    %v264 = vpack.c.b16 %v222, %v219
    %v265 = vpack.c.b16 %v226, %v223
    %v266 = vpack.c.b16 %v227, %v224
    %v267 = vpack.c.b16 %v228, %v225
    %v268 = vpack.c.b16 %v232, %v229
    %v269 = vpack.c.b16 %v233, %v230
    %v270 = vpack.c.b16 %v234, %v231
    %v271 = vpack.c.b16 %v238, %v235
    %v272 = vpack.c.b16 %v239, %v236
    %v273 = vpack.c.b16 %v240, %v237
    %v274 = vpack.c.b16 %v244, %v241
    %v275 = vpack.c.b16 %v245, %v242
    %v276 = vpack.c.b16 %v246, %v243
    %v277 = vpack.c.b16 %v250, %v247
    %v278 = vpack.c.b16 %v251, %v248
    %v279 = vpack.c.b16 %v252, %v249
    %v280 = vpack.c.b16 %v256, %v253
    %v281 = vpack.c.b16 %v257, %v254
    %v282 = vpack.c.b16 %v258, %v255
    %307 = vmatprep.subr.bf16.mxu0 %v260
    %308 = vmatpush1.bf16.msra.mxu0 %v259
    %309 = vmatprep.subr.bf16.mxu0 %v263
    %310 = vmatpush1.bf16.msra.mxu0 %v262
    %311 = vmatprep.subr.bf16.mxu0 %v266
    %312 = vmatpush1.bf16.msra.mxu0 %v265
    %313 = vmatprep.subr.bf16.mxu0 %v269
    %314 = vmatpush1.bf16.msra.mxu0 %v268
    %315 = vmatprep.subr.bf16.mxu0 %v272
    %316 = vmatpush1.bf16.msra.mxu0 %v271
    %317 = vmatprep.subr.bf16.mxu0 %v275
    %318 = vmatpush1.bf16.msra.mxu0 %v274
    %319 = vmatprep.subr.bf16.mxu0 %v278
    %320 = vmatpush1.bf16.msra.mxu0 %v277
    %321 = vmatprep.subr.bf16.mxu0 %v281
    %322 = vmatpush1.bf16.msra.mxu0 %v280
    %323 = vmatprep.subr.bf16.mxu0 0
    %324 = vmatpush1.bf16.msra.mxu0 0
    %325 = vmatprep.subr.bf16.mxu0 0
    %326 = vmatpush1.bf16.msra.mxu0 0
    %327 = vmatprep.subr.bf16.mxu0 0
    %328 = vmatpush1.bf16.msra.mxu0 0
    %329 = vmatprep.subr.bf16.mxu0 0
    %330 = vmatpush1.bf16.msra.mxu0 0
    %331 = vmatprep.subr.bf16.mxu0 0
    %332 = vmatpush1.bf16.msra.mxu0 0
    %333 = vmatprep.subr.bf16.mxu0 0
    %334 = vmatpush1.bf16.msra.mxu0 0
    %335 = vmatprep.subr.bf16.mxu0 0
    %336 = vmatpush1.bf16.msra.mxu0 0
    %337 = vmatprep.subr.bf16.mxu0 0
    %338 = vmatpush1.bf16.msra.mxu0 0
    %339 = vmatprep.mubr.bf16.mxu0 0
    %340 = vmatmul.mubr.bf16.gmra.mrb[0].mxu0 %v146
    %v341 = vpop.f32.mrb[0].mxu0
    %v342 = vadd.f32 0.0, %v341
    %v343 = vpop.f32.mrb[0].mxu0
    %v344 = vadd.f32 0.0, %v343
    %v345 = vpop.f32.mrb[0].mxu0
    %v346 = vadd.f32 0.0, %v345
    %v347 = vpop.f32.mrb[0].mxu0
    %v348 = vadd.f32 0.0, %v347
    %349 = vdwg.mxu0
    %350 = vmatprep.subr.bf16.mxu0 0
    %351 = vmatpush1.bf16.msra.mxu0 %v261
    %352 = vmatprep.subr.bf16.mxu0 0
    %353 = vmatpush1.bf16.msra.mxu0 %v264
    %354 = vmatprep.subr.bf16.mxu0 0
    %355 = vmatpush1.bf16.msra.mxu0 %v267
    %356 = vmatprep.subr.bf16.mxu0 0
    %357 = vmatpush1.bf16.msra.mxu0 %v270
    %358 = vmatprep.subr.bf16.mxu0 0
    %359 = vmatpush1.bf16.msra.mxu0 %v273
    %360 = vmatprep.subr.bf16.mxu0 0
    %361 = vmatpush1.bf16.msra.mxu0 %v276
    %362 = vmatprep.subr.bf16.mxu0 0
    %363 = vmatpush1.bf16.msra.mxu0 %v279
    %364 = vmatprep.subr.bf16.mxu0 0
    %365 = vmatpush1.bf16.msra.mxu0 %v282
    %366 = vmatprep.subr.bf16.mxu0 0
    %367 = vmatpush1.bf16.msra.mxu0 0
    %368 = vmatprep.subr.bf16.mxu0 0
    %369 = vmatpush1.bf16.msra.mxu0 0
    %370 = vmatprep.subr.bf16.mxu0 0
    %371 = vmatpush1.bf16.msra.mxu0 0
    %372 = vmatprep.subr.bf16.mxu0 0
    %373 = vmatpush1.bf16.msra.mxu0 0
    %374 = vmatprep.subr.bf16.mxu0 0
    %375 = vmatpush1.bf16.msra.mxu0 0
    %376 = vmatprep.subr.bf16.mxu0 0
    %377 = vmatpush1.bf16.msra.mxu0 0
    %378 = vmatprep.subr.bf16.mxu0 0
    %379 = vmatpush1.bf16.msra.mxu0 0
    %380 = vmatprep.subr.bf16.mxu0 0
    %381 = vmatpush1.bf16.msra.mxu0 0
    %382 = vmatprep.mubr.bf16.mxu0 0
    %383 = vmatmul.mubr.bf16.gmra.mrb[0].mxu0 %v146
    %v384 = vpop.f32.mrb[0].mxu0
    %v385 = vadd.f32 0.0, %v384
    %v386 = vpop.f32.mrb[0].mxu0
    %v387 = vpop.f32.mrb[0].mxu0
    %v388 = vadd.f32 0.0, %v387
    %v389 = vpop.f32.mrb[0].mxu0
    %390 = vdwg.mxu0
    %v391 = vld [vmem:[%s8] sm:$0x1]
    %v392 = vlaneseq
    %v393 = vshrl.u32 %v392, 7
    %v394 = vsub.s32 0, %v393
    %v395 = vrot.slane %v391, %v394
    %v396 = vadd.f32 %v342, %v395
    %v397 = vadd.f32 %v346, %v395
    %v398 = vld [vmem:[%s8 + $0x1] sm:$0x1]
    %v399 = vlaneseq
    %v400 = vshrl.u32 %v399, 7
    %v401 = vsub.s32 0, %v400
    %v402 = vrot.slane %v398, %v401
    %v403 = vadd.f32 %v344, %v402
    %v404 = vadd.f32 %v348, %v402
    %v405 = vld [vmem:[%s8 + $0x2] sm:$0x1]
    %v406 = vlaneseq
    %v407 = vshrl.u32 %v406, 7
    %v408 = vsub.s32 0, %v407
    %v409 = vrot.slane %v405, %v408
    %v410 = vadd.f32 %v385, %v409
    %v411 = vadd.f32 %v388, %v409
    %414 = vrot.lane.b32.xlu0 %v396, 64
    %v415 = vpop.permute.xlu0 %414
    %416 = vrot.lane.b32.xlu0 %v397, 64
    %v417 = vpop.permute.xlu0 %416
    %420 = vrot.lane.b32.xlu0 %v403, 64
    %v421 = vpop.permute.xlu0 %420
    %422 = vrot.lane.b32.xlu0 %v404, 64
    %v423 = vpop.permute.xlu0 %422
    %426 = vrot.lane.b32.xlu0 %v410, 64
    %v427 = vpop.permute.xlu0 %426
    %428 = vrot.lane.b32.xlu0 %v411, 64
    %v429 = vpop.permute.xlu0 %428
    %v432 = vlaneseq
    %v433 = vshrl.u32 %v432, 7
    %v434 = vsub.s32 0, %v433
    %v435 = vrot.slane %v138, %v434
    %v436 = vlaneseq
    %v437 = vshrl.u32 %v436, 7
    %v438 = vsub.s32 0, %v437
    %v439 = vrot.slane %v145, %v438
    %vm442 = vcmask 523264
    %v443 = vsel %vm442, %v396, 0
    %v445 = vsel %vm442, %v403, 0
    %447 = vmatprep.subr.mxu0 0.0
    %448 = vmatpush1.xpose.msra.mxu0 %v445
    %449 = vmatprep.subr.mxu0 0.0
    %450 = vmatpush1.xpose.msra.mxu0 0.0
    %451 = vmatprep.subr.mxu0 0.0
    %452 = vmatpush1.xpose.msra.mxu0 0.0
    %453 = vmatprep.subr.mxu0 0.0
    %454 = vmatpush1.xpose.msra.mxu0 0.0
    %455 = vmatprep.subr.mxu0 0.0
    %456 = vmatpush1.xpose.msra.mxu0 0.0
    %457 = vmatprep.subr.mxu0 0.0
    %458 = vmatpush1.xpose.msra.mxu0 0.0
    %459 = vmatprep.subr.mxu0 0.0
    %460 = vmatpush1.xpose.msra.mxu0 0.0
    %461 = vmatprep.subr.mxu0 0.0
    %462 = vmatpush1.xpose.msra.mxu0 0.0
    %463 = vmatprep.subr.mxu0 0.0
    %464 = vmatpush1.xpose.msra.mxu0 0.0
    %465 = vmatprep.subr.mxu0 0.0
    %466 = vmatpush1.xpose.msra.mxu0 0.0
    %467 = vmatprep.subr.mxu0 0.0
    %468 = vmatpush1.xpose.msra.mxu0 0.0
    %469 = vmatprep.subr.mxu0 0.0
    %470 = vmatpush1.xpose.msra.mxu0 0.0
    %471 = vmatprep.subr.mxu0 0.0
    %472 = vmatpush1.xpose.msra.mxu0 0.0
    %473 = vmatprep.subr.mxu0 0.0
    %474 = vmatpush1.xpose.msra.mxu0 0.0
    %475 = vmatprep.subr.mxu0 0.0
    %476 = vmatpush1.xpose.msra.mxu0 0.0
    %477 = vmatprep.subr.mxu0 0.0
    %478 = vmatpush1.xpose.msra.mxu0 0.0
    %479 = vmatprep.subr.mxu0 0.0
    %480 = vmatpush1.xpose.msra.mxu0 0.0
    %481 = vmatprep.subr.mxu0 0.0
    %482 = vmatpush1.xpose.msra.mxu0 0.0
    %483 = vmatprep.subr.mxu0 0.0
    %484 = vmatpush1.xpose.msra.mxu0 0.0
    %485 = vmatprep.subr.mxu0 0.0
    %486 = vmatpush1.xpose.msra.mxu0 0.0
    %487 = vmatprep.subr.mxu0 0.0
    %488 = vmatpush1.xpose.msra.mxu0 0.0
    %489 = vmatprep.subr.mxu0 0.0
    %490 = vmatpush1.xpose.msra.mxu0 0.0
    %491 = vmatprep.subr.mxu0 0.0
    %492 = vmatpush1.xpose.msra.mxu0 0.0
    %493 = vmatprep.subr.mxu0 0.0
    %494 = vmatpush1.xpose.msra.mxu0 0.0
    %495 = vmatprep.subr.mxu0 0.0
    %496 = vmatpush1.xpose.msra.mxu0 0.0
    %497 = vmatprep.subr.mxu0 0.0
    %498 = vmatpush1.xpose.msra.mxu0 0.0
    %499 = vmatprep.subr.mxu0 0.0
    %500 = vmatpush1.xpose.msra.mxu0 0.0
    %501 = vmatprep.subr.mxu0 0.0
    %502 = vmatpush1.xpose.msra.mxu0 0.0
    %503 = vmatprep.subr.mxu0 0.0
    %504 = vmatpush1.xpose.msra.mxu0 0.0
    %505 = vmatprep.subr.mxu0 0.0
    %506 = vmatpush1.xpose.msra.mxu0 0.0
    %507 = vmatprep.subr.mxu0 0.0
    %508 = vmatpush1.xpose.msra.mxu0 0.0
    %509 = vmatprep.subr.mxu0 0.0
    %510 = vmatpush1.xpose.msra.mxu0 0.0
    %511 = vmatprep.mubr.f32.mxu0 0.0
    %512 = vmatmul.mubr.f32.gmra.mrb[0].mxu0 %v443
    %v513 = vpop.f32.mrb[0].mxu0
    %v514 = vadd.f32 %v435, %v513
    %v515 = vpop.f32.mrb[0].mxu0
    %516 = vdwg.mxu0
    %v517 = vsel %vm442, %v397, 0
    %v519 = vsel %vm442, %v404, 0
    %521 = vmatprep.subr.mxu0 0.0
    %522 = vmatpush1.xpose.msra.mxu0 %v519
    %523 = vmatprep.subr.mxu0 0.0
    %524 = vmatpush1.xpose.msra.mxu0 0.0
    %525 = vmatprep.subr.mxu0 0.0
    %526 = vmatpush1.xpose.msra.mxu0 0.0
    %527 = vmatprep.subr.mxu0 0.0
    %528 = vmatpush1.xpose.msra.mxu0 0.0
    %529 = vmatprep.subr.mxu0 0.0
    %530 = vmatpush1.xpose.msra.mxu0 0.0
    %531 = vmatprep.subr.mxu0 0.0
    %532 = vmatpush1.xpose.msra.mxu0 0.0
    %533 = vmatprep.subr.mxu0 0.0
    %534 = vmatpush1.xpose.msra.mxu0 0.0
    %535 = vmatprep.subr.mxu0 0.0
    %536 = vmatpush1.xpose.msra.mxu0 0.0
    %537 = vmatprep.subr.mxu0 0.0
    %538 = vmatpush1.xpose.msra.mxu0 0.0
    %539 = vmatprep.subr.mxu0 0.0
    %540 = vmatpush1.xpose.msra.mxu0 0.0
    %541 = vmatprep.subr.mxu0 0.0
    %542 = vmatpush1.xpose.msra.mxu0 0.0
    %543 = vmatprep.subr.mxu0 0.0
    %544 = vmatpush1.xpose.msra.mxu0 0.0
    %545 = vmatprep.subr.mxu0 0.0
    %546 = vmatpush1.xpose.msra.mxu0 0.0
    %547 = vmatprep.subr.mxu0 0.0
    %548 = vmatpush1.xpose.msra.mxu0 0.0
    %549 = vmatprep.subr.mxu0 0.0
    %550 = vmatpush1.xpose.msra.mxu0 0.0
    %551 = vmatprep.subr.mxu0 0.0
    %552 = vmatpush1.xpose.msra.mxu0 0.0
    %553 = vmatprep.subr.mxu0 0.0
    %554 = vmatpush1.xpose.msra.mxu0 0.0
    %555 = vmatprep.subr.mxu0 0.0
    %556 = vmatpush1.xpose.msra.mxu0 0.0
    %557 = vmatprep.subr.mxu0 0.0
    %558 = vmatpush1.xpose.msra.mxu0 0.0
    %559 = vmatprep.subr.mxu0 0.0
    %560 = vmatpush1.xpose.msra.mxu0 0.0
    %561 = vmatprep.subr.mxu0 0.0
    %562 = vmatpush1.xpose.msra.mxu0 0.0
    %563 = vmatprep.subr.mxu0 0.0
    %564 = vmatpush1.xpose.msra.mxu0 0.0
    %565 = vmatprep.subr.mxu0 0.0
    %566 = vmatpush1.xpose.msra.mxu0 0.0
    %567 = vmatprep.subr.mxu0 0.0
    %568 = vmatpush1.xpose.msra.mxu0 0.0
    %569 = vmatprep.subr.mxu0 0.0
    %570 = vmatpush1.xpose.msra.mxu0 0.0
    %571 = vmatprep.subr.mxu0 0.0
    %572 = vmatpush1.xpose.msra.mxu0 0.0
    %573 = vmatprep.subr.mxu0 0.0
    %574 = vmatpush1.xpose.msra.mxu0 0.0
    %575 = vmatprep.subr.mxu0 0.0
    %576 = vmatpush1.xpose.msra.mxu0 0.0
    %577 = vmatprep.subr.mxu0 0.0
    %578 = vmatpush1.xpose.msra.mxu0 0.0
    %579 = vmatprep.subr.mxu0 0.0
    %580 = vmatpush1.xpose.msra.mxu0 0.0
    %581 = vmatprep.subr.mxu0 0.0
    %582 = vmatpush1.xpose.msra.mxu0 0.0
    %583 = vmatprep.subr.mxu0 0.0
    %584 = vmatpush1.xpose.msra.mxu0 0.0
    %585 = vmatprep.mubr.f32.mxu0 0.0
    %586 = vmatmul.mubr.f32.gmra.mrb[0].mxu0 %v517
    %v587 = vpop.f32.mrb[0].mxu0
    %v588 = vadd.f32 %v439, %v587
    %v589 = vpop.f32.mrb[0].mxu0
    %590 = vdwg.mxu0
    %v591 = vsel %vm442, %v415, 0
    %v593 = vsel %vm442, %v421, 0
    %595 = vmatprep.subr.mxu0 0.0
    %596 = vmatpush1.xpose.msra.mxu0 %v593
    %597 = vmatprep.subr.mxu0 0.0
    %598 = vmatpush1.xpose.msra.mxu0 0.0
    %599 = vmatprep.subr.mxu0 0.0
    %600 = vmatpush1.xpose.msra.mxu0 0.0
    %601 = vmatprep.subr.mxu0 0.0
    %602 = vmatpush1.xpose.msra.mxu0 0.0
    %603 = vmatprep.subr.mxu0 0.0
    %604 = vmatpush1.xpose.msra.mxu0 0.0
    %605 = vmatprep.subr.mxu0 0.0
    %606 = vmatpush1.xpose.msra.mxu0 0.0
    %607 = vmatprep.subr.mxu0 0.0
    %608 = vmatpush1.xpose.msra.mxu0 0.0
    %609 = vmatprep.subr.mxu0 0.0
    %610 = vmatpush1.xpose.msra.mxu0 0.0
    %611 = vmatprep.subr.mxu0 0.0
    %612 = vmatpush1.xpose.msra.mxu0 0.0
    %613 = vmatprep.subr.mxu0 0.0
    %614 = vmatpush1.xpose.msra.mxu0 0.0
    %615 = vmatprep.subr.mxu0 0.0
    %616 = vmatpush1.xpose.msra.mxu0 0.0
    %617 = vmatprep.subr.mxu0 0.0
    %618 = vmatpush1.xpose.msra.mxu0 0.0
    %619 = vmatprep.subr.mxu0 0.0
    %620 = vmatpush1.xpose.msra.mxu0 0.0
    %621 = vmatprep.subr.mxu0 0.0
    %622 = vmatpush1.xpose.msra.mxu0 0.0
    %623 = vmatprep.subr.mxu0 0.0
    %624 = vmatpush1.xpose.msra.mxu0 0.0
    %625 = vmatprep.subr.mxu0 0.0
    %626 = vmatpush1.xpose.msra.mxu0 0.0
    %627 = vmatprep.subr.mxu0 0.0
    %628 = vmatpush1.xpose.msra.mxu0 0.0
    %629 = vmatprep.subr.mxu0 0.0
    %630 = vmatpush1.xpose.msra.mxu0 0.0
    %631 = vmatprep.subr.mxu0 0.0
    %632 = vmatpush1.xpose.msra.mxu0 0.0
    %633 = vmatprep.subr.mxu0 0.0
    %634 = vmatpush1.xpose.msra.mxu0 0.0
    %635 = vmatprep.subr.mxu0 0.0
    %636 = vmatpush1.xpose.msra.mxu0 0.0
    %637 = vmatprep.subr.mxu0 0.0
    %638 = vmatpush1.xpose.msra.mxu0 0.0
    %639 = vmatprep.subr.mxu0 0.0
    %640 = vmatpush1.xpose.msra.mxu0 0.0
    %641 = vmatprep.subr.mxu0 0.0
    %642 = vmatpush1.xpose.msra.mxu0 0.0
    %643 = vmatprep.subr.mxu0 0.0
    %644 = vmatpush1.xpose.msra.mxu0 0.0
    %645 = vmatprep.subr.mxu0 0.0
    %646 = vmatpush1.xpose.msra.mxu0 0.0
    %647 = vmatprep.subr.mxu0 0.0
    %648 = vmatpush1.xpose.msra.mxu0 0.0
    %649 = vmatprep.subr.mxu0 0.0
    %650 = vmatpush1.xpose.msra.mxu0 0.0
    %651 = vmatprep.subr.mxu0 0.0
    %652 = vmatpush1.xpose.msra.mxu0 0.0
    %653 = vmatprep.subr.mxu0 0.0
    %654 = vmatpush1.xpose.msra.mxu0 0.0
    %655 = vmatprep.subr.mxu0 0.0
    %656 = vmatpush1.xpose.msra.mxu0 0.0
    %657 = vmatprep.subr.mxu0 0.0
    %658 = vmatpush1.xpose.msra.mxu0 0.0
    %659 = vmatprep.mubr.f32.mxu0 0.0
    %660 = vmatmul.mubr.f32.gmra.mrb[0].mxu0 %v591
    %v661 = vpop.f32.mrb[0].mxu0
    %v662 = vadd.f32 %v435, %v661
    %v663 = vpop.f32.mrb[0].mxu0
    %664 = vdwg.mxu0
    %v665 = vsel %vm442, %v417, 0
    %v667 = vsel %vm442, %v423, 0
    %669 = vmatprep.subr.mxu0 0.0
    %670 = vmatpush1.xpose.msra.mxu0 %v667
    %671 = vmatprep.subr.mxu0 0.0
    %672 = vmatpush1.xpose.msra.mxu0 0.0
    %673 = vmatprep.subr.mxu0 0.0
    %674 = vmatpush1.xpose.msra.mxu0 0.0
    %675 = vmatprep.subr.mxu0 0.0
    %676 = vmatpush1.xpose.msra.mxu0 0.0
    %677 = vmatprep.subr.mxu0 0.0
    %678 = vmatpush1.xpose.msra.mxu0 0.0
    %679 = vmatprep.subr.mxu0 0.0
    %680 = vmatpush1.xpose.msra.mxu0 0.0
    %681 = vmatprep.subr.mxu0 0.0
    %682 = vmatpush1.xpose.msra.mxu0 0.0
    %683 = vmatprep.subr.mxu0 0.0
    %684 = vmatpush1.xpose.msra.mxu0 0.0
    %685 = vmatprep.subr.mxu0 0.0
    %686 = vmatpush1.xpose.msra.mxu0 0.0
    %687 = vmatprep.subr.mxu0 0.0
    %688 = vmatpush1.xpose.msra.mxu0 0.0
    %689 = vmatprep.subr.mxu0 0.0
    %690 = vmatpush1.xpose.msra.mxu0 0.0
    %691 = vmatprep.subr.mxu0 0.0
    %692 = vmatpush1.xpose.msra.mxu0 0.0
    %693 = vmatprep.subr.mxu0 0.0
    %694 = vmatpush1.xpose.msra.mxu0 0.0
    %695 = vmatprep.subr.mxu0 0.0
    %696 = vmatpush1.xpose.msra.mxu0 0.0
    %697 = vmatprep.subr.mxu0 0.0
    %698 = vmatpush1.xpose.msra.mxu0 0.0
    %699 = vmatprep.subr.mxu0 0.0
    %700 = vmatpush1.xpose.msra.mxu0 0.0
    %701 = vmatprep.subr.mxu0 0.0
    %702 = vmatpush1.xpose.msra.mxu0 0.0
    %703 = vmatprep.subr.mxu0 0.0
    %704 = vmatpush1.xpose.msra.mxu0 0.0
    %705 = vmatprep.subr.mxu0 0.0
    %706 = vmatpush1.xpose.msra.mxu0 0.0
    %707 = vmatprep.subr.mxu0 0.0
    %708 = vmatpush1.xpose.msra.mxu0 0.0
    %709 = vmatprep.subr.mxu0 0.0
    %710 = vmatpush1.xpose.msra.mxu0 0.0
    %711 = vmatprep.subr.mxu0 0.0
    %712 = vmatpush1.xpose.msra.mxu0 0.0
    %713 = vmatprep.subr.mxu0 0.0
    %714 = vmatpush1.xpose.msra.mxu0 0.0
    %715 = vmatprep.subr.mxu0 0.0
    %716 = vmatpush1.xpose.msra.mxu0 0.0
    %717 = vmatprep.subr.mxu0 0.0
    %718 = vmatpush1.xpose.msra.mxu0 0.0
    %719 = vmatprep.subr.mxu0 0.0
    %720 = vmatpush1.xpose.msra.mxu0 0.0
    %721 = vmatprep.subr.mxu0 0.0
    %722 = vmatpush1.xpose.msra.mxu0 0.0
    %723 = vmatprep.subr.mxu0 0.0
    %724 = vmatpush1.xpose.msra.mxu0 0.0
    %725 = vmatprep.subr.mxu0 0.0
    %726 = vmatpush1.xpose.msra.mxu0 0.0
    %727 = vmatprep.subr.mxu0 0.0
    %728 = vmatpush1.xpose.msra.mxu0 0.0
    %729 = vmatprep.subr.mxu0 0.0
    %730 = vmatpush1.xpose.msra.mxu0 0.0
    %731 = vmatprep.subr.mxu0 0.0
    %732 = vmatpush1.xpose.msra.mxu0 0.0
    %733 = vmatprep.mubr.f32.mxu0 0.0
    %734 = vmatmul.mubr.f32.gmra.mrb[0].mxu0 %v665
    %v735 = vpop.f32.mrb[0].mxu0
    %v736 = vadd.f32 %v439, %v735
    %v737 = vpop.f32.mrb[0].mxu0
    %738 = vdwg.mxu0
    %vm739 = vcmask 64512
    %v740 = vsel %vm739, %v514, -inf
    %741 = vmax.xlane.f32.xlu0 %v740
    %v742 = vpop.xlane.xlu0 %741
    %v743 = vsel %vm739, %v588, -inf
    %744 = vmax.xlane.f32.xlu0 %v743
    %v745 = vpop.xlane.xlu0 %744
    %v746 = vsel %vm739, %v662, -inf
    %747 = vmax.xlane.f32.xlu0 %v746
    %v748 = vpop.xlane.xlu0 %747
    %v749 = vsel %vm739, %v736, -inf
    %750 = vmax.xlane.f32.xlu0 %v749
    %v751 = vpop.xlane.xlu0 %750
    %v752 = vsub.f32 %v514, %v742
    %v753 = vsub.f32 %v588, %v745
    %v754 = vsub.f32 %v662, %v748
    %v755 = vsub.f32 %v736, %v751
    %v756 = vmul.f32 %v752, 1.442695
    %v757 = vpow.pop %v756
    %v758 = vmul.f32 %v753, 1.442695
    %v759 = vpow.pop %v758
    %v760 = vmul.f32 %v754, 1.442695
    %v761 = vpow.pop %v760
    %v762 = vmul.f32 %v755, 1.442695
    %v763 = vpow.pop %v762
    %v764 = vsel %vm739, %v757, 0.0
    %765 = vadd.xlane.f32.xlu0 %v764
    %v766 = vpop.xlane.xlu0 %765
    %v767 = vsel %vm739, %v759, 0.0
    %768 = vadd.xlane.f32.xlu0 %v767
    %v769 = vpop.xlane.xlu0 %768
    %v770 = vsel %vm739, %v761, 0.0
    %771 = vadd.xlane.f32.xlu0 %v770
    %v772 = vpop.xlane.xlu0 %771
    %v773 = vsel %vm739, %v763, 0.0
    %774 = vadd.xlane.f32.xlu0 %v773
    %v775 = vpop.xlane.xlu0 %774
    %v776 = vrcp.pop %v766
    %v777 = vrcp.pop %v769
    %v778 = vrcp.pop %v772
    %v779 = vrcp.pop %v775
    %v780 = vmul.f32 %v757, %v776
    %v781 = vmul.f32 %v759, %v777
    %v782 = vmul.f32 %v761, %v778
    %v783 = vmul.f32 %v763, %v779
    %v785 = vsel %vm739, %v780, 0
    %787 = vmatprep.subr.mxu0 0.0
    %788 = vmatpush1.msra.mxu0 %v410
    %789 = vmatprep.subr.mxu0 0.0
    %790 = vmatpush1.msra.mxu0 0.0
    %791 = vmatprep.subr.mxu0 0.0
    %792 = vmatpush1.msra.mxu0 0.0
    %793 = vmatprep.subr.mxu0 0.0
    %794 = vmatpush1.msra.mxu0 0.0
    %795 = vmatprep.subr.mxu0 0.0
    %796 = vmatpush1.msra.mxu0 0.0
    %797 = vmatprep.subr.mxu0 0.0
    %798 = vmatpush1.msra.mxu0 0.0
    %799 = vmatprep.subr.mxu0 0.0
    %800 = vmatpush1.msra.mxu0 0.0
    %801 = vmatprep.subr.mxu0 0.0
    %802 = vmatpush1.msra.mxu0 0.0
    %803 = vmatprep.subr.mxu0 0.0
    %804 = vmatpush1.msra.mxu0 0.0
    %805 = vmatprep.subr.mxu0 0.0
    %806 = vmatpush1.msra.mxu0 0.0
    %807 = vmatprep.subr.mxu0 0.0
    %808 = vmatpush1.msra.mxu0 0.0
    %809 = vmatprep.subr.mxu0 0.0
    %810 = vmatpush1.msra.mxu0 0.0
    %811 = vmatprep.subr.mxu0 0.0
    %812 = vmatpush1.msra.mxu0 0.0
    %813 = vmatprep.subr.mxu0 0.0
    %814 = vmatpush1.msra.mxu0 0.0
    %815 = vmatprep.subr.mxu0 0.0
    %816 = vmatpush1.msra.mxu0 0.0
    %817 = vmatprep.subr.mxu0 0.0
    %818 = vmatpush1.msra.mxu0 0.0
    %819 = vmatprep.subr.mxu0 0.0
    %820 = vmatpush1.msra.mxu0 0.0
    %821 = vmatprep.subr.mxu0 0.0
    %822 = vmatpush1.msra.mxu0 0.0
    %823 = vmatprep.subr.mxu0 0.0
    %824 = vmatpush1.msra.mxu0 0.0
    %825 = vmatprep.subr.mxu0 0.0
    %826 = vmatpush1.msra.mxu0 0.0
    %827 = vmatprep.subr.mxu0 0.0
    %828 = vmatpush1.msra.mxu0 0.0
    %829 = vmatprep.subr.mxu0 0.0
    %830 = vmatpush1.msra.mxu0 0.0
    %831 = vmatprep.subr.mxu0 0.0
    %832 = vmatpush1.msra.mxu0 0.0
    %833 = vmatprep.subr.mxu0 0.0
    %834 = vmatpush1.msra.mxu0 0.0
    %835 = vmatprep.subr.mxu0 0.0
    %836 = vmatpush1.msra.mxu0 0.0
    %837 = vmatprep.subr.mxu0 0.0
    %838 = vmatpush1.msra.mxu0 0.0
    %839 = vmatprep.subr.mxu0 0.0
    %840 = vmatpush1.msra.mxu0 0.0
    %841 = vmatprep.subr.mxu0 0.0
    %842 = vmatpush1.msra.mxu0 0.0
    %843 = vmatprep.subr.mxu0 0.0
    %844 = vmatpush1.msra.mxu0 0.0
    %845 = vmatprep.subr.mxu0 0.0
    %846 = vmatpush1.msra.mxu0 0.0
    %847 = vmatprep.subr.mxu0 0.0
    %848 = vmatpush1.msra.mxu0 0.0
    %849 = vmatprep.subr.mxu0 0.0
    %850 = vmatpush1.msra.mxu0 0.0
    %851 = vmatprep.mubr.f32.mxu0 0.0
    %852 = vmatmul.mubr.f32.gmra.mrb[0].mxu0 %v785
    %v853 = vpop.f32.mrb[0].mxu0
    %v854 = vadd.f32 0.0, %v853
    %v855 = vpop.f32.mrb[0].mxu0
    %856 = vdwg.mxu0
    %v858 = vsel %vm739, %v781, 0
    %860 = vmatprep.subr.mxu0 0.0
    %861 = vmatpush1.msra.mxu0 %v411
    %862 = vmatprep.subr.mxu0 0.0
    %863 = vmatpush1.msra.mxu0 0.0
    %864 = vmatprep.subr.mxu0 0.0
    %865 = vmatpush1.msra.mxu0 0.0
    %866 = vmatprep.subr.mxu0 0.0
    %867 = vmatpush1.msra.mxu0 0.0
    %868 = vmatprep.subr.mxu0 0.0
    %869 = vmatpush1.msra.mxu0 0.0
    %870 = vmatprep.subr.mxu0 0.0
    %871 = vmatpush1.msra.mxu0 0.0
    %872 = vmatprep.subr.mxu0 0.0
    %873 = vmatpush1.msra.mxu0 0.0
    %874 = vmatprep.subr.mxu0 0.0
    %875 = vmatpush1.msra.mxu0 0.0
    %876 = vmatprep.subr.mxu0 0.0
    %877 = vmatpush1.msra.mxu0 0.0
    %878 = vmatprep.subr.mxu0 0.0
    %879 = vmatpush1.msra.mxu0 0.0
    %880 = vmatprep.subr.mxu0 0.0
    %881 = vmatpush1.msra.mxu0 0.0
    %882 = vmatprep.subr.mxu0 0.0
    %883 = vmatpush1.msra.mxu0 0.0
    %884 = vmatprep.subr.mxu0 0.0
    %885 = vmatpush1.msra.mxu0 0.0
    %886 = vmatprep.subr.mxu0 0.0
    %887 = vmatpush1.msra.mxu0 0.0
    %888 = vmatprep.subr.mxu0 0.0
    %889 = vmatpush1.msra.mxu0 0.0
    %890 = vmatprep.subr.mxu0 0.0
    %891 = vmatpush1.msra.mxu0 0.0
    %892 = vmatprep.subr.mxu0 0.0
    %893 = vmatpush1.msra.mxu0 0.0
    %894 = vmatprep.subr.mxu0 0.0
    %895 = vmatpush1.msra.mxu0 0.0
    %896 = vmatprep.subr.mxu0 0.0
    %897 = vmatpush1.msra.mxu0 0.0
    %898 = vmatprep.subr.mxu0 0.0
    %899 = vmatpush1.msra.mxu0 0.0
    %900 = vmatprep.subr.mxu0 0.0
    %901 = vmatpush1.msra.mxu0 0.0
    %902 = vmatprep.subr.mxu0 0.0
    %903 = vmatpush1.msra.mxu0 0.0
    %904 = vmatprep.subr.mxu0 0.0
    %905 = vmatpush1.msra.mxu0 0.0
    %906 = vmatprep.subr.mxu0 0.0
    %907 = vmatpush1.msra.mxu0 0.0
    %908 = vmatprep.subr.mxu0 0.0
    %909 = vmatpush1.msra.mxu0 0.0
    %910 = vmatprep.subr.mxu0 0.0
    %911 = vmatpush1.msra.mxu0 0.0
    %912 = vmatprep.subr.mxu0 0.0
    %913 = vmatpush1.msra.mxu0 0.0
    %914 = vmatprep.subr.mxu0 0.0
    %915 = vmatpush1.msra.mxu0 0.0
    %916 = vmatprep.subr.mxu0 0.0
    %917 = vmatpush1.msra.mxu0 0.0
    %918 = vmatprep.subr.mxu0 0.0
    %919 = vmatpush1.msra.mxu0 0.0
    %920 = vmatprep.subr.mxu0 0.0
    %921 = vmatpush1.msra.mxu0 0.0
    %922 = vmatprep.subr.mxu0 0.0
    %923 = vmatpush1.msra.mxu0 0.0
    %924 = vmatprep.mubr.f32.mxu0 0.0
    %925 = vmatmul.mubr.f32.gmra.mrb[0].mxu0 %v858
    %v926 = vpop.f32.mrb[0].mxu0
    %v927 = vadd.f32 0.0, %v926
    %v928 = vpop.f32.mrb[0].mxu0
    %929 = vdwg.mxu0
    %v931 = vsel %vm739, %v782, 0
    %933 = vmatprep.subr.mxu0 0.0
    %934 = vmatpush1.msra.mxu0 %v427
    %935 = vmatprep.subr.mxu0 0.0
    %936 = vmatpush1.msra.mxu0 0.0
    %937 = vmatprep.subr.mxu0 0.0
    %938 = vmatpush1.msra.mxu0 0.0
    %939 = vmatprep.subr.mxu0 0.0
    %940 = vmatpush1.msra.mxu0 0.0
    %941 = vmatprep.subr.mxu0 0.0
    %942 = vmatpush1.msra.mxu0 0.0
    %943 = vmatprep.subr.mxu0 0.0
    %944 = vmatpush1.msra.mxu0 0.0
    %945 = vmatprep.subr.mxu0 0.0
    %946 = vmatpush1.msra.mxu0 0.0
    %947 = vmatprep.subr.mxu0 0.0
    %948 = vmatpush1.msra.mxu0 0.0
    %949 = vmatprep.subr.mxu0 0.0
    %950 = vmatpush1.msra.mxu0 0.0
    %951 = vmatprep.subr.mxu0 0.0
    %952 = vmatpush1.msra.mxu0 0.0
    %953 = vmatprep.subr.mxu0 0.0
    %954 = vmatpush1.msra.mxu0 0.0
    %955 = vmatprep.subr.mxu0 0.0
    %956 = vmatpush1.msra.mxu0 0.0
    %957 = vmatprep.subr.mxu0 0.0
    %958 = vmatpush1.msra.mxu0 0.0
    %959 = vmatprep.subr.mxu0 0.0
    %960 = vmatpush1.msra.mxu0 0.0
    %961 = vmatprep.subr.mxu0 0.0
    %962 = vmatpush1.msra.mxu0 0.0
    %963 = vmatprep.subr.mxu0 0.0
    %964 = vmatpush1.msra.mxu0 0.0
    %965 = vmatprep.subr.mxu0 0.0
    %966 = vmatpush1.msra.mxu0 0.0
    %967 = vmatprep.subr.mxu0 0.0
    %968 = vmatpush1.msra.mxu0 0.0
    %969 = vmatprep.subr.mxu0 0.0
    %970 = vmatpush1.msra.mxu0 0.0
    %971 = vmatprep.subr.mxu0 0.0
    %972 = vmatpush1.msra.mxu0 0.0
    %973 = vmatprep.subr.mxu0 0.0
    %974 = vmatpush1.msra.mxu0 0.0
    %975 = vmatprep.subr.mxu0 0.0
    %976 = vmatpush1.msra.mxu0 0.0
    %977 = vmatprep.subr.mxu0 0.0
    %978 = vmatpush1.msra.mxu0 0.0
    %979 = vmatprep.subr.mxu0 0.0
    %980 = vmatpush1.msra.mxu0 0.0
    %981 = vmatprep.subr.mxu0 0.0
    %982 = vmatpush1.msra.mxu0 0.0
    %983 = vmatprep.subr.mxu0 0.0
    %984 = vmatpush1.msra.mxu0 0.0
    %985 = vmatprep.subr.mxu0 0.0
    %986 = vmatpush1.msra.mxu0 0.0
    %987 = vmatprep.subr.mxu0 0.0
    %988 = vmatpush1.msra.mxu0 0.0
    %989 = vmatprep.subr.mxu0 0.0
    %990 = vmatpush1.msra.mxu0 0.0
    %991 = vmatprep.subr.mxu0 0.0
    %992 = vmatpush1.msra.mxu0 0.0
    %993 = vmatprep.subr.mxu0 0.0
    %994 = vmatpush1.msra.mxu0 0.0
    %995 = vmatprep.subr.mxu0 0.0
    %996 = vmatpush1.msra.mxu0 0.0
    %997 = vmatprep.mubr.f32.mxu0 0.0
    %998 = vmatmul.mubr.f32.gmra.mrb[0].mxu0 %v931
    %v999 = vpop.f32.mrb[0].mxu0
    %v1000 = vadd.f32 0.0, %v999
    %v1001 = vpop.f32.mrb[0].mxu0
    %1002 = vdwg.mxu0
    %v1004 = vsel %vm739, %v783, 0
    %1006 = vmatprep.subr.mxu0 0.0
    %1007 = vmatpush1.msra.mxu0 %v429
    %1008 = vmatprep.subr.mxu0 0.0
    %1009 = vmatpush1.msra.mxu0 0.0
    %1010 = vmatprep.subr.mxu0 0.0
    %1011 = vmatpush1.msra.mxu0 0.0
    %1012 = vmatprep.subr.mxu0 0.0
    %1013 = vmatpush1.msra.mxu0 0.0
    %1014 = vmatprep.subr.mxu0 0.0
    %1015 = vmatpush1.msra.mxu0 0.0
    %1016 = vmatprep.subr.mxu0 0.0
    %1017 = vmatpush1.msra.mxu0 0.0
    %1018 = vmatprep.subr.mxu0 0.0
    %1019 = vmatpush1.msra.mxu0 0.0
    %1020 = vmatprep.subr.mxu0 0.0
    %1021 = vmatpush1.msra.mxu0 0.0
    %1022 = vmatprep.subr.mxu0 0.0
    %1023 = vmatpush1.msra.mxu0 0.0
    %1024 = vmatprep.subr.mxu0 0.0
    %1025 = vmatpush1.msra.mxu0 0.0
    %1026 = vmatprep.subr.mxu0 0.0
    %1027 = vmatpush1.msra.mxu0 0.0
    %1028 = vmatprep.subr.mxu0 0.0
    %1029 = vmatpush1.msra.mxu0 0.0
    %1030 = vmatprep.subr.mxu0 0.0
    %1031 = vmatpush1.msra.mxu0 0.0
    %1032 = vmatprep.subr.mxu0 0.0
    %1033 = vmatpush1.msra.mxu0 0.0
    %1034 = vmatprep.subr.mxu0 0.0
    %1035 = vmatpush1.msra.mxu0 0.0
    %1036 = vmatprep.subr.mxu0 0.0
    %1037 = vmatpush1.msra.mxu0 0.0
    %1038 = vmatprep.subr.mxu0 0.0
    %1039 = vmatpush1.msra.mxu0 0.0
    %1040 = vmatprep.subr.mxu0 0.0
    %1041 = vmatpush1.msra.mxu0 0.0
    %1042 = vmatprep.subr.mxu0 0.0
    %1043 = vmatpush1.msra.mxu0 0.0
    %1044 = vmatprep.subr.mxu0 0.0
    %1045 = vmatpush1.msra.mxu0 0.0
    %1046 = vmatprep.subr.mxu0 0.0
    %1047 = vmatpush1.msra.mxu0 0.0
    %1048 = vmatprep.subr.mxu0 0.0
    %1049 = vmatpush1.msra.mxu0 0.0
    %1050 = vmatprep.subr.mxu0 0.0
    %1051 = vmatpush1.msra.mxu0 0.0
    %1052 = vmatprep.subr.mxu0 0.0
    %1053 = vmatpush1.msra.mxu0 0.0
    %1054 = vmatprep.subr.mxu0 0.0
    %1055 = vmatpush1.msra.mxu0 0.0
    %1056 = vmatprep.subr.mxu0 0.0
    %1057 = vmatpush1.msra.mxu0 0.0
    %1058 = vmatprep.subr.mxu0 0.0
    %1059 = vmatpush1.msra.mxu0 0.0
    %1060 = vmatprep.subr.mxu0 0.0
    %1061 = vmatpush1.msra.mxu0 0.0
    %1062 = vmatprep.subr.mxu0 0.0
    %1063 = vmatpush1.msra.mxu0 0.0
    %1064 = vmatprep.subr.mxu0 0.0
    %1065 = vmatpush1.msra.mxu0 0.0
    %1066 = vmatprep.subr.mxu0 0.0
    %1067 = vmatpush1.msra.mxu0 0.0
    %1068 = vmatprep.subr.mxu0 0.0
    %1069 = vmatpush1.msra.mxu0 0.0
    %1070 = vmatprep.mubr.f32.mxu0 0.0
    %1071 = vmatmul.mubr.f32.gmra.mrb[0].mxu0 %v1004
    %v1072 = vpop.f32.mrb[0].mxu0
    %v1073 = vadd.f32 0.0, %v1072
    %v1074 = vpop.f32.mrb[0].mxu0
    %1075 = vdwg.mxu0
    %1078 = vrot.lane.b32.xlu0 %v1000, 64
    %v1079 = vpop.permute.xlu0 %1078
    %1080 = vrot.lane.b32.xlu0 %v1073, 64
    %v1081 = vpop.permute.xlu0 %1080
    %v1084 = vsel %vm442, %v854, %v1079
    %v1085 = vsel %vm442, %v927, %v1081
    %v1086 = vpack.c.bf16 %v1085, %v1084
    %v1087 = vld [vmem:[%s4] sm:$0xf]
    %v1088 = vld [vmem:[%s4 + $0x4] sm:$0xf]
    %v1089 = vld [vmem:[%s4 + $0x8] sm:$0xf]
    %v1090 = vld [vmem:[%s4 + $0xc] sm:$0xf]
    %v1091 = vld [vmem:[%s4 + $0x10] sm:$0xf]
    %v1092 = vld [vmem:[%s4 + $0x14] sm:$0xf]
    %v1093 = vld [vmem:[%s4 + $0x18] sm:$0xf]
    %v1094 = vld [vmem:[%s4 + $0x1c] sm:$0xf]
    %v1095 = vld [vmem:[%s4 + $0x20] sm:$0xf]
    %v1096 = vld [vmem:[%s4 + $0x24] sm:$0xf]
    %v1097 = vld [vmem:[%s4 + $0x28] sm:$0xf]
    %v1098 = vld [vmem:[%s4 + $0x2c] sm:$0xf]
    %v1099 = vld [vmem:[%s4 + $0x30] sm:$0xf]
    %v1100 = vld [vmem:[%s4 + $0x34] sm:$0xf]
    %v1101 = vld [vmem:[%s4 + $0x38] sm:$0xf]
    %v1102 = vld [vmem:[%s4 + $0x3c] sm:$0xf]
    %v1103 = vld [vmem:[%s8 + $0x3] sm:$0x1]
    %v1104 = vlaneseq
    %v1105 = vshrl.u32 %v1104, 7
    %v1106 = vsub.s32 0, %v1105
    %v1107 = vrot.slane %v1103, %v1106
    %v1124 = vunpack.c.l.b16 %v1087
    %v1125 = vunpack.c.l.b16 %v1088
    %v1126 = vunpack.c.l.b16 %v1089
    %v1127 = vunpack.c.l.b16 %v1090
    %v1128 = vunpack.c.l.b16 %v1091
    %v1129 = vunpack.c.l.b16 %v1092
    %v1130 = vunpack.c.l.b16 %v1093
    %v1131 = vunpack.c.l.b16 %v1094
    %v1132 = vunpack.c.l.b16 %v1095
    %v1133 = vunpack.c.l.b16 %v1096
    %v1134 = vunpack.c.l.b16 %v1097
    %v1135 = vunpack.c.l.b16 %v1098
    %v1136 = vunpack.c.l.b16 %v1099
    %v1137 = vunpack.c.l.b16 %v1100
    %v1138 = vunpack.c.l.b16 %v1101
    %v1139 = vunpack.c.l.b16 %v1102
    %v1140 = vpack.c.b16 %v1125, %v1124
    %v1141 = vpack.c.b16 %v1127, %v1126
    %v1142 = vpack.c.b16 %v1129, %v1128
    %v1143 = vpack.c.b16 %v1131, %v1130
    %v1144 = vpack.c.b16 %v1133, %v1132
    %v1145 = vpack.c.b16 %v1135, %v1134
    %v1146 = vpack.c.b16 %v1137, %v1136
    %v1147 = vpack.c.b16 %v1139, %v1138
    %1156 = vmatprep.subr.bf16.mxu0 0
    %1157 = vmatpush1.bf16.msra.mxu0 %v1140
    %1158 = vmatprep.subr.bf16.mxu0 0
    %1159 = vmatpush1.bf16.msra.mxu0 %v1141
    %1160 = vmatprep.subr.bf16.mxu0 0
    %1161 = vmatpush1.bf16.msra.mxu0 %v1142
    %1162 = vmatprep.subr.bf16.mxu0 0
    %1163 = vmatpush1.bf16.msra.mxu0 %v1143
    %1164 = vmatprep.subr.bf16.mxu0 0
    %1165 = vmatpush1.bf16.msra.mxu0 %v1144
    %1166 = vmatprep.subr.bf16.mxu0 0
    %1167 = vmatpush1.bf16.msra.mxu0 %v1145
    %1168 = vmatprep.subr.bf16.mxu0 0
    %1169 = vmatpush1.bf16.msra.mxu0 %v1146
    %1170 = vmatprep.subr.bf16.mxu0 0
    %1171 = vmatpush1.bf16.msra.mxu0 %v1147
    %1172 = vmatprep.subr.bf16.mxu0 0
    %1173 = vmatpush1.bf16.msra.mxu0 0
    %1174 = vmatprep.subr.bf16.mxu0 0
    %1175 = vmatpush1.bf16.msra.mxu0 0
    %1176 = vmatprep.subr.bf16.mxu0 0
    %1177 = vmatpush1.bf16.msra.mxu0 0
    %1178 = vmatprep.subr.bf16.mxu0 0
    %1179 = vmatpush1.bf16.msra.mxu0 0
    %1180 = vmatprep.subr.bf16.mxu0 0
    %1181 = vmatpush1.bf16.msra.mxu0 0
    %1182 = vmatprep.subr.bf16.mxu0 0
    %1183 = vmatpush1.bf16.msra.mxu0 0
    %1184 = vmatprep.subr.bf16.mxu0 0
    %1185 = vmatpush1.bf16.msra.mxu0 0
    %1186 = vmatprep.subr.bf16.mxu0 0
    %1187 = vmatpush1.bf16.msra.mxu0 0
    %1188 = vmatprep.mubr.bf16.mxu0 0
    %1189 = vmatmul.mubr.bf16.gmra.mrb[0].mxu0 %v1086
    %v1190 = vpop.f32.mrb[0].mxu0
    %v1191 = vadd.f32 %v1107, %v1190
    %v1192 = vpop.f32.mrb[0].mxu0
    %v1193 = vpop.f32.mrb[0].mxu0
    %v1194 = vadd.f32 %v1107, %v1193
    %v1195 = vpop.f32.mrb[0].mxu0
    %1196 = vdwg.mxu0
    %v1197 = vadd.f32 %v1191, %v120
    %v1198 = vadd.f32 %v1194, %v121
    %v1199 = vld [vmem:[%s8 + $0x5] sm:$0x1]
    %v1200 = vld [vmem:[%s8 + $0x6] sm:$0x1]
    %1201 = vadd.xlane.f32.xlu0 %v1197
    %v1202 = vpop.xlane.xlu0 %1201
    %1203 = vadd.xlane.f32.xlu0 %v1198
    %v1204 = vpop.xlane.xlu0 %1203
    %v1205 = vmul.f32 %v1197, %v1197
    %v1206 = vmul.f32 %v1198, %v1198
    %1207 = vadd.xlane.f32.xlu0 %v1205
    %v1208 = vpop.xlane.xlu0 %1207
    %1209 = vadd.xlane.f32.xlu0 %v1206
    %v1210 = vpop.xlane.xlu0 %1209
    %v1211 = vmul.f32 %v1202, 0.0078125
    %v1212 = vmul.f32 %v1204, 0.0078125
    %v1213 = vmul.f32 %v1208, 0.0078125
    %v1214 = vmul.f32 %v1210, 0.0078125
    %v1215 = vmul.f32 %v1211, %v1211
    %v1216 = vmul.f32 %v1212, %v1212
    %v1217 = vsub.f32 %v1213, %v1215
    %v1218 = vsub.f32 %v1214, %v1216
    %v1219 = vsub.f32 %v1197, %v1211
    %v1220 = vsub.f32 %v1198, %v1212
    %v1221 = vadd.f32 %v1217, 1e-12
    %v1222 = vadd.f32 %v1218, 1e-12
    %v1223 = vrsqrt.pop %v1221
    %v1224 = vrsqrt.pop %v1222
    %v1225 = vmul.f32 %v1219, %v1223
    %v1226 = vmul.f32 %v1220, %v1224
    %v1227 = vlaneseq
    %v1228 = vshrl.u32 %v1227, 7
    %v1229 = vsub.s32 0, %v1228
    %v1230 = vrot.slane %v1199, %v1229
    %v1231 = vmul.f32 %v1225, %v1230
    %v1232 = vmul.f32 %v1226, %v1230
    %v1233 = vlaneseq
    %v1234 = vshrl.u32 %v1233, 7
    %v1235 = vsub.s32 0, %v1234
    %v1236 = vrot.slane %v1200, %v1235
    %v1237 = vadd.f32 %v1231, %v1236
    %v1238 = vadd.f32 %v1232, %v1236
    %v1239 = vpack.c.bf16 %v1238, %v1237
    %v1240 = vld [vmem:[#allocation4] sm:$0xff]
    %v1241 = vld [vmem:[#allocation4 + $0x8] sm:$0xff]
    %v1242 = vld [vmem:[#allocation4 + $0x10] sm:$0xff]
    %v1243 = vld [vmem:[#allocation4 + $0x18] sm:$0xff]
    %v1244 = vld [vmem:[#allocation4 + $0x20] sm:$0xff]
    %v1245 = vld [vmem:[#allocation4 + $0x28] sm:$0xff]
    %v1246 = vld [vmem:[#allocation4 + $0x30] sm:$0xff]
    %v1247 = vld [vmem:[#allocation4 + $0x38] sm:$0xff]
    %v1248 = vld [vmem:[#allocation4 + $0x40] sm:$0xff]
    %v1249 = vld [vmem:[#allocation4 + $0x48] sm:$0xff]
    %v1250 = vld [vmem:[#allocation4 + $0x50] sm:$0xff]
    %v1251 = vld [vmem:[#allocation4 + $0x58] sm:$0xff]
    %v1252 = vld [vmem:[#allocation4 + $0x60] sm:$0xff]
    %v1253 = vld [vmem:[#allocation4 + $0x68] sm:$0xff]
    %v1254 = vld [vmem:[#allocation4 + $0x70] sm:$0xff]
    %v1255 = vld [vmem:[#allocation4 + $0x78] sm:$0xff]
    %v1256 = vld [vmem:[#allocation4 + $0x80] sm:$0xff]
    %v1257 = vld [vmem:[#allocation4 + $0x88] sm:$0xff]
    %v1258 = vld [vmem:[#allocation4 + $0x90] sm:$0xff]
    %v1259 = vld [vmem:[#allocation4 + $0x98] sm:$0xff]
    %v1260 = vld [vmem:[#allocation4 + $0xa0] sm:$0xff]
    %v1261 = vld [vmem:[#allocation4 + $0xa8] sm:$0xff]
    %v1262 = vld [vmem:[#allocation4 + $0xb0] sm:$0xff]
    %v1263 = vld [vmem:[#allocation4 + $0xb8] sm:$0xff]
    %v1264 = vld [vmem:[#allocation4 + $0xc0] sm:$0xff]
    %v1265 = vld [vmem:[#allocation4 + $0xc8] sm:$0xff]
    %v1266 = vld [vmem:[#allocation4 + $0xd0] sm:$0xff]
    %v1267 = vld [vmem:[#allocation4 + $0xd8] sm:$0xff]
    %v1268 = vld [vmem:[#allocation4 + $0xe0] sm:$0xff]
    %v1269 = vld [vmem:[#allocation4 + $0xe8] sm:$0xff]
    %v1270 = vld [vmem:[#allocation4 + $0xf0] sm:$0xff]
    %v1271 = vld [vmem:[#allocation4 + $0xf8] sm:$0xff]
    %v1272 = vld [vmem:[%s6] sm:$0xf]
    %v1274 = vlaneseq
    %v1275 = vshrl.u32 %v1274, 7
    %v1276 = vsub.s32 0, %v1275
    %v1277 = vrot.slane %v1272, %v1276
    %v1278 = vlaneseq
    %v1279 = vshrl.u32 %v1278, 7
    %v1280 = vsub.s32 1, %v1279
    %v1281 = vrot.slane %v1272, %v1280
    %v1282 = vlaneseq
    %v1283 = vshrl.u32 %v1282, 7
    %v1284 = vsub.s32 2, %v1283
    %v1285 = vrot.slane %v1272, %v1284
    %v1286 = vlaneseq
    %v1287 = vshrl.u32 %v1286, 7
    %v1288 = vsub.s32 3, %v1287
    %v1289 = vrot.slane %v1272, %v1288
    %v1326 = vunpack.c.l.b16 %v1240
    %v1327 = vunpack.c.h.b16 %v1240
    %v1328 = vunpack.c.l.b16 %v1241
    %v1329 = vunpack.c.h.b16 %v1241
    %v1330 = vunpack.c.l.b16 %v1242
    %v1331 = vunpack.c.h.b16 %v1242
    %v1332 = vunpack.c.l.b16 %v1243
    %v1333 = vunpack.c.h.b16 %v1243
    %v1334 = vunpack.c.l.b16 %v1244
    %v1335 = vunpack.c.h.b16 %v1244
    %v1336 = vunpack.c.l.b16 %v1245
    %v1337 = vunpack.c.h.b16 %v1245
    %v1338 = vunpack.c.l.b16 %v1246
    %v1339 = vunpack.c.h.b16 %v1246
    %v1340 = vunpack.c.l.b16 %v1247
    %v1341 = vunpack.c.h.b16 %v1247
    %v1342 = vunpack.c.l.b16 %v1248
    %v1343 = vunpack.c.h.b16 %v1248
    %v1344 = vunpack.c.l.b16 %v1249
    %v1345 = vunpack.c.h.b16 %v1249
    %v1346 = vunpack.c.l.b16 %v1250
    %v1347 = vunpack.c.h.b16 %v1250
    %v1348 = vunpack.c.l.b16 %v1251
    %v1349 = vunpack.c.h.b16 %v1251
    %v1350 = vunpack.c.l.b16 %v1252
    %v1351 = vunpack.c.h.b16 %v1252
    %v1352 = vunpack.c.l.b16 %v1253
    %v1353 = vunpack.c.h.b16 %v1253
    %v1354 = vunpack.c.l.b16 %v1254
    %v1355 = vunpack.c.h.b16 %v1254
    %v1356 = vunpack.c.l.b16 %v1255
    %v1357 = vunpack.c.h.b16 %v1255
    %v1358 = vunpack.c.l.b16 %v1256
    %v1359 = vunpack.c.h.b16 %v1256
    %v1360 = vunpack.c.l.b16 %v1257
    %v1361 = vunpack.c.h.b16 %v1257
    %v1362 = vunpack.c.l.b16 %v1258
    %v1363 = vunpack.c.h.b16 %v1258
    %v1364 = vunpack.c.l.b16 %v1259
    %v1365 = vunpack.c.h.b16 %v1259
    %v1366 = vunpack.c.l.b16 %v1260
    %v1367 = vunpack.c.h.b16 %v1260
    %v1368 = vunpack.c.l.b16 %v1261
    %v1369 = vunpack.c.h.b16 %v1261
    %v1370 = vunpack.c.l.b16 %v1262
    %v1371 = vunpack.c.h.b16 %v1262
    %v1372 = vunpack.c.l.b16 %v1263
    %v1373 = vunpack.c.h.b16 %v1263
    %v1374 = vunpack.c.l.b16 %v1264
    %v1375 = vunpack.c.h.b16 %v1264
    %v1376 = vunpack.c.l.b16 %v1265
    %v1377 = vunpack.c.h.b16 %v1265
    %v1378 = vunpack.c.l.b16 %v1266
    %v1379 = vunpack.c.h.b16 %v1266
    %v1380 = vunpack.c.l.b16 %v1267
    %v1381 = vunpack.c.h.b16 %v1267
    %v1382 = vunpack.c.l.b16 %v1268
    %v1383 = vunpack.c.h.b16 %v1268
    %v1384 = vunpack.c.l.b16 %v1269
    %v1385 = vunpack.c.h.b16 %v1269
    %v1386 = vunpack.c.l.b16 %v1270
    %v1387 = vunpack.c.h.b16 %v1270
    %v1388 = vunpack.c.l.b16 %v1271
    %v1389 = vunpack.c.h.b16 %v1271
    %v1390 = vpack.c.b16 %v1330, %v1326
    %v1391 = vpack.c.b16 %v1331, %v1327
    %v1392 = vpack.c.b16 %v1332, %v1328
    %v1393 = vpack.c.b16 %v1333, %v1329
    %v1394 = vpack.c.b16 %v1338, %v1334
    %v1395 = vpack.c.b16 %v1339, %v1335
    %v1396 = vpack.c.b16 %v1340, %v1336
    %v1397 = vpack.c.b16 %v1341, %v1337
    %v1398 = vpack.c.b16 %v1346, %v1342
    %v1399 = vpack.c.b16 %v1347, %v1343
    %v1400 = vpack.c.b16 %v1348, %v1344
    %v1401 = vpack.c.b16 %v1349, %v1345
    %v1402 = vpack.c.b16 %v1354, %v1350
    %v1403 = vpack.c.b16 %v1355, %v1351
    %v1404 = vpack.c.b16 %v1356, %v1352
    %v1405 = vpack.c.b16 %v1357, %v1353
    %v1406 = vpack.c.b16 %v1362, %v1358
    %v1407 = vpack.c.b16 %v1363, %v1359
    %v1408 = vpack.c.b16 %v1364, %v1360
    %v1409 = vpack.c.b16 %v1365, %v1361
    %v1410 = vpack.c.b16 %v1370, %v1366
    %v1411 = vpack.c.b16 %v1371, %v1367
    %v1412 = vpack.c.b16 %v1372, %v1368
    %v1413 = vpack.c.b16 %v1373, %v1369
    %v1414 = vpack.c.b16 %v1378, %v1374
    %v1415 = vpack.c.b16 %v1379, %v1375
    %v1416 = vpack.c.b16 %v1380, %v1376
    %v1417 = vpack.c.b16 %v1381, %v1377
    %v1418 = vpack.c.b16 %v1386, %v1382
    %v1419 = vpack.c.b16 %v1387, %v1383
    %v1420 = vpack.c.b16 %v1388, %v1384
    %v1421 = vpack.c.b16 %v1389, %v1385
    %1454 = vmatprep.subr.bf16.mxu0 %v1391
    %1455 = vmatpush1.bf16.msra.mxu0 %v1390
    %1456 = vmatprep.subr.bf16.mxu0 %v1395
    %1457 = vmatpush1.bf16.msra.mxu0 %v1394
    %1458 = vmatprep.subr.bf16.mxu0 %v1399
    %1459 = vmatpush1.bf16.msra.mxu0 %v1398
    %1460 = vmatprep.subr.bf16.mxu0 %v1403
    %1461 = vmatpush1.bf16.msra.mxu0 %v1402
    %1462 = vmatprep.subr.bf16.mxu0 %v1407
    %1463 = vmatpush1.bf16.msra.mxu0 %v1406
    %1464 = vmatprep.subr.bf16.mxu0 %v1411
    %1465 = vmatpush1.bf16.msra.mxu0 %v1410
    %1466 = vmatprep.subr.bf16.mxu0 %v1415
    %1467 = vmatpush1.bf16.msra.mxu0 %v1414
    %1468 = vmatprep.subr.bf16.mxu0 %v1419
    %1469 = vmatpush1.bf16.msra.mxu0 %v1418
    %1470 = vmatprep.subr.bf16.mxu0 0
    %1471 = vmatpush1.bf16.msra.mxu0 0
    %1472 = vmatprep.subr.bf16.mxu0 0
    %1473 = vmatpush1.bf16.msra.mxu0 0
    %1474 = vmatprep.subr.bf16.mxu0 0
    %1475 = vmatpush1.bf16.msra.mxu0 0
    %1476 = vmatprep.subr.bf16.mxu0 0
    %1477 = vmatpush1.bf16.msra.mxu0 0
    %1478 = vmatprep.subr.bf16.mxu0 0
    %1479 = vmatpush1.bf16.msra.mxu0 0
    %1480 = vmatprep.subr.bf16.mxu0 0
    %1481 = vmatpush1.bf16.msra.mxu0 0
    %1482 = vmatprep.subr.bf16.mxu0 0
    %1483 = vmatpush1.bf16.msra.mxu0 0
    %1484 = vmatprep.subr.bf16.mxu0 0
    %1485 = vmatpush1.bf16.msra.mxu0 0
    %1486 = vmatprep.mubr.bf16.mxu0 0
    %1487 = vmatmul.mubr.bf16.gmra.mrb[0].mxu0 %v1239
    %v1488 = vpop.f32.mrb[0].mxu0
    %v1489 = vadd.f32 %v1277, %v1488
    %v1490 = vpop.f32.mrb[0].mxu0
    %v1491 = vadd.f32 %v1281, %v1490
    %v1492 = vpop.f32.mrb[0].mxu0
    %v1493 = vadd.f32 %v1277, %v1492
    %v1494 = vpop.f32.mrb[0].mxu0
    %v1495 = vadd.f32 %v1281, %v1494
    %1496 = vdwg.mxu0
    %1497 = vmatprep.subr.bf16.mxu0 %v1393
    %1498 = vmatpush1.bf16.msra.mxu0 %v1392
    %1499 = vmatprep.subr.bf16.mxu0 %v1397
    %1500 = vmatpush1.bf16.msra.mxu0 %v1396
    %1501 = vmatprep.subr.bf16.mxu0 %v1401
    %1502 = vmatpush1.bf16.msra.mxu0 %v1400
    %1503 = vmatprep.subr.bf16.mxu0 %v1405
    %1504 = vmatpush1.bf16.msra.mxu0 %v1404
    %1505 = vmatprep.subr.bf16.mxu0 %v1409
    %1506 = vmatpush1.bf16.msra.mxu0 %v1408
    %1507 = vmatprep.subr.bf16.mxu0 %v1413
    %1508 = vmatpush1.bf16.msra.mxu0 %v1412
    %1509 = vmatprep.subr.bf16.mxu0 %v1417
    %1510 = vmatpush1.bf16.msra.mxu0 %v1416
    %1511 = vmatprep.subr.bf16.mxu0 %v1421
    %1512 = vmatpush1.bf16.msra.mxu0 %v1420
    %1513 = vmatprep.subr.bf16.mxu0 0
    %1514 = vmatpush1.bf16.msra.mxu0 0
    %1515 = vmatprep.subr.bf16.mxu0 0
    %1516 = vmatpush1.bf16.msra.mxu0 0
    %1517 = vmatprep.subr.bf16.mxu0 0
    %1518 = vmatpush1.bf16.msra.mxu0 0
    %1519 = vmatprep.subr.bf16.mxu0 0
    %1520 = vmatpush1.bf16.msra.mxu0 0
    %1521 = vmatprep.subr.bf16.mxu0 0
    %1522 = vmatpush1.bf16.msra.mxu0 0
    %1523 = vmatprep.subr.bf16.mxu0 0
    %1524 = vmatpush1.bf16.msra.mxu0 0
    %1525 = vmatprep.subr.bf16.mxu0 0
    %1526 = vmatpush1.bf16.msra.mxu0 0
    %1527 = vmatprep.subr.bf16.mxu0 0
    %1528 = vmatpush1.bf16.msra.mxu0 0
    %1529 = vmatprep.mubr.bf16.mxu0 0
    %1530 = vmatmul.mubr.bf16.gmra.mrb[0].mxu0 %v1239
    %v1531 = vpop.f32.mrb[0].mxu0
    %v1532 = vadd.f32 %v1285, %v1531
    %v1533 = vpop.f32.mrb[0].mxu0
    %v1534 = vadd.f32 %v1289, %v1533
    %v1535 = vpop.f32.mrb[0].mxu0
    %v1536 = vadd.f32 %v1285, %v1535
    %v1537 = vpop.f32.mrb[0].mxu0
    %v1538 = vadd.f32 %v1289, %v1537
    %1539 = vdwg.mxu0
    %v1540 = vmul.f32 %v1489, %v1489
    %v1541 = vmul.f32 %v1491, %v1491
    %v1542 = vmul.f32 %v1532, %v1532
    %v1543 = vmul.f32 %v1534, %v1534
    %v1544 = vmul.f32 %v1493, %v1493
    %v1545 = vmul.f32 %v1495, %v1495
    %v1546 = vmul.f32 %v1536, %v1536
    %v1547 = vmul.f32 %v1538, %v1538
    %v1548 = vmul.f32 %v1489, %v1540
    %v1549 = vmul.f32 %v1491, %v1541
    %v1550 = vmul.f32 %v1532, %v1542
    %v1551 = vmul.f32 %v1534, %v1543
    %v1552 = vmul.f32 %v1493, %v1544
    %v1553 = vmul.f32 %v1495, %v1545
    %v1554 = vmul.f32 %v1536, %v1546
    %v1555 = vmul.f32 %v1538, %v1547
    %v1556 = vmul.f32 %v1548, 0.044715
    %v1557 = vmul.f32 %v1549, 0.044715
    %v1558 = vmul.f32 %v1550, 0.044715
    %v1559 = vmul.f32 %v1551, 0.044715
    %v1560 = vmul.f32 %v1552, 0.044715
    %v1561 = vmul.f32 %v1553, 0.044715
    %v1562 = vmul.f32 %v1554, 0.044715
    %v1563 = vmul.f32 %v1555, 0.044715
    %v1564 = vadd.f32 %v1489, %v1556
    %v1565 = vadd.f32 %v1491, %v1557
    %v1566 = vadd.f32 %v1532, %v1558
    %v1567 = vadd.f32 %v1534, %v1559
    %v1568 = vadd.f32 %v1493, %v1560
    %v1569 = vadd.f32 %v1495, %v1561
    %v1570 = vadd.f32 %v1536, %v1562
    %v1571 = vadd.f32 %v1538, %v1563
    %v1572 = vmul.f32 %v1564, 0.7978846
    %v1573 = vmul.f32 %v1565, 0.7978846
    %v1574 = vmul.f32 %v1566, 0.7978846
    %v1575 = vmul.f32 %v1567, 0.7978846
    %v1576 = vmul.f32 %v1568, 0.7978846
    %v1577 = vmul.f32 %v1569, 0.7978846
    %v1578 = vmul.f32 %v1570, 0.7978846
    %v1579 = vmul.f32 %v1571, 0.7978846
    %v1580 = vtanh.pop %v1572
    %v1581 = vtanh.pop %v1573
    %v1582 = vtanh.pop %v1574
    %v1583 = vtanh.pop %v1575
    %v1584 = vtanh.pop %v1576
    %v1585 = vtanh.pop %v1577
    %v1586 = vtanh.pop %v1578
    %v1587 = vtanh.pop %v1579
    %v1588 = vadd.f32 %v1580, 1.0
    %v1589 = vadd.f32 %v1581, 1.0
    %v1590 = vadd.f32 %v1582, 1.0
    %v1591 = vadd.f32 %v1583, 1.0
    %v1592 = vadd.f32 %v1584, 1.0
    %v1593 = vadd.f32 %v1585, 1.0
    %v1594 = vadd.f32 %v1586, 1.0
    %v1595 = vadd.f32 %v1587, 1.0
    %v1596 = vmul.f32 %v1588, 0.5
    %v1597 = vmul.f32 %v1589, 0.5
    %v1598 = vmul.f32 %v1590, 0.5
    %v1599 = vmul.f32 %v1591, 0.5
    %v1600 = vmul.f32 %v1592, 0.5
    %v1601 = vmul.f32 %v1593, 0.5
    %v1602 = vmul.f32 %v1594, 0.5
    %v1603 = vmul.f32 %v1595, 0.5
    %v1604 = vmul.f32 %v1489, %v1596
    %v1605 = vmul.f32 %v1491, %v1597
    %v1606 = vmul.f32 %v1532, %v1598
    %v1607 = vmul.f32 %v1534, %v1599
    %v1608 = vmul.f32 %v1493, %v1600
    %v1609 = vmul.f32 %v1495, %v1601
    %v1610 = vmul.f32 %v1536, %v1602
    %v1611 = vmul.f32 %v1538, %v1603
    %v1612 = vpack.c.bf16 %v1608, %v1604
    %v1613 = vpack.c.bf16 %v1609, %v1605
    %v1614 = vpack.c.bf16 %v1610, %v1606
    %v1615 = vpack.c.bf16 %v1611, %v1607
    %v1616 = vld [vmem:[#allocation6] sm:$0xf]
    %v1617 = vld [vmem:[#allocation6 + $0x4] sm:$0xf]
    %v1618 = vld [vmem:[#allocation6 + $0x8] sm:$0xf]
    %v1619 = vld [vmem:[#allocation6 + $0xc] sm:$0xf]
    %v1620 = vld [vmem:[#allocation6 + $0x10] sm:$0xf]
    %v1621 = vld [vmem:[#allocation6 + $0x14] sm:$0xf]
    %v1622 = vld [vmem:[#allocation6 + $0x18] sm:$0xf]
    %v1623 = vld [vmem:[#allocation6 + $0x1c] sm:$0xf]
    %v1624 = vld [vmem:[#allocation6 + $0x20] sm:$0xf]
    %v1625 = vld [vmem:[#allocation6 + $0x24] sm:$0xf]
    %v1626 = vld [vmem:[#allocation6 + $0x28] sm:$0xf]
    %v1627 = vld [vmem:[#allocation6 + $0x2c] sm:$0xf]
    %v1628 = vld [vmem:[#allocation6 + $0x30] sm:$0xf]
    %v1629 = vld [vmem:[#allocation6 + $0x34] sm:$0xf]
    %v1630 = vld [vmem:[#allocation6 + $0x38] sm:$0xf]
    %v1631 = vld [vmem:[#allocation6 + $0x3c] sm:$0xf]
    %v1632 = vld [vmem:[#allocation6 + $0x40] sm:$0xf]
    %v1633 = vld [vmem:[#allocation6 + $0x44] sm:$0xf]
    %v1634 = vld [vmem:[#allocation6 + $0x48] sm:$0xf]
    %v1635 = vld [vmem:[#allocation6 + $0x4c] sm:$0xf]
    %v1636 = vld [vmem:[#allocation6 + $0x50] sm:$0xf]
    %v1637 = vld [vmem:[#allocation6 + $0x54] sm:$0xf]
    %v1638 = vld [vmem:[#allocation6 + $0x58] sm:$0xf]
    %v1639 = vld [vmem:[#allocation6 + $0x5c] sm:$0xf]
    %v1640 = vld [vmem:[#allocation6 + $0x60] sm:$0xf]
    %v1641 = vld [vmem:[#allocation6 + $0x64] sm:$0xf]
    %v1642 = vld [vmem:[#allocation6 + $0x68] sm:$0xf]
    %v1643 = vld [vmem:[#allocation6 + $0x6c] sm:$0xf]
    %v1644 = vld [vmem:[#allocation6 + $0x70] sm:$0xf]
    %v1645 = vld [vmem:[#allocation6 + $0x74] sm:$0xf]
    %v1646 = vld [vmem:[#allocation6 + $0x78] sm:$0xf]
    %v1647 = vld [vmem:[#allocation6 + $0x7c] sm:$0xf]
    %v1648 = vld [vmem:[#allocation6 + $0x80] sm:$0xf]
    %v1649 = vld [vmem:[#allocation6 + $0x84] sm:$0xf]
    %v1650 = vld [vmem:[#allocation6 + $0x88] sm:$0xf]
    %v1651 = vld [vmem:[#allocation6 + $0x8c] sm:$0xf]
    %v1652 = vld [vmem:[#allocation6 + $0x90] sm:$0xf]
    %v1653 = vld [vmem:[#allocation6 + $0x94] sm:$0xf]
    %v1654 = vld [vmem:[#allocation6 + $0x98] sm:$0xf]
    %v1655 = vld [vmem:[#allocation6 + $0x9c] sm:$0xf]
    %v1656 = vld [vmem:[#allocation6 + $0xa0] sm:$0xf]
    %v1657 = vld [vmem:[#allocation6 + $0xa4] sm:$0xf]
    %v1658 = vld [vmem:[#allocation6 + $0xa8] sm:$0xf]
    %v1659 = vld [vmem:[#allocation6 + $0xac] sm:$0xf]
    %v1660 = vld [vmem:[#allocation6 + $0xb0] sm:$0xf]
    %v1661 = vld [vmem:[#allocation6 + $0xb4] sm:$0xf]
    %v1662 = vld [vmem:[#allocation6 + $0xb8] sm:$0xf]
    %v1663 = vld [vmem:[#allocation6 + $0xbc] sm:$0xf]
    %v1664 = vld [vmem:[#allocation6 + $0xc0] sm:$0xf]
    %v1665 = vld [vmem:[#allocation6 + $0xc4] sm:$0xf]
    %v1666 = vld [vmem:[#allocation6 + $0xc8] sm:$0xf]
    %v1667 = vld [vmem:[#allocation6 + $0xcc] sm:$0xf]
    %v1668 = vld [vmem:[#allocation6 + $0xd0] sm:$0xf]
    %v1669 = vld [vmem:[#allocation6 + $0xd4] sm:$0xf]
    %v1670 = vld [vmem:[#allocation6 + $0xd8] sm:$0xf]
    %v1671 = vld [vmem:[#allocation6 + $0xdc] sm:$0xf]
    %v1672 = vld [vmem:[#allocation6 + $0xe0] sm:$0xf]
    %v1673 = vld [vmem:[#allocation6 + $0xe4] sm:$0xf]
    %v1674 = vld [vmem:[#allocation6 + $0xe8] sm:$0xf]
    %v1675 = vld [vmem:[#allocation6 + $0xec] sm:$0xf]
    %v1676 = vld [vmem:[#allocation6 + $0xf0] sm:$0xf]
    %v1677 = vld [vmem:[#allocation6 + $0xf4] sm:$0xf]
    %v1678 = vld [vmem:[#allocation6 + $0xf8] sm:$0xf]
    %v1679 = vld [vmem:[#allocation6 + $0xfc] sm:$0xf]
    %v1680 = vld [vmem:[%s8 + $0x4] sm:$0x1]
    %v1681 = vlaneseq
    %v1682 = vshrl.u32 %v1681, 7
    %v1683 = vsub.s32 0, %v1682
    %v1684 = vrot.slane %v1680, %v1683
    %v1749 = vunpack.c.l.b16 %v1616
    %v1750 = vunpack.c.l.b16 %v1617
    %v1751 = vunpack.c.l.b16 %v1618
    %v1752 = vunpack.c.l.b16 %v1619
    %v1753 = vunpack.c.l.b16 %v1620
    %v1754 = vunpack.c.l.b16 %v1621
    %v1755 = vunpack.c.l.b16 %v1622
    %v1756 = vunpack.c.l.b16 %v1623
    %v1757 = vunpack.c.l.b16 %v1624
    %v1758 = vunpack.c.l.b16 %v1625
    %v1759 = vunpack.c.l.b16 %v1626
    %v1760 = vunpack.c.l.b16 %v1627
    %v1761 = vunpack.c.l.b16 %v1628
    %v1762 = vunpack.c.l.b16 %v1629
    %v1763 = vunpack.c.l.b16 %v1630
    %v1764 = vunpack.c.l.b16 %v1631
    %v1765 = vunpack.c.l.b16 %v1632
    %v1766 = vunpack.c.l.b16 %v1633
    %v1767 = vunpack.c.l.b16 %v1634
    %v1768 = vunpack.c.l.b16 %v1635
    %v1769 = vunpack.c.l.b16 %v1636
    %v1770 = vunpack.c.l.b16 %v1637
    %v1771 = vunpack.c.l.b16 %v1638
    %v1772 = vunpack.c.l.b16 %v1639
    %v1773 = vunpack.c.l.b16 %v1640
    %v1774 = vunpack.c.l.b16 %v1641
    %v1775 = vunpack.c.l.b16 %v1642
    %v1776 = vunpack.c.l.b16 %v1643
    %v1777 = vunpack.c.l.b16 %v1644
    %v1778 = vunpack.c.l.b16 %v1645
    %v1779 = vunpack.c.l.b16 %v1646
    %v1780 = vunpack.c.l.b16 %v1647
    %v1781 = vunpack.c.l.b16 %v1648
    %v1782 = vunpack.c.l.b16 %v1649
    %v1783 = vunpack.c.l.b16 %v1650
    %v1784 = vunpack.c.l.b16 %v1651
    %v1785 = vunpack.c.l.b16 %v1652
    %v1786 = vunpack.c.l.b16 %v1653
    %v1787 = vunpack.c.l.b16 %v1654
    %v1788 = vunpack.c.l.b16 %v1655
    %v1789 = vunpack.c.l.b16 %v1656
    %v1790 = vunpack.c.l.b16 %v1657
    %v1791 = vunpack.c.l.b16 %v1658
    %v1792 = vunpack.c.l.b16 %v1659
    %v1793 = vunpack.c.l.b16 %v1660
    %v1794 = vunpack.c.l.b16 %v1661
    %v1795 = vunpack.c.l.b16 %v1662
    %v1796 = vunpack.c.l.b16 %v1663
    %v1797 = vunpack.c.l.b16 %v1664
    %v1798 = vunpack.c.l.b16 %v1665
    %v1799 = vunpack.c.l.b16 %v1666
    %v1800 = vunpack.c.l.b16 %v1667
    %v1801 = vunpack.c.l.b16 %v1668
    %v1802 = vunpack.c.l.b16 %v1669
    %v1803 = vunpack.c.l.b16 %v1670
    %v1804 = vunpack.c.l.b16 %v1671
    %v1805 = vunpack.c.l.b16 %v1672
    %v1806 = vunpack.c.l.b16 %v1673
    %v1807 = vunpack.c.l.b16 %v1674
    %v1808 = vunpack.c.l.b16 %v1675
    %v1809 = vunpack.c.l.b16 %v1676
    %v1810 = vunpack.c.l.b16 %v1677
    %v1811 = vunpack.c.l.b16 %v1678
    %v1812 = vunpack.c.l.b16 %v1679
    %v1813 = vpack.c.b16 %v1750, %v1749
    %v1814 = vpack.c.b16 %v1752, %v1751
    %v1815 = vpack.c.b16 %v1754, %v1753
    %v1816 = vpack.c.b16 %v1756, %v1755
    %v1817 = vpack.c.b16 %v1758, %v1757
    %v1818 = vpack.c.b16 %v1760, %v1759
    %v1819 = vpack.c.b16 %v1762, %v1761
    %v1820 = vpack.c.b16 %v1764, %v1763
    %v1821 = vpack.c.b16 %v1766, %v1765
    %v1822 = vpack.c.b16 %v1768, %v1767
    %v1823 = vpack.c.b16 %v1770, %v1769
    %v1824 = vpack.c.b16 %v1772, %v1771
    %v1825 = vpack.c.b16 %v1774, %v1773
    %v1826 = vpack.c.b16 %v1776, %v1775
    %v1827 = vpack.c.b16 %v1778, %v1777
    %v1828 = vpack.c.b16 %v1780, %v1779
    %v1829 = vpack.c.b16 %v1782, %v1781
    %v1830 = vpack.c.b16 %v1784, %v1783
    %v1831 = vpack.c.b16 %v1786, %v1785
    %v1832 = vpack.c.b16 %v1788, %v1787
    %v1833 = vpack.c.b16 %v1790, %v1789
    %v1834 = vpack.c.b16 %v1792, %v1791
    %v1835 = vpack.c.b16 %v1794, %v1793
    %v1836 = vpack.c.b16 %v1796, %v1795
    %v1837 = vpack.c.b16 %v1798, %v1797
    %v1838 = vpack.c.b16 %v1800, %v1799
    %v1839 = vpack.c.b16 %v1802, %v1801
    %v1840 = vpack.c.b16 %v1804, %v1803
    %v1841 = vpack.c.b16 %v1806, %v1805
    %v1842 = vpack.c.b16 %v1808, %v1807
    %v1843 = vpack.c.b16 %v1810, %v1809
    %v1844 = vpack.c.b16 %v1812, %v1811
    %1877 = vmatprep.subr.bf16.mxu0 0
    %1878 = vmatpush1.bf16.msra.mxu0 %v1813
    %1879 = vmatprep.subr.bf16.mxu0 0
    %1880 = vmatpush1.bf16.msra.mxu0 %v1814
    %1881 = vmatprep.subr.bf16.mxu0 0
    %1882 = vmatpush1.bf16.msra.mxu0 %v1815
    %1883 = vmatprep.subr.bf16.mxu0 0
    %1884 = vmatpush1.bf16.msra.mxu0 %v1816
    %1885 = vmatprep.subr.bf16.mxu0 0
    %1886 = vmatpush1.bf16.msra.mxu0 %v1817
    %1887 = vmatprep.subr.bf16.mxu0 0
    %1888 = vmatpush1.bf16.msra.mxu0 %v1818
    %1889 = vmatprep.subr.bf16.mxu0 0
    %1890 = vmatpush1.bf16.msra.mxu0 %v1819
    %1891 = vmatprep.subr.bf16.mxu0 0
    %1892 = vmatpush1.bf16.msra.mxu0 %v1820
    %1893 = vmatprep.subr.bf16.mxu0 0
    %1894 = vmatpush1.bf16.msra.mxu0 %v1821
    %1895 = vmatprep.subr.bf16.mxu0 0
    %1896 = vmatpush1.bf16.msra.mxu0 %v1822
    %1897 = vmatprep.subr.bf16.mxu0 0
    %1898 = vmatpush1.bf16.msra.mxu0 %v1823
    %1899 = vmatprep.subr.bf16.mxu0 0
    %1900 = vmatpush1.bf16.msra.mxu0 %v1824
    %1901 = vmatprep.subr.bf16.mxu0 0
    %1902 = vmatpush1.bf16.msra.mxu0 %v1825
    %1903 = vmatprep.subr.bf16.mxu0 0
    %1904 = vmatpush1.bf16.msra.mxu0 %v1826
    %1905 = vmatprep.subr.bf16.mxu0 0
    %1906 = vmatpush1.bf16.msra.mxu0 %v1827
    %1907 = vmatprep.subr.bf16.mxu0 0
    %1908 = vmatpush1.bf16.msra.mxu0 %v1828
    %1909 = vmatprep.mubr.bf16.mxu0 %v1613
    %1910 = vmatmul.mubr.bf16.gmra.mrb[0].mxu0 %v1612
    %v1911 = vpop.f32.mrb[0].mxu0
    %v1912 = vadd.f32 %v1684, %v1911
    %v1913 = vpop.f32.mrb[0].mxu0
    %v1914 = vpop.f32.mrb[0].mxu0
    %v1915 = vadd.f32 %v1684, %v1914
    %v1916 = vpop.f32.mrb[0].mxu0
    %1917 = vdwg.mxu0
    %1918 = vmatprep.subr.bf16.mxu0 0
    %1919 = vmatpush1.bf16.msra.mxu0 %v1829
    %1920 = vmatprep.subr.bf16.mxu0 0
    %1921 = vmatpush1.bf16.msra.mxu0 %v1830
    %1922 = vmatprep.subr.bf16.mxu0 0
    %1923 = vmatpush1.bf16.msra.mxu0 %v1831
    %1924 = vmatprep.subr.bf16.mxu0 0
    %1925 = vmatpush1.bf16.msra.mxu0 %v1832
    %1926 = vmatprep.subr.bf16.mxu0 0
    %1927 = vmatpush1.bf16.msra.mxu0 %v1833
    %1928 = vmatprep.subr.bf16.mxu0 0
    %1929 = vmatpush1.bf16.msra.mxu0 %v1834
    %1930 = vmatprep.subr.bf16.mxu0 0
    %1931 = vmatpush1.bf16.msra.mxu0 %v1835
    %1932 = vmatprep.subr.bf16.mxu0 0
    %1933 = vmatpush1.bf16.msra.mxu0 %v1836
    %1934 = vmatprep.subr.bf16.mxu0 0
    %1935 = vmatpush1.bf16.msra.mxu0 %v1837
    %1936 = vmatprep.subr.bf16.mxu0 0
    %1937 = vmatpush1.bf16.msra.mxu0 %v1838
    %1938 = vmatprep.subr.bf16.mxu0 0
    %1939 = vmatpush1.bf16.msra.mxu0 %v1839
    %1940 = vmatprep.subr.bf16.mxu0 0
    %1941 = vmatpush1.bf16.msra.mxu0 %v1840
    %1942 = vmatprep.subr.bf16.mxu0 0
    %1943 = vmatpush1.bf16.msra.mxu0 %v1841
    %1944 = vmatprep.subr.bf16.mxu0 0
    %1945 = vmatpush1.bf16.msra.mxu0 %v1842
    %1946 = vmatprep.subr.bf16.mxu0 0
    %1947 = vmatpush1.bf16.msra.mxu0 %v1843
    %1948 = vmatprep.subr.bf16.mxu0 0
    %1949 = vmatpush1.bf16.msra.mxu0 %v1844
    %1950 = vmatprep.mubr.bf16.mxu0 %v1615
    %1951 = vmatmul.mubr.bf16.gmra.mrb[0].mxu0 %v1614
    %v1952 = vpop.f32.mrb[0].mxu0
    %v1953 = vadd.f32 %v1912, %v1952
    %v1954 = vpop.f32.mrb[0].mxu0
    %v1955 = vpop.f32.mrb[0].mxu0
    %v1956 = vadd.f32 %v1915, %v1955
    %v1957 = vpop.f32.mrb[0].mxu0
    %1958 = vdwg.mxu0
    %v1959 = vadd.f32 %v1953, %v1237
    %v1960 = vadd.f32 %v1956, %v1238
    %v1961 = vld [vmem:[%s8 + $0x7] sm:$0x1]
    %v1962 = vld [vmem:[%s8 + $0x8] sm:$0x1]
    %1963 = vadd.xlane.f32.xlu0 %v1959
    %v1964 = vpop.xlane.xlu0 %1963
    %1965 = vadd.xlane.f32.xlu0 %v1960
    %v1966 = vpop.xlane.xlu0 %1965
    %v1967 = vmul.f32 %v1959, %v1959
    %v1968 = vmul.f32 %v1960, %v1960
    %1969 = vadd.xlane.f32.xlu0 %v1967
    %v1970 = vpop.xlane.xlu0 %1969
    %1971 = vadd.xlane.f32.xlu0 %v1968
    %v1972 = vpop.xlane.xlu0 %1971
    %v1973 = vmul.f32 %v1964, 0.0078125
    %v1974 = vmul.f32 %v1966, 0.0078125
    %v1975 = vmul.f32 %v1970, 0.0078125
    %v1976 = vmul.f32 %v1972, 0.0078125
    %v1977 = vmul.f32 %v1973, %v1973
    %v1978 = vmul.f32 %v1974, %v1974
    %v1979 = vsub.f32 %v1975, %v1977
    %v1980 = vsub.f32 %v1976, %v1978
    %v1981 = vsub.f32 %v1959, %v1973
    %v1982 = vsub.f32 %v1960, %v1974
    %v1983 = vadd.f32 %v1979, 1e-12
    %v1984 = vadd.f32 %v1980, 1e-12
    %v1985 = vrsqrt.pop %v1983
    %v1986 = vrsqrt.pop %v1984
    %v1987 = vmul.f32 %v1981, %v1985
    %v1988 = vmul.f32 %v1982, %v1986
    %v1989 = vlaneseq
    %v1990 = vshrl.u32 %v1989, 7
    %v1991 = vsub.s32 0, %v1990
    %v1992 = vrot.slane %v1961, %v1991
    %v1993 = vmul.f32 %v1987, %v1992
    %v1994 = vmul.f32 %v1988, %v1992
    %v1995 = vlaneseq
    %v1996 = vshrl.u32 %v1995, 7
    %v1997 = vsub.s32 0, %v1996
    %v1998 = vrot.slane %v1962, %v1997
    %v1999 = vadd.f32 %v1993, %v1998
    %v2000 = vadd.f32 %v1994, %v1998
    %v2001 = vpack.c.bf16 %v2000, %v1999
    %s2002 = scalar_lea.vmem [#allocation2], 192
    %v2003 = vld [vmem:[%s2002] sm:$0xff]
    %v2004 = vld [vmem:[%s2002 + $0x8] sm:$0xf]
    %v2005 = vld [vmem:[%s2002 + $0xc] sm:$0xff]
    %v2006 = vld [vmem:[%s2002 + $0x14] sm:$0xf]
    %v2007 = vld [vmem:[%s2002 + $0x18] sm:$0xff]
    %v2008 = vld [vmem:[%s2002 + $0x20] sm:$0xf]
    %v2009 = vld [vmem:[%s2002 + $0x24] sm:$0xff]
    %v2010 = vld [vmem:[%s2002 + $0x2c] sm:$0xf]
    %v2011 = vld [vmem:[%s2002 + $0x30] sm:$0xff]
    %v2012 = vld [vmem:[%s2002 + $0x38] sm:$0xf]
    %v2013 = vld [vmem:[%s2002 + $0x3c] sm:$0xff]
    %v2014 = vld [vmem:[%s2002 + $0x44] sm:$0xf]
    %v2015 = vld [vmem:[%s2002 + $0x48] sm:$0xff]
    %v2016 = vld [vmem:[%s2002 + $0x50] sm:$0xf]
    %v2017 = vld [vmem:[%s2002 + $0x54] sm:$0xff]
    %v2018 = vld [vmem:[%s2002 + $0x5c] sm:$0xf]
    %v2019 = vld [vmem:[%s2002 + $0x60] sm:$0xff]
    %v2020 = vld [vmem:[%s2002 + $0x68] sm:$0xf]
    %v2021 = vld [vmem:[%s2002 + $0x6c] sm:$0xff]
    %v2022 = vld [vmem:[%s2002 + $0x74] sm:$0xf]
    %v2023 = vld [vmem:[%s2002 + $0x78] sm:$0xff]
    %v2024 = vld [vmem:[%s2002 + $0x80] sm:$0xf]
    %v2025 = vld [vmem:[%s2002 + $0x84] sm:$0xff]
    %v2026 = vld [vmem:[%s2002 + $0x8c] sm:$0xf]
    %v2027 = vld [vmem:[%s2002 + $0x90] sm:$0xff]
    %v2028 = vld [vmem:[%s2002 + $0x98] sm:$0xf]
    %v2029 = vld [vmem:[%s2002 + $0x9c] sm:$0xff]
    %v2030 = vld [vmem:[%s2002 + $0xa4] sm:$0xf]
    %v2031 = vld [vmem:[%s2002 + $0xa8] sm:$0xff]
    %v2032 = vld [vmem:[%s2002 + $0xb0] sm:$0xf]
    %v2033 = vld [vmem:[%s2002 + $0xb4] sm:$0xff]
    %v2034 = vld [vmem:[%s2002 + $0xbc] sm:$0xf]
    %v2067 = vunpack.c.l.b16 %v2003
    %v2068 = vunpack.c.h.b16 %v2003
    %v2069 = vunpack.c.l.b16 %v2004
    %v2070 = vunpack.c.l.b16 %v2005
    %v2071 = vunpack.c.h.b16 %v2005
    %v2072 = vunpack.c.l.b16 %v2006
    %v2073 = vunpack.c.l.b16 %v2007
    %v2074 = vunpack.c.h.b16 %v2007
    %v2075 = vunpack.c.l.b16 %v2008
    %v2076 = vunpack.c.l.b16 %v2009
    %v2077 = vunpack.c.h.b16 %v2009
    %v2078 = vunpack.c.l.b16 %v2010
    %v2079 = vunpack.c.l.b16 %v2011
    %v2080 = vunpack.c.h.b16 %v2011
    %v2081 = vunpack.c.l.b16 %v2012
    %v2082 = vunpack.c.l.b16 %v2013
    %v2083 = vunpack.c.h.b16 %v2013
    %v2084 = vunpack.c.l.b16 %v2014
    %v2085 = vunpack.c.l.b16 %v2015
    %v2086 = vunpack.c.h.b16 %v2015
    %v2087 = vunpack.c.l.b16 %v2016
    %v2088 = vunpack.c.l.b16 %v2017
    %v2089 = vunpack.c.h.b16 %v2017
    %v2090 = vunpack.c.l.b16 %v2018
    %v2091 = vunpack.c.l.b16 %v2019
    %v2092 = vunpack.c.h.b16 %v2019
    %v2093 = vunpack.c.l.b16 %v2020
    %v2094 = vunpack.c.l.b16 %v2021
    %v2095 = vunpack.c.h.b16 %v2021
    %v2096 = vunpack.c.l.b16 %v2022
    %v2097 = vunpack.c.l.b16 %v2023
    %v2098 = vunpack.c.h.b16 %v2023
    %v2099 = vunpack.c.l.b16 %v2024
    %v2100 = vunpack.c.l.b16 %v2025
    %v2101 = vunpack.c.h.b16 %v2025
    %v2102 = vunpack.c.l.b16 %v2026
    %v2103 = vunpack.c.l.b16 %v2027
    %v2104 = vunpack.c.h.b16 %v2027
    %v2105 = vunpack.c.l.b16 %v2028
    %v2106 = vunpack.c.l.b16 %v2029
    %v2107 = vunpack.c.h.b16 %v2029
    %v2108 = vunpack.c.l.b16 %v2030
    %v2109 = vunpack.c.l.b16 %v2031
    %v2110 = vunpack.c.h.b16 %v2031
    %v2111 = vunpack.c.l.b16 %v2032
    %v2112 = vunpack.c.l.b16 %v2033
    %v2113 = vunpack.c.h.b16 %v2033
    %v2114 = vunpack.c.l.b16 %v2034
    %v2115 = vpack.c.b16 %v2070, %v2067
    %v2116 = vpack.c.b16 %v2071, %v2068
    %v2117 = vpack.c.b16 %v2072, %v2069
    %v2118 = vpack.c.b16 %v2076, %v2073
    %v2119 = vpack.c.b16 %v2077, %v2074
    %v2120 = vpack.c.b16 %v2078, %v2075
    %v2121 = vpack.c.b16 %v2082, %v2079
    %v2122 = vpack.c.b16 %v2083, %v2080
    %v2123 = vpack.c.b16 %v2084, %v2081
    %v2124 = vpack.c.b16 %v2088, %v2085
    %v2125 = vpack.c.b16 %v2089, %v2086
    %v2126 = vpack.c.b16 %v2090, %v2087
    %v2127 = vpack.c.b16 %v2094, %v2091
    %v2128 = vpack.c.b16 %v2095, %v2092
    %v2129 = vpack.c.b16 %v2096, %v2093
    %v2130 = vpack.c.b16 %v2100, %v2097
    %v2131 = vpack.c.b16 %v2101, %v2098
    %v2132 = vpack.c.b16 %v2102, %v2099
    %v2133 = vpack.c.b16 %v2106, %v2103
    %v2134 = vpack.c.b16 %v2107, %v2104
    %v2135 = vpack.c.b16 %v2108, %v2105
    %v2136 = vpack.c.b16 %v2112, %v2109
    %v2137 = vpack.c.b16 %v2113, %v2110
    %v2138 = vpack.c.b16 %v2114, %v2111
    %2163 = vmatprep.subr.bf16.mxu0 %v2116
    %2164 = vmatpush1.bf16.msra.mxu0 %v2115
    %2165 = vmatprep.subr.bf16.mxu0 %v2119
    %2166 = vmatpush1.bf16.msra.mxu0 %v2118
    %2167 = vmatprep.subr.bf16.mxu0 %v2122
    %2168 = vmatpush1.bf16.msra.mxu0 %v2121
    %2169 = vmatprep.subr.bf16.mxu0 %v2125
    %2170 = vmatpush1.bf16.msra.mxu0 %v2124
    %2171 = vmatprep.subr.bf16.mxu0 %v2128
    %2172 = vmatpush1.bf16.msra.mxu0 %v2127
    %2173 = vmatprep.subr.bf16.mxu0 %v2131
    %2174 = vmatpush1.bf16.msra.mxu0 %v2130
    %2175 = vmatprep.subr.bf16.mxu0 %v2134
    %2176 = vmatpush1.bf16.msra.mxu0 %v2133
    %2177 = vmatprep.subr.bf16.mxu0 %v2137
    %2178 = vmatpush1.bf16.msra.mxu0 %v2136
    %2179 = vmatprep.subr.bf16.mxu0 0
    %2180 = vmatpush1.bf16.msra.mxu0 0
    %2181 = vmatprep.subr.bf16.mxu0 0
    %2182 = vmatpush1.bf16.msra.mxu0 0
    %2183 = vmatprep.subr.bf16.mxu0 0
    %2184 = vmatpush1.bf16.msra.mxu0 0
    %2185 = vmatprep.subr.bf16.mxu0 0
    %2186 = vmatpush1.bf16.msra.mxu0 0
    %2187 = vmatprep.subr.bf16.mxu0 0
    %2188 = vmatpush1.bf16.msra.mxu0 0
    %2189 = vmatprep.subr.bf16.mxu0 0
    %2190 = vmatpush1.bf16.msra.mxu0 0
    %2191 = vmatprep.subr.bf16.mxu0 0
    %2192 = vmatpush1.bf16.msra.mxu0 0
    %2193 = vmatprep.subr.bf16.mxu0 0
    %2194 = vmatpush1.bf16.msra.mxu0 0
    %2195 = vmatprep.mubr.bf16.mxu0 0
    %2196 = vmatmul.mubr.bf16.gmra.mrb[0].mxu0 %v2001
    %v2197 = vpop.f32.mrb[0].mxu0
    %v2198 = vadd.f32 0.0, %v2197
    %v2199 = vpop.f32.mrb[0].mxu0
    %v2200 = vadd.f32 0.0, %v2199
    %v2201 = vpop.f32.mrb[0].mxu0
    %v2202 = vadd.f32 0.0, %v2201
    %v2203 = vpop.f32.mrb[0].mxu0
    %v2204 = vadd.f32 0.0, %v2203
    %2205 = vdwg.mxu0
    %2206 = vmatprep.subr.bf16.mxu0 0
    %2207 = vmatpush1.bf16.msra.mxu0 %v2117
    %2208 = vmatprep.subr.bf16.mxu0 0
    %2209 = vmatpush1.bf16.msra.mxu0 %v2120
    %2210 = vmatprep.subr.bf16.mxu0 0
    %2211 = vmatpush1.bf16.msra.mxu0 %v2123
    %2212 = vmatprep.subr.bf16.mxu0 0
    %2213 = vmatpush1.bf16.msra.mxu0 %v2126
    %2214 = vmatprep.subr.bf16.mxu0 0
    %2215 = vmatpush1.bf16.msra.mxu0 %v2129
    %2216 = vmatprep.subr.bf16.mxu0 0
    %2217 = vmatpush1.bf16.msra.mxu0 %v2132
    %2218 = vmatprep.subr.bf16.mxu0 0
    %2219 = vmatpush1.bf16.msra.mxu0 %v2135
    %2220 = vmatprep.subr.bf16.mxu0 0
    %2221 = vmatpush1.bf16.msra.mxu0 %v2138
    %2222 = vmatprep.subr.bf16.mxu0 0
    %2223 = vmatpush1.bf16.msra.mxu0 0
    %2224 = vmatprep.subr.bf16.mxu0 0
    %2225 = vmatpush1.bf16.msra.mxu0 0
    %2226 = vmatprep.subr.bf16.mxu0 0
    %2227 = vmatpush1.bf16.msra.mxu0 0
    %2228 = vmatprep.subr.bf16.mxu0 0
    %2229 = vmatpush1.bf16.msra.mxu0 0
    %2230 = vmatprep.subr.bf16.mxu0 0
    %2231 = vmatpush1.bf16.msra.mxu0 0
    %2232 = vmatprep.subr.bf16.mxu0 0
    %2233 = vmatpush1.bf16.msra.mxu0 0
    %2234 = vmatprep.subr.bf16.mxu0 0
    %2235 = vmatpush1.bf16.msra.mxu0 0
    %2236 = vmatprep.subr.bf16.mxu0 0
    %2237 = vmatpush1.bf16.msra.mxu0 0
    %2238 = vmatprep.mubr.bf16.mxu0 0
    %2239 = vmatmul.mubr.bf16.gmra.mrb[0].mxu0 %v2001
    %v2240 = vpop.f32.mrb[0].mxu0
    %v2241 = vadd.f32 0.0, %v2240
    %v2242 = vpop.f32.mrb[0].mxu0
    %v2243 = vpop.f32.mrb[0].mxu0
    %v2244 = vadd.f32 0.0, %v2243
    %v2245 = vpop.f32.mrb[0].mxu0
    %2246 = vdwg.mxu0
    %s2247 = scalar_lea.vmem %s8, 16
    %v2248 = vld [vmem:[%s2247] sm:$0x1]
    %v2249 = vlaneseq
    %v2250 = vshrl.u32 %v2249, 7
    %v2251 = vsub.s32 0, %v2250
    %v2252 = vrot.slane %v2248, %v2251
    %v2253 = vadd.f32 %v2198, %v2252
    %v2254 = vadd.f32 %v2202, %v2252
    %v2255 = vld [vmem:[%s2247 + $0x1] sm:$0x1]
    %v2256 = vlaneseq
    %v2257 = vshrl.u32 %v2256, 7
    %v2258 = vsub.s32 0, %v2257
    %v2259 = vrot.slane %v2255, %v2258
    %v2260 = vadd.f32 %v2200, %v2259
    %v2261 = vadd.f32 %v2204, %v2259
    %v2262 = vld [vmem:[%s2247 + $0x2] sm:$0x1]
    %v2263 = vlaneseq
    %v2264 = vshrl.u32 %v2263, 7
    %v2265 = vsub.s32 0, %v2264
    %v2266 = vrot.slane %v2262, %v2265
    %v2267 = vadd.f32 %v2241, %v2266
    %v2268 = vadd.f32 %v2244, %v2266
    %2271 = vrot.lane.b32.xlu0 %v2253, 64
    %v2272 = vpop.permute.xlu0 %2271
    %2273 = vrot.lane.b32.xlu0 %v2254, 64
    %v2274 = vpop.permute.xlu0 %2273
    %2277 = vrot.lane.b32.xlu0 %v2260, 64
    %v2278 = vpop.permute.xlu0 %2277
    %2279 = vrot.lane.b32.xlu0 %v2261, 64
    %v2280 = vpop.permute.xlu0 %2279
    %2283 = vrot.lane.b32.xlu0 %v2267, 64
    %v2284 = vpop.permute.xlu0 %2283
    %2285 = vrot.lane.b32.xlu0 %v2268, 64
    %v2286 = vpop.permute.xlu0 %2285
    %v2289 = vsel %vm442, %v2253, 0
    %v2291 = vsel %vm442, %v2260, 0
    %2293 = vmatprep.subr.mxu0 0.0
    %2294 = vmatpush1.xpose.msra.mxu0 %v2291
    %2295 = vmatprep.subr.mxu0 0.0
    %2296 = vmatpush1.xpose.msra.mxu0 0.0
    %2297 = vmatprep.subr.mxu0 0.0
    %2298 = vmatpush1.xpose.msra.mxu0 0.0
    %2299 = vmatprep.subr.mxu0 0.0
    %2300 = vmatpush1.xpose.msra.mxu0 0.0
    %2301 = vmatprep.subr.mxu0 0.0
    %2302 = vmatpush1.xpose.msra.mxu0 0.0
    %2303 = vmatprep.subr.mxu0 0.0
    %2304 = vmatpush1.xpose.msra.mxu0 0.0
    %2305 = vmatprep.subr.mxu0 0.0
    %2306 = vmatpush1.xpose.msra.mxu0 0.0
    %2307 = vmatprep.subr.mxu0 0.0
    %2308 = vmatpush1.xpose.msra.mxu0 0.0
    %2309 = vmatprep.subr.mxu0 0.0
    %2310 = vmatpush1.xpose.msra.mxu0 0.0
    %2311 = vmatprep.subr.mxu0 0.0
    %2312 = vmatpush1.xpose.msra.mxu0 0.0
    %2313 = vmatprep.subr.mxu0 0.0
    %2314 = vmatpush1.xpose.msra.mxu0 0.0
    %2315 = vmatprep.subr.mxu0 0.0
    %2316 = vmatpush1.xpose.msra.mxu0 0.0
    %2317 = vmatprep.subr.mxu0 0.0
    %2318 = vmatpush1.xpose.msra.mxu0 0.0
    %2319 = vmatprep.subr.mxu0 0.0
    %2320 = vmatpush1.xpose.msra.mxu0 0.0
    %2321 = vmatprep.subr.mxu0 0.0
    %2322 = vmatpush1.xpose.msra.mxu0 0.0
    %2323 = vmatprep.subr.mxu0 0.0
    %2324 = vmatpush1.xpose.msra.mxu0 0.0
    %2325 = vmatprep.subr.mxu0 0.0
    %2326 = vmatpush1.xpose.msra.mxu0 0.0
    %2327 = vmatprep.subr.mxu0 0.0
    %2328 = vmatpush1.xpose.msra.mxu0 0.0
    %2329 = vmatprep.subr.mxu0 0.0
    %2330 = vmatpush1.xpose.msra.mxu0 0.0
    %2331 = vmatprep.subr.mxu0 0.0
    %2332 = vmatpush1.xpose.msra.mxu0 0.0
    %2333 = vmatprep.subr.mxu0 0.0
    %2334 = vmatpush1.xpose.msra.mxu0 0.0
    %2335 = vmatprep.subr.mxu0 0.0
    %2336 = vmatpush1.xpose.msra.mxu0 0.0
    %2337 = vmatprep.subr.mxu0 0.0
    %2338 = vmatpush1.xpose.msra.mxu0 0.0
    %2339 = vmatprep.subr.mxu0 0.0
    %2340 = vmatpush1.xpose.msra.mxu0 0.0
    %2341 = vmatprep.subr.mxu0 0.0
    %2342 = vmatpush1.xpose.msra.mxu0 0.0
    %2343 = vmatprep.subr.mxu0 0.0
    %2344 = vmatpush1.xpose.msra.mxu0 0.0
    %2345 = vmatprep.subr.mxu0 0.0
    %2346 = vmatpush1.xpose.msra.mxu0 0.0
    %2347 = vmatprep.subr.mxu0 0.0
    %2348 = vmatpush1.xpose.msra.mxu0 0.0
    %2349 = vmatprep.subr.mxu0 0.0
    %2350 = vmatpush1.xpose.msra.mxu0 0.0
    %2351 = vmatprep.subr.mxu0 0.0
    %2352 = vmatpush1.xpose.msra.mxu0 0.0
    %2353 = vmatprep.subr.mxu0 0.0
    %2354 = vmatpush1.xpose.msra.mxu0 0.0
    %2355 = vmatprep.subr.mxu0 0.0
    %2356 = vmatpush1.xpose.msra.mxu0 0.0
    %2357 = vmatprep.mubr.f32.mxu0 0.0
    %2358 = vmatmul.mubr.f32.gmra.mrb[0].mxu0 %v2289
    %v2359 = vpop.f32.mrb[0].mxu0
    %v2360 = vadd.f32 %v435, %v2359
    %v2361 = vpop.f32.mrb[0].mxu0
    %2362 = vdwg.mxu0
    %v2363 = vsel %vm442, %v2254, 0
    %v2365 = vsel %vm442, %v2261, 0
    %2367 = vmatprep.subr.mxu0 0.0
    %2368 = vmatpush1.xpose.msra.mxu0 %v2365
    %2369 = vmatprep.subr.mxu0 0.0
    %2370 = vmatpush1.xpose.msra.mxu0 0.0
    %2371 = vmatprep.subr.mxu0 0.0
    %2372 = vmatpush1.xpose.msra.mxu0 0.0
    %2373 = vmatprep.subr.mxu0 0.0
    %2374 = vmatpush1.xpose.msra.mxu0 0.0
    %2375 = vmatprep.subr.mxu0 0.0
    %2376 = vmatpush1.xpose.msra.mxu0 0.0
    %2377 = vmatprep.subr.mxu0 0.0
    %2378 = vmatpush1.xpose.msra.mxu0 0.0
    %2379 = vmatprep.subr.mxu0 0.0
    %2380 = vmatpush1.xpose.msra.mxu0 0.0
    %2381 = vmatprep.subr.mxu0 0.0
    %2382 = vmatpush1.xpose.msra.mxu0 0.0
    %2383 = vmatprep.subr.mxu0 0.0
    %2384 = vmatpush1.xpose.msra.mxu0 0.0
    %2385 = vmatprep.subr.mxu0 0.0
    %2386 = vmatpush1.xpose.msra.mxu0 0.0
    %2387 = vmatprep.subr.mxu0 0.0
    %2388 = vmatpush1.xpose.msra.mxu0 0.0
    %2389 = vmatprep.subr.mxu0 0.0
    %2390 = vmatpush1.xpose.msra.mxu0 0.0
    %2391 = vmatprep.subr.mxu0 0.0
    %2392 = vmatpush1.xpose.msra.mxu0 0.0
    %2393 = vmatprep.subr.mxu0 0.0
    %2394 = vmatpush1.xpose.msra.mxu0 0.0
    %2395 = vmatprep.subr.mxu0 0.0
    %2396 = vmatpush1.xpose.msra.mxu0 0.0
    %2397 = vmatprep.subr.mxu0 0.0
    %2398 = vmatpush1.xpose.msra.mxu0 0.0
    %2399 = vmatprep.subr.mxu0 0.0
    %2400 = vmatpush1.xpose.msra.mxu0 0.0
    %2401 = vmatprep.subr.mxu0 0.0
    %2402 = vmatpush1.xpose.msra.mxu0 0.0
    %2403 = vmatprep.subr.mxu0 0.0
    %2404 = vmatpush1.xpose.msra.mxu0 0.0
    %2405 = vmatprep.subr.mxu0 0.0
    %2406 = vmatpush1.xpose.msra.mxu0 0.0
    %2407 = vmatprep.subr.mxu0 0.0
    %2408 = vmatpush1.xpose.msra.mxu0 0.0
    %2409 = vmatprep.subr.mxu0 0.0
    %2410 = vmatpush1.xpose.msra.mxu0 0.0
    %2411 = vmatprep.subr.mxu0 0.0
    %2412 = vmatpush1.xpose.msra.mxu0 0.0
    %2413 = vmatprep.subr.mxu0 0.0
    %2414 = vmatpush1.xpose.msra.mxu0 0.0
    %2415 = vmatprep.subr.mxu0 0.0
    %2416 = vmatpush1.xpose.msra.mxu0 0.0
    %2417 = vmatprep.subr.mxu0 0.0
    %2418 = vmatpush1.xpose.msra.mxu0 0.0
    %2419 = vmatprep.subr.mxu0 0.0
    %2420 = vmatpush1.xpose.msra.mxu0 0.0
    %2421 = vmatprep.subr.mxu0 0.0
    %2422 = vmatpush1.xpose.msra.mxu0 0.0
    %2423 = vmatprep.subr.mxu0 0.0
    %2424 = vmatpush1.xpose.msra.mxu0 0.0
    %2425 = vmatprep.subr.mxu0 0.0
    %2426 = vmatpush1.xpose.msra.mxu0 0.0
    %2427 = vmatprep.subr.mxu0 0.0
    %2428 = vmatpush1.xpose.msra.mxu0 0.0
    %2429 = vmatprep.subr.mxu0 0.0
    %2430 = vmatpush1.xpose.msra.mxu0 0.0
    %2431 = vmatprep.mubr.f32.mxu0 0.0
    %2432 = vmatmul.mubr.f32.gmra.mrb[0].mxu0 %v2363
    %v2433 = vpop.f32.mrb[0].mxu0
    %v2434 = vadd.f32 %v439, %v2433
    %v2435 = vpop.f32.mrb[0].mxu0
    %2436 = vdwg.mxu0
    %v2437 = vsel %vm442, %v2272, 0
    %v2439 = vsel %vm442, %v2278, 0
    %2441 = vmatprep.subr.mxu0 0.0
    %2442 = vmatpush1.xpose.msra.mxu0 %v2439
    %2443 = vmatprep.subr.mxu0 0.0
    %2444 = vmatpush1.xpose.msra.mxu0 0.0
    %2445 = vmatprep.subr.mxu0 0.0
    %2446 = vmatpush1.xpose.msra.mxu0 0.0
    %2447 = vmatprep.subr.mxu0 0.0
    %2448 = vmatpush1.xpose.msra.mxu0 0.0
    %2449 = vmatprep.subr.mxu0 0.0
    %2450 = vmatpush1.xpose.msra.mxu0 0.0
    %2451 = vmatprep.subr.mxu0 0.0
    %2452 = vmatpush1.xpose.msra.mxu0 0.0
    %2453 = vmatprep.subr.mxu0 0.0
    %2454 = vmatpush1.xpose.msra.mxu0 0.0
    %2455 = vmatprep.subr.mxu0 0.0
    %2456 = vmatpush1.xpose.msra.mxu0 0.0
    %2457 = vmatprep.subr.mxu0 0.0
    %2458 = vmatpush1.xpose.msra.mxu0 0.0
    %2459 = vmatprep.subr.mxu0 0.0
    %2460 = vmatpush1.xpose.msra.mxu0 0.0
    %2461 = vmatprep.subr.mxu0 0.0
    %2462 = vmatpush1.xpose.msra.mxu0 0.0
    %2463 = vmatprep.subr.mxu0 0.0
    %2464 = vmatpush1.xpose.msra.mxu0 0.0
    %2465 = vmatprep.subr.mxu0 0.0
    %2466 = vmatpush1.xpose.msra.mxu0 0.0
    %2467 = vmatprep.subr.mxu0 0.0
    %2468 = vmatpush1.xpose.msra.mxu0 0.0
    %2469 = vmatprep.subr.mxu0 0.0
    %2470 = vmatpush1.xpose.msra.mxu0 0.0
    %2471 = vmatprep.subr.mxu0 0.0
    %2472 = vmatpush1.xpose.msra.mxu0 0.0
    %2473 = vmatprep.subr.mxu0 0.0
    %2474 = vmatpush1.xpose.msra.mxu0 0.0
    %2475 = vmatprep.subr.mxu0 0.0
    %2476 = vmatpush1.xpose.msra.mxu0 0.0
    %2477 = vmatprep.subr.mxu0 0.0
    %2478 = vmatpush1.xpose.msra.mxu0 0.0
    %2479 = vmatprep.subr.mxu0 0.0
    %2480 = vmatpush1.xpose.msra.mxu0 0.0
    %2481 = vmatprep.subr.mxu0 0.0
    %2482 = vmatpush1.xpose.msra.mxu0 0.0
    %2483 = vmatprep.subr.mxu0 0.0
    %2484 = vmatpush1.xpose.msra.mxu0 0.0
    %2485 = vmatprep.subr.mxu0 0.0
    %2486 = vmatpush1.xpose.msra.mxu0 0.0
    %2487 = vmatprep.subr.mxu0 0.0
    %2488 = vmatpush1.xpose.msra.mxu0 0.0
    %2489 = vmatprep.subr.mxu0 0.0
    %2490 = vmatpush1.xpose.msra.mxu0 0.0
    %2491 = vmatprep.subr.mxu0 0.0
    %2492 = vmatpush1.xpose.msra.mxu0 0.0
    %2493 = vmatprep.subr.mxu0 0.0
    %2494 = vmatpush1.xpose.msra.mxu0 0.0
    %2495 = vmatprep.subr.mxu0 0.0
    %2496 = vmatpush1.xpose.msra.mxu0 0.0
    %2497 = vmatprep.subr.mxu0 0.0
    %2498 = vmatpush1.xpose.msra.mxu0 0.0
    %2499 = vmatprep.subr.mxu0 0.0
    %2500 = vmatpush1.xpose.msra.mxu0 0.0
    %2501 = vmatprep.subr.mxu0 0.0
    %2502 = vmatpush1.xpose.msra.mxu0 0.0
    %2503 = vmatprep.subr.mxu0 0.0
    %2504 = vmatpush1.xpose.msra.mxu0 0.0
    %2505 = vmatprep.mubr.f32.mxu0 0.0
    %2506 = vmatmul.mubr.f32.gmra.mrb[0].mxu0 %v2437
    %v2507 = vpop.f32.mrb[0].mxu0
    %v2508 = vadd.f32 %v435, %v2507
    %v2509 = vpop.f32.mrb[0].mxu0
    %2510 = vdwg.mxu0
    %v2511 = vsel %vm442, %v2274, 0
    %v2513 = vsel %vm442, %v2280, 0
    %2515 = vmatprep.subr.mxu0 0.0
    %2516 = vmatpush1.xpose.msra.mxu0 %v2513
    %2517 = vmatprep.subr.mxu0 0.0
    %2518 = vmatpush1.xpose.msra.mxu0 0.0
    %2519 = vmatprep.subr.mxu0 0.0
    %2520 = vmatpush1.xpose.msra.mxu0 0.0
    %2521 = vmatprep.subr.mxu0 0.0
    %2522 = vmatpush1.xpose.msra.mxu0 0.0
    %2523 = vmatprep.subr.mxu0 0.0
    %2524 = vmatpush1.xpose.msra.mxu0 0.0
    %2525 = vmatprep.subr.mxu0 0.0
    %2526 = vmatpush1.xpose.msra.mxu0 0.0
    %2527 = vmatprep.subr.mxu0 0.0
    %2528 = vmatpush1.xpose.msra.mxu0 0.0
    %2529 = vmatprep.subr.mxu0 0.0
    %2530 = vmatpush1.xpose.msra.mxu0 0.0
    %2531 = vmatprep.subr.mxu0 0.0
    %2532 = vmatpush1.xpose.msra.mxu0 0.0
    %2533 = vmatprep.subr.mxu0 0.0
    %2534 = vmatpush1.xpose.msra.mxu0 0.0
    %2535 = vmatprep.subr.mxu0 0.0
    %2536 = vmatpush1.xpose.msra.mxu0 0.0
    %2537 = vmatprep.subr.mxu0 0.0
    %2538 = vmatpush1.xpose.msra.mxu0 0.0
    %2539 = vmatprep.subr.mxu0 0.0
    %2540 = vmatpush1.xpose.msra.mxu0 0.0
    %2541 = vmatprep.subr.mxu0 0.0
    %2542 = vmatpush1.xpose.msra.mxu0 0.0
    %2543 = vmatprep.subr.mxu0 0.0
    %2544 = vmatpush1.xpose.msra.mxu0 0.0
    %2545 = vmatprep.subr.mxu0 0.0
    %2546 = vmatpush1.xpose.msra.mxu0 0.0
    %2547 = vmatprep.subr.mxu0 0.0
    %2548 = vmatpush1.xpose.msra.mxu0 0.0
    %2549 = vmatprep.subr.mxu0 0.0
    %2550 = vmatpush1.xpose.msra.mxu0 0.0
    %2551 = vmatprep.subr.mxu0 0.0
    %2552 = vmatpush1.xpose.msra.mxu0 0.0
    %2553 = vmatprep.subr.mxu0 0.0
    %2554 = vmatpush1.xpose.msra.mxu0 0.0
    %2555 = vmatprep.subr.mxu0 0.0
    %2556 = vmatpush1.xpose.msra.mxu0 0.0
    %2557 = vmatprep.subr.mxu0 0.0
    %2558 = vmatpush1.xpose.msra.mxu0 0.0
    %2559 = vmatprep.subr.mxu0 0.0
    %2560 = vmatpush1.xpose.msra.mxu0 0.0
    %2561 = vmatprep.subr.mxu0 0.0
    %2562 = vmatpush1.xpose.msra.mxu0 0.0
    %2563 = vmatprep.subr.mxu0 0.0
    %2564 = vmatpush1.xpose.msra.mxu0 0.0
    %2565 = vmatprep.subr.mxu0 0.0
    %2566 = vmatpush1.xpose.msra.mxu0 0.0
    %2567 = vmatprep.subr.mxu0 0.0
    %2568 = vmatpush1.xpose.msra.mxu0 0.0
    %2569 = vmatprep.subr.mxu0 0.0
    %2570 = vmatpush1.xpose.msra.mxu0 0.0
    %2571 = vmatprep.subr.mxu0 0.0
    %2572 = vmatpush1.xpose.msra.mxu0 0.0
    %2573 = vmatprep.subr.mxu0 0.0
    %2574 = vmatpush1.xpose.msra.mxu0 0.0
    %2575 = vmatprep.subr.mxu0 0.0
    %2576 = vmatpush1.xpose.msra.mxu0 0.0
    %2577 = vmatprep.subr.mxu0 0.0
    %2578 = vmatpush1.xpose.msra.mxu0 0.0
    %2579 = vmatprep.mubr.f32.mxu0 0.0
    %2580 = vmatmul.mubr.f32.gmra.mrb[0].mxu0 %v2511
    %v2581 = vpop.f32.mrb[0].mxu0
    %v2582 = vadd.f32 %v439, %v2581
    %v2583 = vpop.f32.mrb[0].mxu0
    %2584 = vdwg.mxu0
    %v2585 = vsel %vm739, %v2360, -inf
    %2586 = vmax.xlane.f32.xlu0 %v2585
    %v2587 = vpop.xlane.xlu0 %2586
    %v2588 = vsel %vm739, %v2434, -inf
    %2589 = vmax.xlane.f32.xlu0 %v2588
    %v2590 = vpop.xlane.xlu0 %2589
    %v2591 = vsel %vm739, %v2508, -inf
    %2592 = vmax.xlane.f32.xlu0 %v2591
    %v2593 = vpop.xlane.xlu0 %2592
    %v2594 = vsel %vm739, %v2582, -inf
    %2595 = vmax.xlane.f32.xlu0 %v2594
    %v2596 = vpop.xlane.xlu0 %2595
    %v2597 = vsub.f32 %v2360, %v2587
    %v2598 = vsub.f32 %v2434, %v2590
    %v2599 = vsub.f32 %v2508, %v2593
    %v2600 = vsub.f32 %v2582, %v2596
    %v2601 = vmul.f32 %v2597, 1.442695
    %v2602 = vpow.pop %v2601
    %v2603 = vmul.f32 %v2598, 1.442695
    %v2604 = vpow.pop %v2603
    %v2605 = vmul.f32 %v2599, 1.442695
    %v2606 = vpow.pop %v2605
    %v2607 = vmul.f32 %v2600, 1.442695
    %v2608 = vpow.pop %v2607
    %v2609 = vsel %vm739, %v2602, 0.0
    %2610 = vadd.xlane.f32.xlu0 %v2609
    %v2611 = vpop.xlane.xlu0 %2610
    %v2612 = vsel %vm739, %v2604, 0.0
    %2613 = vadd.xlane.f32.xlu0 %v2612
    %v2614 = vpop.xlane.xlu0 %2613
    %v2615 = vsel %vm739, %v2606, 0.0
    %2616 = vadd.xlane.f32.xlu0 %v2615
    %v2617 = vpop.xlane.xlu0 %2616
    %v2618 = vsel %vm739, %v2608, 0.0
    %2619 = vadd.xlane.f32.xlu0 %v2618
    %v2620 = vpop.xlane.xlu0 %2619
    %v2621 = vrcp.pop %v2611
    %v2622 = vrcp.pop %v2614
    %v2623 = vrcp.pop %v2617
    %v2624 = vrcp.pop %v2620
    %v2625 = vmul.f32 %v2602, %v2621
    %v2626 = vmul.f32 %v2604, %v2622
    %v2627 = vmul.f32 %v2606, %v2623
    %v2628 = vmul.f32 %v2608, %v2624
    %v2630 = vsel %vm739, %v2625, 0
    %2632 = vmatprep.subr.mxu0 0.0
    %2633 = vmatpush1.msra.mxu0 %v2267
    %2634 = vmatprep.subr.mxu0 0.0
    %2635 = vmatpush1.msra.mxu0 0.0
    %2636 = vmatprep.subr.mxu0 0.0
    %2637 = vmatpush1.msra.mxu0 0.0
    %2638 = vmatprep.subr.mxu0 0.0
    %2639 = vmatpush1.msra.mxu0 0.0
    %2640 = vmatprep.subr.mxu0 0.0
    %2641 = vmatpush1.msra.mxu0 0.0
    %2642 = vmatprep.subr.mxu0 0.0
    %2643 = vmatpush1.msra.mxu0 0.0
    %2644 = vmatprep.subr.mxu0 0.0
    %2645 = vmatpush1.msra.mxu0 0.0
    %2646 = vmatprep.subr.mxu0 0.0
    %2647 = vmatpush1.msra.mxu0 0.0
    %2648 = vmatprep.subr.mxu0 0.0
    %2649 = vmatpush1.msra.mxu0 0.0
    %2650 = vmatprep.subr.mxu0 0.0
    %2651 = vmatpush1.msra.mxu0 0.0
    %2652 = vmatprep.subr.mxu0 0.0
    %2653 = vmatpush1.msra.mxu0 0.0
    %2654 = vmatprep.subr.mxu0 0.0
    %2655 = vmatpush1.msra.mxu0 0.0
    %2656 = vmatprep.subr.mxu0 0.0
    %2657 = vmatpush1.msra.mxu0 0.0
    %2658 = vmatprep.subr.mxu0 0.0
    %2659 = vmatpush1.msra.mxu0 0.0
    %2660 = vmatprep.subr.mxu0 0.0
    %2661 = vmatpush1.msra.mxu0 0.0
    %2662 = vmatprep.subr.mxu0 0.0
    %2663 = vmatpush1.msra.mxu0 0.0
    %2664 = vmatprep.subr.mxu0 0.0
    %2665 = vmatpush1.msra.mxu0 0.0
    %2666 = vmatprep.subr.mxu0 0.0
    %2667 = vmatpush1.msra.mxu0 0.0
    %2668 = vmatprep.subr.mxu0 0.0
    %2669 = vmatpush1.msra.mxu0 0.0
    %2670 = vmatprep.subr.mxu0 0.0
    %2671 = vmatpush1.msra.mxu0 0.0
    %2672 = vmatprep.subr.mxu0 0.0
    %2673 = vmatpush1.msra.mxu0 0.0
    %2674 = vmatprep.subr.mxu0 0.0
    %2675 = vmatpush1.msra.mxu0 0.0
    %2676 = vmatprep.subr.mxu0 0.0
    %2677 = vmatpush1.msra.mxu0 0.0
    %2678 = vmatprep.subr.mxu0 0.0
    %2679 = vmatpush1.msra.mxu0 0.0
    %2680 = vmatprep.subr.mxu0 0.0
    %2681 = vmatpush1.msra.mxu0 0.0
    %2682 = vmatprep.subr.mxu0 0.0
    %2683 = vmatpush1.msra.mxu0 0.0
    %2684 = vmatprep.subr.mxu0 0.0
    %2685 = vmatpush1.msra.mxu0 0.0
    %2686 = vmatprep.subr.mxu0 0.0
    %2687 = vmatpush1.msra.mxu0 0.0
    %2688 = vmatprep.subr.mxu0 0.0
    %2689 = vmatpush1.msra.mxu0 0.0
    %2690 = vmatprep.subr.mxu0 0.0
    %2691 = vmatpush1.msra.mxu0 0.0
    %2692 = vmatprep.subr.mxu0 0.0
    %2693 = vmatpush1.msra.mxu0 0.0
    %2694 = vmatprep.subr.mxu0 0.0
    %2695 = vmatpush1.msra.mxu0 0.0
    %2696 = vmatprep.mubr.f32.mxu0 0.0
    %2697 = vmatmul.mubr.f32.gmra.mrb[0].mxu0 %v2630
    %v2698 = vpop.f32.mrb[0].mxu0
    %v2699 = vadd.f32 0.0, %v2698
    %v2700 = vpop.f32.mrb[0].mxu0
    %2701 = vdwg.mxu0
    %v2703 = vsel %vm739, %v2626, 0
    %2705 = vmatprep.subr.mxu0 0.0
    %2706 = vmatpush1.msra.mxu0 %v2268
    %2707 = vmatprep.subr.mxu0 0.0
    %2708 = vmatpush1.msra.mxu0 0.0
    %2709 = vmatprep.subr.mxu0 0.0
    %2710 = vmatpush1.msra.mxu0 0.0
    %2711 = vmatprep.subr.mxu0 0.0
    %2712 = vmatpush1.msra.mxu0 0.0
    %2713 = vmatprep.subr.mxu0 0.0
    %2714 = vmatpush1.msra.mxu0 0.0
    %2715 = vmatprep.subr.mxu0 0.0
    %2716 = vmatpush1.msra.mxu0 0.0
    %2717 = vmatprep.subr.mxu0 0.0
    %2718 = vmatpush1.msra.mxu0 0.0
    %2719 = vmatprep.subr.mxu0 0.0
    %2720 = vmatpush1.msra.mxu0 0.0
    %2721 = vmatprep.subr.mxu0 0.0
    %2722 = vmatpush1.msra.mxu0 0.0
    %2723 = vmatprep.subr.mxu0 0.0
    %2724 = vmatpush1.msra.mxu0 0.0
    %2725 = vmatprep.subr.mxu0 0.0
    %2726 = vmatpush1.msra.mxu0 0.0
    %2727 = vmatprep.subr.mxu0 0.0
    %2728 = vmatpush1.msra.mxu0 0.0
    %2729 = vmatprep.subr.mxu0 0.0
    %2730 = vmatpush1.msra.mxu0 0.0
    %2731 = vmatprep.subr.mxu0 0.0
    %2732 = vmatpush1.msra.mxu0 0.0
    %2733 = vmatprep.subr.mxu0 0.0
    %2734 = vmatpush1.msra.mxu0 0.0
    %2735 = vmatprep.subr.mxu0 0.0
    %2736 = vmatpush1.msra.mxu0 0.0
    %2737 = vmatprep.subr.mxu0 0.0
    %2738 = vmatpush1.msra.mxu0 0.0
    %2739 = vmatprep.subr.mxu0 0.0
    %2740 = vmatpush1.msra.mxu0 0.0
    %2741 = vmatprep.subr.mxu0 0.0
    %2742 = vmatpush1.msra.mxu0 0.0
    %2743 = vmatprep.subr.mxu0 0.0
    %2744 = vmatpush1.msra.mxu0 0.0
    %2745 = vmatprep.subr.mxu0 0.0
    %2746 = vmatpush1.msra.mxu0 0.0
    %2747 = vmatprep.subr.mxu0 0.0
    %2748 = vmatpush1.msra.mxu0 0.0
    %2749 = vmatprep.subr.mxu0 0.0
    %2750 = vmatpush1.msra.mxu0 0.0
    %2751 = vmatprep.subr.mxu0 0.0
    %2752 = vmatpush1.msra.mxu0 0.0
    %2753 = vmatprep.subr.mxu0 0.0
    %2754 = vmatpush1.msra.mxu0 0.0
    %2755 = vmatprep.subr.mxu0 0.0
    %2756 = vmatpush1.msra.mxu0 0.0
    %2757 = vmatprep.subr.mxu0 0.0
    %2758 = vmatpush1.msra.mxu0 0.0
    %2759 = vmatprep.subr.mxu0 0.0
    %2760 = vmatpush1.msra.mxu0 0.0
    %2761 = vmatprep.subr.mxu0 0.0
    %2762 = vmatpush1.msra.mxu0 0.0
    %2763 = vmatprep.subr.mxu0 0.0
    %2764 = vmatpush1.msra.mxu0 0.0
    %2765 = vmatprep.subr.mxu0 0.0
    %2766 = vmatpush1.msra.mxu0 0.0
    %2767 = vmatprep.subr.mxu0 0.0
    %2768 = vmatpush1.msra.mxu0 0.0
    %2769 = vmatprep.mubr.f32.mxu0 0.0
    %2770 = vmatmul.mubr.f32.gmra.mrb[0].mxu0 %v2703
    %v2771 = vpop.f32.mrb[0].mxu0
    %v2772 = vadd.f32 0.0, %v2771
    %v2773 = vpop.f32.mrb[0].mxu0
    %2774 = vdwg.mxu0
    %v2776 = vsel %vm739, %v2627, 0
    %2778 = vmatprep.subr.mxu0 0.0
    %2779 = vmatpush1.msra.mxu0 %v2284
    %2780 = vmatprep.subr.mxu0 0.0
    %2781 = vmatpush1.msra.mxu0 0.0
    %2782 = vmatprep.subr.mxu0 0.0
    %2783 = vmatpush1.msra.mxu0 0.0
    %2784 = vmatprep.subr.mxu0 0.0
    %2785 = vmatpush1.msra.mxu0 0.0
    %2786 = vmatprep.subr.mxu0 0.0
    %2787 = vmatpush1.msra.mxu0 0.0
    %2788 = vmatprep.subr.mxu0 0.0
    %2789 = vmatpush1.msra.mxu0 0.0
    %2790 = vmatprep.subr.mxu0 0.0
    %2791 = vmatpush1.msra.mxu0 0.0
    %2792 = vmatprep.subr.mxu0 0.0
    %2793 = vmatpush1.msra.mxu0 0.0
    %2794 = vmatprep.subr.mxu0 0.0
    %2795 = vmatpush1.msra.mxu0 0.0
    %2796 = vmatprep.subr.mxu0 0.0
    %2797 = vmatpush1.msra.mxu0 0.0
    %2798 = vmatprep.subr.mxu0 0.0
    %2799 = vmatpush1.msra.mxu0 0.0
    %2800 = vmatprep.subr.mxu0 0.0
    %2801 = vmatpush1.msra.mxu0 0.0
    %2802 = vmatprep.subr.mxu0 0.0
    %2803 = vmatpush1.msra.mxu0 0.0
    %2804 = vmatprep.subr.mxu0 0.0
    %2805 = vmatpush1.msra.mxu0 0.0
    %2806 = vmatprep.subr.mxu0 0.0
    %2807 = vmatpush1.msra.mxu0 0.0
    %2808 = vmatprep.subr.mxu0 0.0
    %2809 = vmatpush1.msra.mxu0 0.0
    %2810 = vmatprep.subr.mxu0 0.0
    %2811 = vmatpush1.msra.mxu0 0.0
    %2812 = vmatprep.subr.mxu0 0.0
    %2813 = vmatpush1.msra.mxu0 0.0
    %2814 = vmatprep.subr.mxu0 0.0
    %2815 = vmatpush1.msra.mxu0 0.0
    %2816 = vmatprep.subr.mxu0 0.0
    %2817 = vmatpush1.msra.mxu0 0.0
    %2818 = vmatprep.subr.mxu0 0.0
    %2819 = vmatpush1.msra.mxu0 0.0
    %2820 = vmatprep.subr.mxu0 0.0
    %2821 = vmatpush1.msra.mxu0 0.0
    %2822 = vmatprep.subr.mxu0 0.0
    %2823 = vmatpush1.msra.mxu0 0.0
    %2824 = vmatprep.subr.mxu0 0.0
    %2825 = vmatpush1.msra.mxu0 0.0
    %2826 = vmatprep.subr.mxu0 0.0
    %2827 = vmatpush1.msra.mxu0 0.0
    %2828 = vmatprep.subr.mxu0 0.0
    %2829 = vmatpush1.msra.mxu0 0.0
    %2830 = vmatprep.subr.mxu0 0.0
    %2831 = vmatpush1.msra.mxu0 0.0
    %2832 = vmatprep.subr.mxu0 0.0
    %2833 = vmatpush1.msra.mxu0 0.0
    %2834 = vmatprep.subr.mxu0 0.0
    %2835 = vmatpush1.msra.mxu0 0.0
    %2836 = vmatprep.subr.mxu0 0.0
    %2837 = vmatpush1.msra.mxu0 0.0
    %2838 = vmatprep.subr.mxu0 0.0
    %2839 = vmatpush1.msra.mxu0 0.0
    %2840 = vmatprep.subr.mxu0 0.0
    %2841 = vmatpush1.msra.mxu0 0.0
    %2842 = vmatprep.mubr.f32.mxu0 0.0
    %2843 = vmatmul.mubr.f32.gmra.mrb[0].mxu0 %v2776
    %v2844 = vpop.f32.mrb[0].mxu0
    %v2845 = vadd.f32 0.0, %v2844
    %v2846 = vpop.f32.mrb[0].mxu0
    %2847 = vdwg.mxu0
    %v2849 = vsel %vm739, %v2628, 0
    %2851 = vmatprep.subr.mxu0 0.0
    %2852 = vmatpush1.msra.mxu0 %v2286
    %2853 = vmatprep.subr.mxu0 0.0
    %2854 = vmatpush1.msra.mxu0 0.0
    %2855 = vmatprep.subr.mxu0 0.0
    %2856 = vmatpush1.msra.mxu0 0.0
    %2857 = vmatprep.subr.mxu0 0.0
    %2858 = vmatpush1.msra.mxu0 0.0
    %2859 = vmatprep.subr.mxu0 0.0
    %2860 = vmatpush1.msra.mxu0 0.0
    %2861 = vmatprep.subr.mxu0 0.0
    %2862 = vmatpush1.msra.mxu0 0.0
    %2863 = vmatprep.subr.mxu0 0.0
    %2864 = vmatpush1.msra.mxu0 0.0
    %2865 = vmatprep.subr.mxu0 0.0
    %2866 = vmatpush1.msra.mxu0 0.0
    %2867 = vmatprep.subr.mxu0 0.0
    %2868 = vmatpush1.msra.mxu0 0.0
    %2869 = vmatprep.subr.mxu0 0.0
    %2870 = vmatpush1.msra.mxu0 0.0
    %2871 = vmatprep.subr.mxu0 0.0
    %2872 = vmatpush1.msra.mxu0 0.0
    %2873 = vmatprep.subr.mxu0 0.0
    %2874 = vmatpush1.msra.mxu0 0.0
    %2875 = vmatprep.subr.mxu0 0.0
    %2876 = vmatpush1.msra.mxu0 0.0
    %2877 = vmatprep.subr.mxu0 0.0
    %2878 = vmatpush1.msra.mxu0 0.0
    %2879 = vmatprep.subr.mxu0 0.0
    %2880 = vmatpush1.msra.mxu0 0.0
    %2881 = vmatprep.subr.mxu0 0.0
    %2882 = vmatpush1.msra.mxu0 0.0
    %2883 = vmatprep.subr.mxu0 0.0
    %2884 = vmatpush1.msra.mxu0 0.0
    %2885 = vmatprep.subr.mxu0 0.0
    %2886 = vmatpush1.msra.mxu0 0.0
    %2887 = vmatprep.subr.mxu0 0.0
    %2888 = vmatpush1.msra.mxu0 0.0
    %2889 = vmatprep.subr.mxu0 0.0
    %2890 = vmatpush1.msra.mxu0 0.0
    %2891 = vmatprep.subr.mxu0 0.0
    %2892 = vmatpush1.msra.mxu0 0.0
    %2893 = vmatprep.subr.mxu0 0.0
    %2894 = vmatpush1.msra.mxu0 0.0
    %2895 = vmatprep.subr.mxu0 0.0
    %2896 = vmatpush1.msra.mxu0 0.0
    %2897 = vmatprep.subr.mxu0 0.0
    %2898 = vmatpush1.msra.mxu0 0.0
    %2899 = vmatprep.subr.mxu0 0.0
    %2900 = vmatpush1.msra.mxu0 0.0
    %2901 = vmatprep.subr.mxu0 0.0
    %2902 = vmatpush1.msra.mxu0 0.0
    %2903 = vmatprep.subr.mxu0 0.0
    %2904 = vmatpush1.msra.mxu0 0.0
    %2905 = vmatprep.subr.mxu0 0.0
    %2906 = vmatpush1.msra.mxu0 0.0
    %2907 = vmatprep.subr.mxu0 0.0
    %2908 = vmatpush1.msra.mxu0 0.0
    %2909 = vmatprep.subr.mxu0 0.0
    %2910 = vmatpush1.msra.mxu0 0.0
    %2911 = vmatprep.subr.mxu0 0.0
    %2912 = vmatpush1.msra.mxu0 0.0
    %2913 = vmatprep.subr.mxu0 0.0
    %2914 = vmatpush1.msra.mxu0 0.0
    %2915 = vmatprep.mubr.f32.mxu0 0.0
    %2916 = vmatmul.mubr.f32.gmra.mrb[0].mxu0 %v2849
    %v2917 = vpop.f32.mrb[0].mxu0
    %v2918 = vadd.f32 0.0, %v2917
    %v2919 = vpop.f32.mrb[0].mxu0
    %2920 = vdwg.mxu0
    %2923 = vrot.lane.b32.xlu0 %v2845, 64
    %v2924 = vpop.permute.xlu0 %2923
    %2925 = vrot.lane.b32.xlu0 %v2918, 64
    %v2926 = vpop.permute.xlu0 %2925
    %v2929 = vsel %vm442, %v2699, %v2924
    %v2930 = vsel %vm442, %v2772, %v2926
    %v2931 = vpack.c.bf16 %v2930, %v2929
    %s2932 = scalar_lea.vmem %s4, 64
    %v2933 = vld [vmem:[%s2932] sm:$0xf]
    %v2934 = vld [vmem:[%s2932 + $0x4] sm:$0xf]
    %v2935 = vld [vmem:[%s2932 + $0x8] sm:$0xf]
    %v2936 = vld [vmem:[%s2932 + $0xc] sm:$0xf]
    %v2937 = vld [vmem:[%s2932 + $0x10] sm:$0xf]
    %v2938 = vld [vmem:[%s2932 + $0x14] sm:$0xf]
    %v2939 = vld [vmem:[%s2932 + $0x18] sm:$0xf]
    %v2940 = vld [vmem:[%s2932 + $0x1c] sm:$0xf]
    %v2941 = vld [vmem:[%s2932 + $0x20] sm:$0xf]
    %v2942 = vld [vmem:[%s2932 + $0x24] sm:$0xf]
    %v2943 = vld [vmem:[%s2932 + $0x28] sm:$0xf]
    %v2944 = vld [vmem:[%s2932 + $0x2c] sm:$0xf]
    %v2945 = vld [vmem:[%s2932 + $0x30] sm:$0xf]
    %v2946 = vld [vmem:[%s2932 + $0x34] sm:$0xf]
    %v2947 = vld [vmem:[%s2932 + $0x38] sm:$0xf]
    %v2948 = vld [vmem:[%s2932 + $0x3c] sm:$0xf]
    %v2949 = vld [vmem:[%s2247 + $0x3] sm:$0x1]
    %v2950 = vlaneseq
    %v2951 = vshrl.u32 %v2950, 7
    %v2952 = vsub.s32 0, %v2951
    %v2953 = vrot.slane %v2949, %v2952
    %v2970 = vunpack.c.l.b16 %v2933
    %v2971 = vunpack.c.l.b16 %v2934
    %v2972 = vunpack.c.l.b16 %v2935
    %v2973 = vunpack.c.l.b16 %v2936
    %v2974 = vunpack.c.l.b16 %v2937
    %v2975 = vunpack.c.l.b16 %v2938
    %v2976 = vunpack.c.l.b16 %v2939
    %v2977 = vunpack.c.l.b16 %v2940
    %v2978 = vunpack.c.l.b16 %v2941
    %v2979 = vunpack.c.l.b16 %v2942
    %v2980 = vunpack.c.l.b16 %v2943
    %v2981 = vunpack.c.l.b16 %v2944
    %v2982 = vunpack.c.l.b16 %v2945
    %v2983 = vunpack.c.l.b16 %v2946
    %v2984 = vunpack.c.l.b16 %v2947
    %v2985 = vunpack.c.l.b16 %v2948
    %v2986 = vpack.c.b16 %v2971, %v2970
    %v2987 = vpack.c.b16 %v2973, %v2972
    %v2988 = vpack.c.b16 %v2975, %v2974
    %v2989 = vpack.c.b16 %v2977, %v2976
    %v2990 = vpack.c.b16 %v2979, %v2978
    %v2991 = vpack.c.b16 %v2981, %v2980
    %v2992 = vpack.c.b16 %v2983, %v2982
    %v2993 = vpack.c.b16 %v2985, %v2984
    %3002 = vmatprep.subr.bf16.mxu0 0
    %3003 = vmatpush1.bf16.msra.mxu0 %v2986
    %3004 = vmatprep.subr.bf16.mxu0 0
    %3005 = vmatpush1.bf16.msra.mxu0 %v2987
    %3006 = vmatprep.subr.bf16.mxu0 0
    %3007 = vmatpush1.bf16.msra.mxu0 %v2988
    %3008 = vmatprep.subr.bf16.mxu0 0
    %3009 = vmatpush1.bf16.msra.mxu0 %v2989
    %3010 = vmatprep.subr.bf16.mxu0 0
    %3011 = vmatpush1.bf16.msra.mxu0 %v2990
    %3012 = vmatprep.subr.bf16.mxu0 0
    %3013 = vmatpush1.bf16.msra.mxu0 %v2991
    %3014 = vmatprep.subr.bf16.mxu0 0
    %3015 = vmatpush1.bf16.msra.mxu0 %v2992
    %3016 = vmatprep.subr.bf16.mxu0 0
    %3017 = vmatpush1.bf16.msra.mxu0 %v2993
    %3018 = vmatprep.subr.bf16.mxu0 0
    %3019 = vmatpush1.bf16.msra.mxu0 0
    %3020 = vmatprep.subr.bf16.mxu0 0
    %3021 = vmatpush1.bf16.msra.mxu0 0
    %3022 = vmatprep.subr.bf16.mxu0 0
    %3023 = vmatpush1.bf16.msra.mxu0 0
    %3024 = vmatprep.subr.bf16.mxu0 0
    %3025 = vmatpush1.bf16.msra.mxu0 0
    %3026 = vmatprep.subr.bf16.mxu0 0
    %3027 = vmatpush1.bf16.msra.mxu0 0
    %3028 = vmatprep.subr.bf16.mxu0 0
    %3029 = vmatpush1.bf16.msra.mxu0 0
    %3030 = vmatprep.subr.bf16.mxu0 0
    %3031 = vmatpush1.bf16.msra.mxu0 0
    %3032 = vmatprep.subr.bf16.mxu0 0
    %3033 = vmatpush1.bf16.msra.mxu0 0
    %3034 = vmatprep.mubr.bf16.mxu0 0
    %3035 = vmatmul.mubr.bf16.gmra.mrb[0].mxu0 %v2931
    %v3036 = vpop.f32.mrb[0].mxu0
    %v3037 = vadd.f32 %v2953, %v3036
    %v3038 = vpop.f32.mrb[0].mxu0
    %v3039 = vpop.f32.mrb[0].mxu0
    %v3040 = vadd.f32 %v2953, %v3039
    %v3041 = vpop.f32.mrb[0].mxu0
    %3042 = vdwg.mxu0
    %v3043 = vadd.f32 %v3037, %v1999
    %v3044 = vadd.f32 %v3040, %v2000
    %v3045 = vld [vmem:[%s2247 + $0x5] sm:$0x1]
    %v3046 = vld [vmem:[%s2247 + $0x6] sm:$0x1]
    %3047 = vadd.xlane.f32.xlu0 %v3043
    %v3048 = vpop.xlane.xlu0 %3047
    %3049 = vadd.xlane.f32.xlu0 %v3044
    %v3050 = vpop.xlane.xlu0 %3049
    %v3051 = vmul.f32 %v3043, %v3043
    %v3052 = vmul.f32 %v3044, %v3044
    %3053 = vadd.xlane.f32.xlu0 %v3051
    %v3054 = vpop.xlane.xlu0 %3053
    %3055 = vadd.xlane.f32.xlu0 %v3052
    %v3056 = vpop.xlane.xlu0 %3055
    %v3057 = vmul.f32 %v3048, 0.0078125
    %v3058 = vmul.f32 %v3050, 0.0078125
    %v3059 = vmul.f32 %v3054, 0.0078125
    %v3060 = vmul.f32 %v3056, 0.0078125
    %v3061 = vmul.f32 %v3057, %v3057
    %v3062 = vmul.f32 %v3058, %v3058
    %v3063 = vsub.f32 %v3059, %v3061
    %v3064 = vsub.f32 %v3060, %v3062
    %v3065 = vsub.f32 %v3043, %v3057
    %v3066 = vsub.f32 %v3044, %v3058
    %v3067 = vadd.f32 %v3063, 1e-12
    %v3068 = vadd.f32 %v3064, 1e-12
    %v3069 = vrsqrt.pop %v3067
    %v3070 = vrsqrt.pop %v3068
    %v3071 = vmul.f32 %v3065, %v3069
    %v3072 = vmul.f32 %v3066, %v3070
    %v3073 = vlaneseq
    %v3074 = vshrl.u32 %v3073, 7
    %v3075 = vsub.s32 0, %v3074
    %v3076 = vrot.slane %v3045, %v3075
    %v3077 = vmul.f32 %v3071, %v3076
    %v3078 = vmul.f32 %v3072, %v3076
    %v3079 = vlaneseq
    %v3080 = vshrl.u32 %v3079, 7
    %v3081 = vsub.s32 0, %v3080
    %v3082 = vrot.slane %v3046, %v3081
    %v3083 = vadd.f32 %v3077, %v3082
    %v3084 = vadd.f32 %v3078, %v3082
    %v3085 = vpack.c.bf16 %v3084, %v3083
    %s3086 = scalar_lea.vmem [#allocation4], 256
    %v3087 = vld [vmem:[%s3086] sm:$0xff]
    %v3088 = vld [vmem:[%s3086 + $0x8] sm:$0xff]
    %v3089 = vld [vmem:[%s3086 + $0x10] sm:$0xff]
    %v3090 = vld [vmem:[%s3086 + $0x18] sm:$0xff]
    %v3091 = vld [vmem:[%s3086 + $0x20] sm:$0xff]
    %v3092 = vld [vmem:[%s3086 + $0x28] sm:$0xff]
    %v3093 = vld [vmem:[%s3086 + $0x30] sm:$0xff]
    %v3094 = vld [vmem:[%s3086 + $0x38] sm:$0xff]
    %v3095 = vld [vmem:[%s3086 + $0x40] sm:$0xff]
    %v3096 = vld [vmem:[%s3086 + $0x48] sm:$0xff]
    %v3097 = vld [vmem:[%s3086 + $0x50] sm:$0xff]
    %v3098 = vld [vmem:[%s3086 + $0x58] sm:$0xff]
    %v3099 = vld [vmem:[%s3086 + $0x60] sm:$0xff]
    %v3100 = vld [vmem:[%s3086 + $0x68] sm:$0xff]
    %v3101 = vld [vmem:[%s3086 + $0x70] sm:$0xff]
    %v3102 = vld [vmem:[%s3086 + $0x78] sm:$0xff]
    %v3103 = vld [vmem:[%s3086 + $0x80] sm:$0xff]
    %v3104 = vld [vmem:[%s3086 + $0x88] sm:$0xff]
    %v3105 = vld [vmem:[%s3086 + $0x90] sm:$0xff]
    %v3106 = vld [vmem:[%s3086 + $0x98] sm:$0xff]
    %v3107 = vld [vmem:[%s3086 + $0xa0] sm:$0xff]
    %v3108 = vld [vmem:[%s3086 + $0xa8] sm:$0xff]
    %v3109 = vld [vmem:[%s3086 + $0xb0] sm:$0xff]
    %v3110 = vld [vmem:[%s3086 + $0xb8] sm:$0xff]
    %v3111 = vld [vmem:[%s3086 + $0xc0] sm:$0xff]
    %v3112 = vld [vmem:[%s3086 + $0xc8] sm:$0xff]
    %v3113 = vld [vmem:[%s3086 + $0xd0] sm:$0xff]
    %v3114 = vld [vmem:[%s3086 + $0xd8] sm:$0xff]
    %v3115 = vld [vmem:[%s3086 + $0xe0] sm:$0xff]
    %v3116 = vld [vmem:[%s3086 + $0xe8] sm:$0xff]
    %v3117 = vld [vmem:[%s3086 + $0xf0] sm:$0xff]
    %v3118 = vld [vmem:[%s3086 + $0xf8] sm:$0xff]
    %s3119 = scalar_lea.vmem %s6, 4
    %v3120 = vld [vmem:[%s3119] sm:$0xf]
    %v3122 = vlaneseq
    %v3123 = vshrl.u32 %v3122, 7
    %v3124 = vsub.s32 0, %v3123
    %v3125 = vrot.slane %v3120, %v3124
    %v3126 = vlaneseq
    %v3127 = vshrl.u32 %v3126, 7
    %v3128 = vsub.s32 1, %v3127
    %v3129 = vrot.slane %v3120, %v3128
    %v3130 = vlaneseq
    %v3131 = vshrl.u32 %v3130, 7
    %v3132 = vsub.s32 2, %v3131
    %v3133 = vrot.slane %v3120, %v3132
    %v3134 = vlaneseq
    %v3135 = vshrl.u32 %v3134, 7
    %v3136 = vsub.s32 3, %v3135
    %v3137 = vrot.slane %v3120, %v3136
    %v3174 = vunpack.c.l.b16 %v3087
    %v3175 = vunpack.c.h.b16 %v3087
    %v3176 = vunpack.c.l.b16 %v3088
    %v3177 = vunpack.c.h.b16 %v3088
    %v3178 = vunpack.c.l.b16 %v3089
    %v3179 = vunpack.c.h.b16 %v3089
    %v3180 = vunpack.c.l.b16 %v3090
    %v3181 = vunpack.c.h.b16 %v3090
    %v3182 = vunpack.c.l.b16 %v3091
    %v3183 = vunpack.c.h.b16 %v3091
    %v3184 = vunpack.c.l.b16 %v3092
    %v3185 = vunpack.c.h.b16 %v3092
    %v3186 = vunpack.c.l.b16 %v3093
    %v3187 = vunpack.c.h.b16 %v3093
    %v3188 = vunpack.c.l.b16 %v3094
    %v3189 = vunpack.c.h.b16 %v3094
    %v3190 = vunpack.c.l.b16 %v3095
    %v3191 = vunpack.c.h.b16 %v3095
    %v3192 = vunpack.c.l.b16 %v3096
    %v3193 = vunpack.c.h.b16 %v3096
    %v3194 = vunpack.c.l.b16 %v3097
    %v3195 = vunpack.c.h.b16 %v3097
    %v3196 = vunpack.c.l.b16 %v3098
    %v3197 = vunpack.c.h.b16 %v3098
    %v3198 = vunpack.c.l.b16 %v3099
    %v3199 = vunpack.c.h.b16 %v3099
    %v3200 = vunpack.c.l.b16 %v3100
    %v3201 = vunpack.c.h.b16 %v3100
    %v3202 = vunpack.c.l.b16 %v3101
    %v3203 = vunpack.c.h.b16 %v3101
    %v3204 = vunpack.c.l.b16 %v3102
    %v3205 = vunpack.c.h.b16 %v3102
    %v3206 = vunpack.c.l.b16 %v3103
    %v3207 = vunpack.c.h.b16 %v3103
    %v3208 = vunpack.c.l.b16 %v3104
    %v3209 = vunpack.c.h.b16 %v3104
    %v3210 = vunpack.c.l.b16 %v3105
    %v3211 = vunpack.c.h.b16 %v3105
    %v3212 = vunpack.c.l.b16 %v3106
    %v3213 = vunpack.c.h.b16 %v3106
    %v3214 = vunpack.c.l.b16 %v3107
    %v3215 = vunpack.c.h.b16 %v3107
    %v3216 = vunpack.c.l.b16 %v3108
    %v3217 = vunpack.c.h.b16 %v3108
    %v3218 = vunpack.c.l.b16 %v3109
    %v3219 = vunpack.c.h.b16 %v3109
    %v3220 = vunpack.c.l.b16 %v3110
    %v3221 = vunpack.c.h.b16 %v3110
    %v3222 = vunpack.c.l.b16 %v3111
    %v3223 = vunpack.c.h.b16 %v3111
    %v3224 = vunpack.c.l.b16 %v3112
    %v3225 = vunpack.c.h.b16 %v3112
    %v3226 = vunpack.c.l.b16 %v3113
    %v3227 = vunpack.c.h.b16 %v3113
    %v3228 = vunpack.c.l.b16 %v3114
    %v3229 = vunpack.c.h.b16 %v3114
    %v3230 = vunpack.c.l.b16 %v3115
    %v3231 = vunpack.c.h.b16 %v3115
    %v3232 = vunpack.c.l.b16 %v3116
    %v3233 = vunpack.c.h.b16 %v3116
    %v3234 = vunpack.c.l.b16 %v3117
    %v3235 = vunpack.c.h.b16 %v3117
    %v3236 = vunpack.c.l.b16 %v3118
    %v3237 = vunpack.c.h.b16 %v3118
    %v3238 = vpack.c.b16 %v3178, %v3174
    %v3239 = vpack.c.b16 %v3179, %v3175
    %v3240 = vpack.c.b16 %v3180, %v3176
    %v3241 = vpack.c.b16 %v3181, %v3177
    %v3242 = vpack.c.b16 %v3186, %v3182
    %v3243 = vpack.c.b16 %v3187, %v3183
    %v3244 = vpack.c.b16 %v3188, %v3184
    %v3245 = vpack.c.b16 %v3189, %v3185
    %v3246 = vpack.c.b16 %v3194, %v3190
    %v3247 = vpack.c.b16 %v3195, %v3191
    %v3248 = vpack.c.b16 %v3196, %v3192
    %v3249 = vpack.c.b16 %v3197, %v3193
    %v3250 = vpack.c.b16 %v3202, %v3198
    %v3251 = vpack.c.b16 %v3203, %v3199
    %v3252 = vpack.c.b16 %v3204, %v3200
    %v3253 = vpack.c.b16 %v3205, %v3201
    %v3254 = vpack.c.b16 %v3210, %v3206
    %v3255 = vpack.c.b16 %v3211, %v3207
    %v3256 = vpack.c.b16 %v3212, %v3208
    %v3257 = vpack.c.b16 %v3213, %v3209
    %v3258 = vpack.c.b16 %v3218, %v3214
    %v3259 = vpack.c.b16 %v3219, %v3215
    %v3260 = vpack.c.b16 %v3220, %v3216
    %v3261 = vpack.c.b16 %v3221, %v3217
    %v3262 = vpack.c.b16 %v3226, %v3222
    %v3263 = vpack.c.b16 %v3227, %v3223
    %v3264 = vpack.c.b16 %v3228, %v3224
    %v3265 = vpack.c.b16 %v3229, %v3225
    %v3266 = vpack.c.b16 %v3234, %v3230
    %v3267 = vpack.c.b16 %v3235, %v3231
    %v3268 = vpack.c.b16 %v3236, %v3232
    %v3269 = vpack.c.b16 %v3237, %v3233
    %3302 = vmatprep.subr.bf16.mxu0 %v3239
    %3303 = vmatpush1.bf16.msra.mxu0 %v3238
    %3304 = vmatprep.subr.bf16.mxu0 %v3243
    %3305 = vmatpush1.bf16.msra.mxu0 %v3242
    %3306 = vmatprep.subr.bf16.mxu0 %v3247
    %3307 = vmatpush1.bf16.msra.mxu0 %v3246
    %3308 = vmatprep.subr.bf16.mxu0 %v3251
    %3309 = vmatpush1.bf16.msra.mxu0 %v3250
    %3310 = vmatprep.subr.bf16.mxu0 %v3255
    %3311 = vmatpush1.bf16.msra.mxu0 %v3254
    %3312 = vmatprep.subr.bf16.mxu0 %v3259
    %3313 = vmatpush1.bf16.msra.mxu0 %v3258
    %3314 = vmatprep.subr.bf16.mxu0 %v3263
    %3315 = vmatpush1.bf16.msra.mxu0 %v3262
    %3316 = vmatprep.subr.bf16.mxu0 %v3267
    %3317 = vmatpush1.bf16.msra.mxu0 %v3266
    %3318 = vmatprep.subr.bf16.mxu0 0
    %3319 = vmatpush1.bf16.msra.mxu0 0
    %3320 = vmatprep.subr.bf16.mxu0 0
    %3321 = vmatpush1.bf16.msra.mxu0 0
    %3322 = vmatprep.subr.bf16.mxu0 0
    %3323 = vmatpush1.bf16.msra.mxu0 0
    %3324 = vmatprep.subr.bf16.mxu0 0
    %3325 = vmatpush1.bf16.msra.mxu0 0
    %3326 = vmatprep.subr.bf16.mxu0 0
    %3327 = vmatpush1.bf16.msra.mxu0 0
    %3328 = vmatprep.subr.bf16.mxu0 0
    %3329 = vmatpush1.bf16.msra.mxu0 0
    %3330 = vmatprep.subr.bf16.mxu0 0
    %3331 = vmatpush1.bf16.msra.mxu0 0
    %3332 = vmatprep.subr.bf16.mxu0 0
    %3333 = vmatpush1.bf16.msra.mxu0 0
    %3334 = vmatprep.mubr.bf16.mxu0 0
    %3335 = vmatmul.mubr.bf16.gmra.mrb[0].mxu0 %v3085
    %v3336 = vpop.f32.mrb[0].mxu0
    %v3337 = vadd.f32 %v3125, %v3336
    %v3338 = vpop.f32.mrb[0].mxu0
    %v3339 = vadd.f32 %v3129, %v3338
    %v3340 = vpop.f32.mrb[0].mxu0
    %v3341 = vadd.f32 %v3125, %v3340
    %v3342 = vpop.f32.mrb[0].mxu0
    %v3343 = vadd.f32 %v3129, %v3342
    %3344 = vdwg.mxu0
    %3345 = vmatprep.subr.bf16.mxu0 %v3241
    %3346 = vmatpush1.bf16.msra.mxu0 %v3240
    %3347 = vmatprep.subr.bf16.mxu0 %v3245
    %3348 = vmatpush1.bf16.msra.mxu0 %v3244
    %3349 = vmatprep.subr.bf16.mxu0 %v3249
    %3350 = vmatpush1.bf16.msra.mxu0 %v3248
    %3351 = vmatprep.subr.bf16.mxu0 %v3253
    %3352 = vmatpush1.bf16.msra.mxu0 %v3252
    %3353 = vmatprep.subr.bf16.mxu0 %v3257
    %3354 = vmatpush1.bf16.msra.mxu0 %v3256
    %3355 = vmatprep.subr.bf16.mxu0 %v3261
    %3356 = vmatpush1.bf16.msra.mxu0 %v3260
    %3357 = vmatprep.subr.bf16.mxu0 %v3265
    %3358 = vmatpush1.bf16.msra.mxu0 %v3264
    %3359 = vmatprep.subr.bf16.mxu0 %v3269
    %3360 = vmatpush1.bf16.msra.mxu0 %v3268
    %3361 = vmatprep.subr.bf16.mxu0 0
    %3362 = vmatpush1.bf16.msra.mxu0 0
    %3363 = vmatprep.subr.bf16.mxu0 0
    %3364 = vmatpush1.bf16.msra.mxu0 0
    %3365 = vmatprep.subr.bf16.mxu0 0
    %3366 = vmatpush1.bf16.msra.mxu0 0
    %3367 = vmatprep.subr.bf16.mxu0 0
    %3368 = vmatpush1.bf16.msra.mxu0 0
    %3369 = vmatprep.subr.bf16.mxu0 0
    %3370 = vmatpush1.bf16.msra.mxu0 0
    %3371 = vmatprep.subr.bf16.mxu0 0
    %3372 = vmatpush1.bf16.msra.mxu0 0
    %3373 = vmatprep.subr.bf16.mxu0 0
    %3374 = vmatpush1.bf16.msra.mxu0 0
    %3375 = vmatprep.subr.bf16.mxu0 0
    %3376 = vmatpush1.bf16.msra.mxu0 0
    %3377 = vmatprep.mubr.bf16.mxu0 0
    %3378 = vmatmul.mubr.bf16.gmra.mrb[0].mxu0 %v3085
    %v3379 = vpop.f32.mrb[0].mxu0
    %v3380 = vadd.f32 %v3133, %v3379
    %v3381 = vpop.f32.mrb[0].mxu0
    %v3382 = vadd.f32 %v3137, %v3381
    %v3383 = vpop.f32.mrb[0].mxu0
    %v3384 = vadd.f32 %v3133, %v3383
    %v3385 = vpop.f32.mrb[0].mxu0
    %v3386 = vadd.f32 %v3137, %v3385
    %3387 = vdwg.mxu0
    %v3388 = vmul.f32 %v3337, %v3337
    %v3389 = vmul.f32 %v3339, %v3339
    %v3390 = vmul.f32 %v3380, %v3380
    %v3391 = vmul.f32 %v3382, %v3382
    %v3392 = vmul.f32 %v3341, %v3341
    %v3393 = vmul.f32 %v3343, %v3343
    %v3394 = vmul.f32 %v3384, %v3384
    %v3395 = vmul.f32 %v3386, %v3386
    %v3396 = vmul.f32 %v3337, %v3388
    %v3397 = vmul.f32 %v3339, %v3389
    %v3398 = vmul.f32 %v3380, %v3390
    %v3399 = vmul.f32 %v3382, %v3391
    %v3400 = vmul.f32 %v3341, %v3392
    %v3401 = vmul.f32 %v3343, %v3393
    %v3402 = vmul.f32 %v3384, %v3394
    %v3403 = vmul.f32 %v3386, %v3395
    %v3404 = vmul.f32 %v3396, 0.044715
    %v3405 = vmul.f32 %v3397, 0.044715
    %v3406 = vmul.f32 %v3398, 0.044715
    %v3407 = vmul.f32 %v3399, 0.044715
    %v3408 = vmul.f32 %v3400, 0.044715
    %v3409 = vmul.f32 %v3401, 0.044715
    %v3410 = vmul.f32 %v3402, 0.044715
    %v3411 = vmul.f32 %v3403, 0.044715
    %v3412 = vadd.f32 %v3337, %v3404
    %v3413 = vadd.f32 %v3339, %v3405
    %v3414 = vadd.f32 %v3380, %v3406
    %v3415 = vadd.f32 %v3382, %v3407
    %v3416 = vadd.f32 %v3341, %v3408
    %v3417 = vadd.f32 %v3343, %v3409
    %v3418 = vadd.f32 %v3384, %v3410
    %v3419 = vadd.f32 %v3386, %v3411
    %v3420 = vmul.f32 %v3412, 0.7978846
    %v3421 = vmul.f32 %v3413, 0.7978846
    %v3422 = vmul.f32 %v3414, 0.7978846
    %v3423 = vmul.f32 %v3415, 0.7978846
    %v3424 = vmul.f32 %v3416, 0.7978846
    %v3425 = vmul.f32 %v3417, 0.7978846
    %v3426 = vmul.f32 %v3418, 0.7978846
    %v3427 = vmul.f32 %v3419, 0.7978846
    %v3428 = vtanh.pop %v3420
    %v3429 = vtanh.pop %v3421
    %v3430 = vtanh.pop %v3422
    %v3431 = vtanh.pop %v3423
    %v3432 = vtanh.pop %v3424
    %v3433 = vtanh.pop %v3425
    %v3434 = vtanh.pop %v3426
    %v3435 = vtanh.pop %v3427
    %v3436 = vadd.f32 %v3428, 1.0
    %v3437 = vadd.f32 %v3429, 1.0
    %v3438 = vadd.f32 %v3430, 1.0
    %v3439 = vadd.f32 %v3431, 1.0
    %v3440 = vadd.f32 %v3432, 1.0
    %v3441 = vadd.f32 %v3433, 1.0
    %v3442 = vadd.f32 %v3434, 1.0
    %v3443 = vadd.f32 %v3435, 1.0
    %v3444 = vmul.f32 %v3436, 0.5
    %v3445 = vmul.f32 %v3437, 0.5
    %v3446 = vmul.f32 %v3438, 0.5
    %v3447 = vmul.f32 %v3439, 0.5
    %v3448 = vmul.f32 %v3440, 0.5
    %v3449 = vmul.f32 %v3441, 0.5
    %v3450 = vmul.f32 %v3442, 0.5
    %v3451 = vmul.f32 %v3443, 0.5
    %v3452 = vmul.f32 %v3337, %v3444
    %v3453 = vmul.f32 %v3339, %v3445
    %v3454 = vmul.f32 %v3380, %v3446
    %v3455 = vmul.f32 %v3382, %v3447
    %v3456 = vmul.f32 %v3341, %v3448
    %v3457 = vmul.f32 %v3343, %v3449
    %v3458 = vmul.f32 %v3384, %v3450
    %v3459 = vmul.f32 %v3386, %v3451
    %v3460 = vpack.c.bf16 %v3456, %v3452
    %v3461 = vpack.c.bf16 %v3457, %v3453
    %v3462 = vpack.c.bf16 %v3458, %v3454
    %v3463 = vpack.c.bf16 %v3459, %v3455
    %s3464 = scalar_lea.vmem [#allocation6], 256
    %v3465 = vld [vmem:[%s3464] sm:$0xf]
    %v3466 = vld [vmem:[%s3464 + $0x4] sm:$0xf]
    %v3467 = vld [vmem:[%s3464 + $0x8] sm:$0xf]
    %v3468 = vld [vmem:[%s3464 + $0xc] sm:$0xf]
    %v3469 = vld [vmem:[%s3464 + $0x10] sm:$0xf]
    %v3470 = vld [vmem:[%s3464 + $0x14] sm:$0xf]
    %v3471 = vld [vmem:[%s3464 + $0x18] sm:$0xf]
    %v3472 = vld [vmem:[%s3464 + $0x1c] sm:$0xf]
    %v3473 = vld [vmem:[%s3464 + $0x20] sm:$0xf]
    %v3474 = vld [vmem:[%s3464 + $0x24] sm:$0xf]
    %v3475 = vld [vmem:[%s3464 + $0x28] sm:$0xf]
    %v3476 = vld [vmem:[%s3464 + $0x2c] sm:$0xf]
    %v3477 = vld [vmem:[%s3464 + $0x30] sm:$0xf]
    %v3478 = vld [vmem:[%s3464 + $0x34] sm:$0xf]
    %v3479 = vld [vmem:[%s3464 + $0x38] sm:$0xf]
    %v3480 = vld [vmem:[%s3464 + $0x3c] sm:$0xf]
    %v3481 = vld [vmem:[%s3464 + $0x40] sm:$0xf]
    %v3482 = vld [vmem:[%s3464 + $0x44] sm:$0xf]
    %v3483 = vld [vmem:[%s3464 + $0x48] sm:$0xf]
    %v3484 = vld [vmem:[%s3464 + $0x4c] sm:$0xf]
    %v3485 = vld [vmem:[%s3464 + $0x50] sm:$0xf]
    %v3486 = vld [vmem:[%s3464 + $0x54] sm:$0xf]
    %v3487 = vld [vmem:[%s3464 + $0x58] sm:$0xf]
    %v3488 = vld [vmem:[%s3464 + $0x5c] sm:$0xf]
    %v3489 = vld [vmem:[%s3464 + $0x60] sm:$0xf]
    %v3490 = vld [vmem:[%s3464 + $0x64] sm:$0xf]
    %v3491 = vld [vmem:[%s3464 + $0x68] sm:$0xf]
    %v3492 = vld [vmem:[%s3464 + $0x6c] sm:$0xf]
    %v3493 = vld [vmem:[%s3464 + $0x70] sm:$0xf]
    %v3494 = vld [vmem:[%s3464 + $0x74] sm:$0xf]
    %v3495 = vld [vmem:[%s3464 + $0x78] sm:$0xf]
    %v3496 = vld [vmem:[%s3464 + $0x7c] sm:$0xf]
    %v3497 = vld [vmem:[%s3464 + $0x80] sm:$0xf]
    %v3498 = vld [vmem:[%s3464 + $0x84] sm:$0xf]
    %v3499 = vld [vmem:[%s3464 + $0x88] sm:$0xf]
    %v3500 = vld [vmem:[%s3464 + $0x8c] sm:$0xf]
    %v3501 = vld [vmem:[%s3464 + $0x90] sm:$0xf]
    %v3502 = vld [vmem:[%s3464 + $0x94] sm:$0xf]
    %v3503 = vld [vmem:[%s3464 + $0x98] sm:$0xf]
    %v3504 = vld [vmem:[%s3464 + $0x9c] sm:$0xf]
    %v3505 = vld [vmem:[%s3464 + $0xa0] sm:$0xf]
    %v3506 = vld [vmem:[%s3464 + $0xa4] sm:$0xf]
    %v3507 = vld [vmem:[%s3464 + $0xa8] sm:$0xf]
    %v3508 = vld [vmem:[%s3464 + $0xac] sm:$0xf]
    %v3509 = vld [vmem:[%s3464 + $0xb0] sm:$0xf]
    %v3510 = vld [vmem:[%s3464 + $0xb4] sm:$0xf]
    %v3511 = vld [vmem:[%s3464 + $0xb8] sm:$0xf]
    %v3512 = vld [vmem:[%s3464 + $0xbc] sm:$0xf]
    %v3513 = vld [vmem:[%s3464 + $0xc0] sm:$0xf]
    %v3514 = vld [vmem:[%s3464 + $0xc4] sm:$0xf]
    %v3515 = vld [vmem:[%s3464 + $0xc8] sm:$0xf]
    %v3516 = vld [vmem:[%s3464 + $0xcc] sm:$0xf]
    %v3517 = vld [vmem:[%s3464 + $0xd0] sm:$0xf]
    %v3518 = vld [vmem:[%s3464 + $0xd4] sm:$0xf]
    %v3519 = vld [vmem:[%s3464 + $0xd8] sm:$0xf]
    %v3520 = vld [vmem:[%s3464 + $0xdc] sm:$0xf]
    %v3521 = vld [vmem:[%s3464 + $0xe0] sm:$0xf]
    %v3522 = vld [vmem:[%s3464 + $0xe4] sm:$0xf]
    %v3523 = vld [vmem:[%s3464 + $0xe8] sm:$0xf]
    %v3524 = vld [vmem:[%s3464 + $0xec] sm:$0xf]
    %v3525 = vld [vmem:[%s3464 + $0xf0] sm:$0xf]
    %v3526 = vld [vmem:[%s3464 + $0xf4] sm:$0xf]
    %v3527 = vld [vmem:[%s3464 + $0xf8] sm:$0xf]
    %v3528 = vld [vmem:[%s3464 + $0xfc] sm:$0xf]
    %v3529 = vld [vmem:[%s2247 + $0x4] sm:$0x1]
    %v3530 = vlaneseq
    %v3531 = vshrl.u32 %v3530, 7
    %v3532 = vsub.s32 0, %v3531
    %v3533 = vrot.slane %v3529, %v3532
    %v3598 = vunpack.c.l.b16 %v3465
    %v3599 = vunpack.c.l.b16 %v3466
    %v3600 = vunpack.c.l.b16 %v3467
    %v3601 = vunpack.c.l.b16 %v3468
    %v3602 = vunpack.c.l.b16 %v3469
    %v3603 = vunpack.c.l.b16 %v3470
    %v3604 = vunpack.c.l.b16 %v3471
    %v3605 = vunpack.c.l.b16 %v3472
    %v3606 = vunpack.c.l.b16 %v3473
    %v3607 = vunpack.c.l.b16 %v3474
    %v3608 = vunpack.c.l.b16 %v3475
    %v3609 = vunpack.c.l.b16 %v3476
    %v3610 = vunpack.c.l.b16 %v3477
    %v3611 = vunpack.c.l.b16 %v3478
    %v3612 = vunpack.c.l.b16 %v3479
    %v3613 = vunpack.c.l.b16 %v3480
    %v3614 = vunpack.c.l.b16 %v3481
    %v3615 = vunpack.c.l.b16 %v3482
    %v3616 = vunpack.c.l.b16 %v3483
    %v3617 = vunpack.c.l.b16 %v3484
    %v3618 = vunpack.c.l.b16 %v3485
    %v3619 = vunpack.c.l.b16 %v3486
    %v3620 = vunpack.c.l.b16 %v3487
    %v3621 = vunpack.c.l.b16 %v3488
    %v3622 = vunpack.c.l.b16 %v3489
    %v3623 = vunpack.c.l.b16 %v3490
    %v3624 = vunpack.c.l.b16 %v3491
    %v3625 = vunpack.c.l.b16 %v3492
    %v3626 = vunpack.c.l.b16 %v3493
    %v3627 = vunpack.c.l.b16 %v3494
    %v3628 = vunpack.c.l.b16 %v3495
    %v3629 = vunpack.c.l.b16 %v3496
    %v3630 = vunpack.c.l.b16 %v3497
    %v3631 = vunpack.c.l.b16 %v3498
    %v3632 = vunpack.c.l.b16 %v3499
    %v3633 = vunpack.c.l.b16 %v3500
    %v3634 = vunpack.c.l.b16 %v3501
    %v3635 = vunpack.c.l.b16 %v3502
    %v3636 = vunpack.c.l.b16 %v3503
    %v3637 = vunpack.c.l.b16 %v3504
    %v3638 = vunpack.c.l.b16 %v3505
    %v3639 = vunpack.c.l.b16 %v3506
    %v3640 = vunpack.c.l.b16 %v3507
    %v3641 = vunpack.c.l.b16 %v3508
    %v3642 = vunpack.c.l.b16 %v3509
    %v3643 = vunpack.c.l.b16 %v3510
    %v3644 = vunpack.c.l.b16 %v3511
    %v3645 = vunpack.c.l.b16 %v3512
    %v3646 = vunpack.c.l.b16 %v3513
    %v3647 = vunpack.c.l.b16 %v3514
    %v3648 = vunpack.c.l.b16 %v3515
    %v3649 = vunpack.c.l.b16 %v3516
    %v3650 = vunpack.c.l.b16 %v3517
    %v3651 = vunpack.c.l.b16 %v3518
    %v3652 = vunpack.c.l.b16 %v3519
    %v3653 = vunpack.c.l.b16 %v3520
    %v3654 = vunpack.c.l.b16 %v3521
    %v3655 = vunpack.c.l.b16 %v3522
    %v3656 = vunpack.c.l.b16 %v3523
    %v3657 = vunpack.c.l.b16 %v3524
    %v3658 = vunpack.c.l.b16 %v3525
    %v3659 = vunpack.c.l.b16 %v3526
    %v3660 = vunpack.c.l.b16 %v3527
    %v3661 = vunpack.c.l.b16 %v3528
    %v3662 = vpack.c.b16 %v3599, %v3598
    %v3663 = vpack.c.b16 %v3601, %v3600
    %v3664 = vpack.c.b16 %v3603, %v3602
    %v3665 = vpack.c.b16 %v3605, %v3604
    %v3666 = vpack.c.b16 %v3607, %v3606
    %v3667 = vpack.c.b16 %v3609, %v3608
    %v3668 = vpack.c.b16 %v3611, %v3610
    %v3669 = vpack.c.b16 %v3613, %v3612
    %v3670 = vpack.c.b16 %v3615, %v3614
    %v3671 = vpack.c.b16 %v3617, %v3616
    %v3672 = vpack.c.b16 %v3619, %v3618
    %v3673 = vpack.c.b16 %v3621, %v3620
    %v3674 = vpack.c.b16 %v3623, %v3622
    %v3675 = vpack.c.b16 %v3625, %v3624
    %v3676 = vpack.c.b16 %v3627, %v3626
    %v3677 = vpack.c.b16 %v3629, %v3628
    %v3678 = vpack.c.b16 %v3631, %v3630
    %v3679 = vpack.c.b16 %v3633, %v3632
    %v3680 = vpack.c.b16 %v3635, %v3634
    %v3681 = vpack.c.b16 %v3637, %v3636
    %v3682 = vpack.c.b16 %v3639, %v3638
    %v3683 = vpack.c.b16 %v3641, %v3640
    %v3684 = vpack.c.b16 %v3643, %v3642
    %v3685 = vpack.c.b16 %v3645, %v3644
    %v3686 = vpack.c.b16 %v3647, %v3646
    %v3687 = vpack.c.b16 %v3649, %v3648
    %v3688 = vpack.c.b16 %v3651, %v3650
    %v3689 = vpack.c.b16 %v3653, %v3652
    %v3690 = vpack.c.b16 %v3655, %v3654
    %v3691 = vpack.c.b16 %v3657, %v3656
    %v3692 = vpack.c.b16 %v3659, %v3658
    %v3693 = vpack.c.b16 %v3661, %v3660
    %3726 = vmatprep.subr.bf16.mxu0 0
    %3727 = vmatpush1.bf16.msra.mxu0 %v3662
    %3728 = vmatprep.subr.bf16.mxu0 0
    %3729 = vmatpush1.bf16.msra.mxu0 %v3663
    %3730 = vmatprep.subr.bf16.mxu0 0
    %3731 = vmatpush1.bf16.msra.mxu0 %v3664
    %3732 = vmatprep.subr.bf16.mxu0 0
    %3733 = vmatpush1.bf16.msra.mxu0 %v3665
    %3734 = vmatprep.subr.bf16.mxu0 0
    %3735 = vmatpush1.bf16.msra.mxu0 %v3666
    %3736 = vmatprep.subr.bf16.mxu0 0
    %3737 = vmatpush1.bf16.msra.mxu0 %v3667
    %3738 = vmatprep.subr.bf16.mxu0 0
    %3739 = vmatpush1.bf16.msra.mxu0 %v3668
    %3740 = vmatprep.subr.bf16.mxu0 0
    %3741 = vmatpush1.bf16.msra.mxu0 %v3669
    %3742 = vmatprep.subr.bf16.mxu0 0
    %3743 = vmatpush1.bf16.msra.mxu0 %v3670
    %3744 = vmatprep.subr.bf16.mxu0 0
    %3745 = vmatpush1.bf16.msra.mxu0 %v3671
    %3746 = vmatprep.subr.bf16.mxu0 0
    %3747 = vmatpush1.bf16.msra.mxu0 %v3672
    %3748 = vmatprep.subr.bf16.mxu0 0
    %3749 = vmatpush1.bf16.msra.mxu0 %v3673
    %3750 = vmatprep.subr.bf16.mxu0 0
    %3751 = vmatpush1.bf16.msra.mxu0 %v3674
    %3752 = vmatprep.subr.bf16.mxu0 0
    %3753 = vmatpush1.bf16.msra.mxu0 %v3675
    %3754 = vmatprep.subr.bf16.mxu0 0
    %3755 = vmatpush1.bf16.msra.mxu0 %v3676
    %3756 = vmatprep.subr.bf16.mxu0 0
    %3757 = vmatpush1.bf16.msra.mxu0 %v3677
    %3758 = vmatprep.mubr.bf16.mxu0 %v3461
    %3759 = vmatmul.mubr.bf16.gmra.mrb[0].mxu0 %v3460
    %v3760 = vpop.f32.mrb[0].mxu0
    %v3761 = vadd.f32 %v3533, %v3760
    %v3762 = vpop.f32.mrb[0].mxu0
    %v3763 = vpop.f32.mrb[0].mxu0
    %v3764 = vadd.f32 %v3533, %v3763
    %v3765 = vpop.f32.mrb[0].mxu0
    %3766 = vdwg.mxu0
    %3767 = vmatprep.subr.bf16.mxu0 0
    %3768 = vmatpush1.bf16.msra.mxu0 %v3678
    %3769 = vmatprep.subr.bf16.mxu0 0
    %3770 = vmatpush1.bf16.msra.mxu0 %v3679
    %3771 = vmatprep.subr.bf16.mxu0 0
    %3772 = vmatpush1.bf16.msra.mxu0 %v3680
    %3773 = vmatprep.subr.bf16.mxu0 0
    %3774 = vmatpush1.bf16.msra.mxu0 %v3681
    %3775 = vmatprep.subr.bf16.mxu0 0
    %3776 = vmatpush1.bf16.msra.mxu0 %v3682
    %3777 = vmatprep.subr.bf16.mxu0 0
    %3778 = vmatpush1.bf16.msra.mxu0 %v3683
    %3779 = vmatprep.subr.bf16.mxu0 0
    %3780 = vmatpush1.bf16.msra.mxu0 %v3684
    %3781 = vmatprep.subr.bf16.mxu0 0
    %3782 = vmatpush1.bf16.msra.mxu0 %v3685
    %3783 = vmatprep.subr.bf16.mxu0 0
    %3784 = vmatpush1.bf16.msra.mxu0 %v3686
    %3785 = vmatprep.subr.bf16.mxu0 0
    %3786 = vmatpush1.bf16.msra.mxu0 %v3687
    %3787 = vmatprep.subr.bf16.mxu0 0
    %3788 = vmatpush1.bf16.msra.mxu0 %v3688
    %3789 = vmatprep.subr.bf16.mxu0 0
    %3790 = vmatpush1.bf16.msra.mxu0 %v3689
    %3791 = vmatprep.subr.bf16.mxu0 0
    %3792 = vmatpush1.bf16.msra.mxu0 %v3690
    %3793 = vmatprep.subr.bf16.mxu0 0
    %3794 = vmatpush1.bf16.msra.mxu0 %v3691
    %3795 = vmatprep.subr.bf16.mxu0 0
    %3796 = vmatpush1.bf16.msra.mxu0 %v3692
    %3797 = vmatprep.subr.bf16.mxu0 0
    %3798 = vmatpush1.bf16.msra.mxu0 %v3693
    %3799 = vmatprep.mubr.bf16.mxu0 %v3463
    %3800 = vmatmul.mubr.bf16.gmra.mrb[0].mxu0 %v3462
    %v3801 = vpop.f32.mrb[0].mxu0
    %v3802 = vadd.f32 %v3761, %v3801
    %v3803 = vpop.f32.mrb[0].mxu0
    %v3804 = vpop.f32.mrb[0].mxu0
    %v3805 = vadd.f32 %v3764, %v3804
    %v3806 = vpop.f32.mrb[0].mxu0
    %3807 = vdwg.mxu0
    %v3808 = vadd.f32 %v3802, %v3083
    %v3809 = vadd.f32 %v3805, %v3084
    %v3810 = vld [vmem:[%s2247 + $0x7] sm:$0x1]
    %v3811 = vld [vmem:[%s2247 + $0x8] sm:$0x1]
    %3812 = vadd.xlane.f32.xlu0 %v3808
    %v3813 = vpop.xlane.xlu0 %3812
    %3814 = vadd.xlane.f32.xlu0 %v3809
    %v3815 = vpop.xlane.xlu0 %3814
    %v3816 = vmul.f32 %v3808, %v3808
    %v3817 = vmul.f32 %v3809, %v3809
    %3818 = vadd.xlane.f32.xlu0 %v3816
    %v3819 = vpop.xlane.xlu0 %3818
    %3820 = vadd.xlane.f32.xlu0 %v3817
    %v3821 = vpop.xlane.xlu0 %3820
    %v3822 = vmul.f32 %v3813, 0.0078125
    %v3823 = vmul.f32 %v3815, 0.0078125
    %v3824 = vmul.f32 %v3819, 0.0078125
    %v3825 = vmul.f32 %v3821, 0.0078125
    %v3826 = vmul.f32 %v3822, %v3822
    %v3827 = vmul.f32 %v3823, %v3823
    %v3828 = vsub.f32 %v3824, %v3826
    %v3829 = vsub.f32 %v3825, %v3827
    %v3830 = vsub.f32 %v3808, %v3822
    %v3831 = vsub.f32 %v3809, %v3823
    %v3832 = vadd.f32 %v3828, 1e-12
    %v3833 = vadd.f32 %v3829, 1e-12
    %v3834 = vrsqrt.pop %v3832
    %v3835 = vrsqrt.pop %v3833
    %v3836 = vmul.f32 %v3830, %v3834
    %v3837 = vmul.f32 %v3831, %v3835
    %v3838 = vlaneseq
    %v3839 = vshrl.u32 %v3838, 7
    %v3840 = vsub.s32 0, %v3839
    %v3841 = vrot.slane %v3810, %v3840
    %v3842 = vmul.f32 %v3836, %v3841
    %v3843 = vmul.f32 %v3837, %v3841
    %v3844 = vlaneseq
    %v3845 = vshrl.u32 %v3844, 7
    %v3846 = vsub.s32 0, %v3845
    %v3847 = vrot.slane %v3811, %v3846
    %v3848 = vadd.f32 %v3842, %v3847
    %v3849 = vadd.f32 %v3843, %v3847
    %v3850 = vpack.c.bf16 %v3849, %v3848
    %v3851 = vld [vmem:[%s9] sm:$0xf]
    %v3852 = vld [vmem:[%s9 + $0x4] sm:$0xf]
    %v3853 = vld [vmem:[%s9 + $0x8] sm:$0xf]
    %v3854 = vld [vmem:[%s9 + $0xc] sm:$0xf]
    %v3855 = vld [vmem:[%s9 + $0x10] sm:$0xf]
    %v3856 = vld [vmem:[%s9 + $0x14] sm:$0xf]
    %v3857 = vld [vmem:[%s9 + $0x18] sm:$0xf]
    %v3858 = vld [vmem:[%s9 + $0x1c] sm:$0xf]
    %v3859 = vld [vmem:[%s9 + $0x20] sm:$0xf]
    %v3860 = vld [vmem:[%s9 + $0x24] sm:$0xf]
    %v3861 = vld [vmem:[%s9 + $0x28] sm:$0xf]
    %v3862 = vld [vmem:[%s9 + $0x2c] sm:$0xf]
    %v3863 = vld [vmem:[%s9 + $0x30] sm:$0xf]
    %v3864 = vld [vmem:[%s9 + $0x34] sm:$0xf]
    %v3865 = vld [vmem:[%s9 + $0x38] sm:$0xf]
    %v3866 = vld [vmem:[%s9 + $0x3c] sm:$0xf]
    %v3867 = vld [vmem:[%s10] sm:$0x1]
    %v3869 = vlaneseq
    %v3870 = vshrl.u32 %v3869, 7
    %v3871 = vsub.s32 0, %v3870
    %v3872 = vrot.slane %v3867, %v3871
    %v3890 = vunpack.c.l.b16 %v3851
    %v3891 = vunpack.c.l.b16 %v3852
    %v3892 = vunpack.c.l.b16 %v3853
    %v3893 = vunpack.c.l.b16 %v3854
    %v3894 = vunpack.c.l.b16 %v3855
    %v3895 = vunpack.c.l.b16 %v3856
    %v3896 = vunpack.c.l.b16 %v3857
    %v3897 = vunpack.c.l.b16 %v3858
    %v3898 = vunpack.c.l.b16 %v3859
    %v3899 = vunpack.c.l.b16 %v3860
    %v3900 = vunpack.c.l.b16 %v3861
    %v3901 = vunpack.c.l.b16 %v3862
    %v3902 = vunpack.c.l.b16 %v3863
    %v3903 = vunpack.c.l.b16 %v3864
    %v3904 = vunpack.c.l.b16 %v3865
    %v3905 = vunpack.c.l.b16 %v3866
    %v3906 = vpack.c.b16 %v3891, %v3890
    %v3907 = vpack.c.b16 %v3893, %v3892
    %v3908 = vpack.c.b16 %v3895, %v3894
    %v3909 = vpack.c.b16 %v3897, %v3896
    %v3910 = vpack.c.b16 %v3899, %v3898
    %v3911 = vpack.c.b16 %v3901, %v3900
    %v3912 = vpack.c.b16 %v3903, %v3902
    %v3913 = vpack.c.b16 %v3905, %v3904
    %3922 = vmatprep.subr.bf16.mxu0 0
    %3923 = vmatpush1.bf16.msra.mxu0 %v3906
    %3924 = vmatprep.subr.bf16.mxu0 0
    %3925 = vmatpush1.bf16.msra.mxu0 %v3907
    %3926 = vmatprep.subr.bf16.mxu0 0
    %3927 = vmatpush1.bf16.msra.mxu0 %v3908
    %3928 = vmatprep.subr.bf16.mxu0 0
    %3929 = vmatpush1.bf16.msra.mxu0 %v3909
    %3930 = vmatprep.subr.bf16.mxu0 0
    %3931 = vmatpush1.bf16.msra.mxu0 %v3910
    %3932 = vmatprep.subr.bf16.mxu0 0
    %3933 = vmatpush1.bf16.msra.mxu0 %v3911
    %3934 = vmatprep.subr.bf16.mxu0 0
    %3935 = vmatpush1.bf16.msra.mxu0 %v3912
    %3936 = vmatprep.subr.bf16.mxu0 0
    %3937 = vmatpush1.bf16.msra.mxu0 %v3913
    %3938 = vmatprep.subr.bf16.mxu0 0
    %3939 = vmatpush1.bf16.msra.mxu0 0
    %3940 = vmatprep.subr.bf16.mxu0 0
    %3941 = vmatpush1.bf16.msra.mxu0 0
    %3942 = vmatprep.subr.bf16.mxu0 0
    %3943 = vmatpush1.bf16.msra.mxu0 0
    %3944 = vmatprep.subr.bf16.mxu0 0
    %3945 = vmatpush1.bf16.msra.mxu0 0
    %3946 = vmatprep.subr.bf16.mxu0 0
    %3947 = vmatpush1.bf16.msra.mxu0 0
    %3948 = vmatprep.subr.bf16.mxu0 0
    %3949 = vmatpush1.bf16.msra.mxu0 0
    %3950 = vmatprep.subr.bf16.mxu0 0
    %3951 = vmatpush1.bf16.msra.mxu0 0
    %3952 = vmatprep.subr.bf16.mxu0 0
    %3953 = vmatpush1.bf16.msra.mxu0 0
    %3954 = vmatprep.mubr.bf16.mxu0 0
    %3955 = vmatmul.mubr.bf16.gmra.mrb[0].mxu0 %v3850
    %v3956 = vpop.f32.mrb[0].mxu0
    %v3957 = vadd.f32 %v3872, %v3956
    %v3958 = vpop.f32.mrb[0].mxu0
    %v3959 = vpop.f32.mrb[0].mxu0
    %v3960 = vadd.f32 %v3872, %v3959
    %v3961 = vpop.f32.mrb[0].mxu0
    %3962 = vdwg.mxu0
    %3963 = vst [vmem:[%s11] sm:$0xff] %v3957
    %3964 = vst [vmem:[%s11 + $0x8] sm:$0xff] %v3960
    // Predicated region
    $region58: #{quest_model_forward.1} parent=1 // pred_check
      _
    $region59: #{quest_model_forward.1} parent=1 // pred_check_branch
      %3966 = sbr.rel (0) target = $region61
    $region60: #{quest_model_forward.1} parent=1 // pred_region
      _
    $region61: #{quest_model_forward.1} parent=1 // pred_fallthru
      _
    // Predicated region
    $region62: #{quest_model_forward.1} parent=1 // pred_check
      _
    $region63: #{quest_model_forward.1} parent=1 // pred_check_branch
      %3968 = sbr.rel (0) target = $region65
    $region64: #{quest_model_forward.1} parent=1 // pred_region
      _
    $region65: #{quest_model_forward.1} parent=1 // pred_fallthru
      _
    %3969 = vsyncpa [#allocation3], 1
    %3970 = vsyncpa [#allocation5], 1

</llo_original>
